<compile_context>
chip_gen: v6e
topology: v6e:2x2x1
jax: 0.10.0
libtpu: 0.0.40
codegen_flags: <defaults>
</compile_context>

<pallas_src>
import functools

import jax
import jax.numpy as jnp
from jax.experimental import pallas as pl
from jax.experimental.pallas import tpu as pltpu


def _round_up(x, m):
    return (x + m - 1) // m * m


# ----------------------------------------------------------------------------
# Fused GEMM + bias + (optional) ReLU kernels.
# ----------------------------------------------------------------------------
def _gemm_bias_act_single_kernel(x_ref, w_ref, b_ref, o_ref, *, apply_relu):
    # Whole K fits in one tile: accumulate in vregs, write epilogue directly.
    acc = jnp.dot(x_ref[...], w_ref[...], preferred_element_type=jnp.float32)
    out = acc + b_ref[...]
    if apply_relu:
        out = jnp.maximum(out, 0.0)
    o_ref[...] = out.astype(o_ref.dtype)


def _gemm_bias_act_ktiled_kernel(x_ref, w_ref, b_ref, o_ref, acc_ref, *,
                                 apply_relu):
    k = pl.program_id(2)

    @pl.when(k == 0)
    def _():
        acc_ref[...] = jnp.zeros_like(acc_ref)

    acc_ref[...] += jnp.dot(
        x_ref[...], w_ref[...], preferred_element_type=jnp.float32
    )

    @pl.when(k == pl.num_programs(2) - 1)
    def _():
        # Bias broadcast hoisted: loaded/added exactly once, on fp32 accumulator.
        out = acc_ref[...] + b_ref[...]
        if apply_relu:
            out = jnp.maximum(out, 0.0)
        o_ref[...] = out.astype(o_ref.dtype)


def matmul_bias_act(x, w, b, *, apply_relu, out_dtype=jnp.bfloat16):
    """act(x @ w + b) with a fused Pallas TPU GEMM.

    x: (M, K), w: (K, N), b: (N,). Operands cast to bf16; fp32 accumulation.
    Returns (M, N) in out_dtype.
    """
    M, K = x.shape
    K2, N = w.shape
    assert K == K2, (K, K2)

    # --- K tiling: lane-dense multiples of 128 ------------------------------
    kp0 = _round_up(K, 128)
    if kp0 <= 1024:
        tk = kp0                                     # single K tile
    else:
        units = kp0 // 128
        best = max((d for d in range(2, 9) if units % d == 0), default=None)
        tk = 128 * best if best is not None else 512 # exact divisor if possible
    K_pad = _round_up(K, tk)

    # --- N tiling -----------------------------------------------------------
    N_pad = _round_up(N, 128)
    tn = N_pad if N_pad <= 512 else 256
    N_pad = _round_up(N_pad, tn)

    # --- M tiling: sublane-aligned, biggest tile that fits comfortably ------
    M8 = _round_up(M, 8)
    tm = M8 if M8 <= 512 else 512
    M_pad = _round_up(M8, tm)

    xp = jnp.pad(x.astype(jnp.bfloat16), ((0, M_pad - M), (0, K_pad - K)))
    wp = jnp.pad(w.astype(jnp.bfloat16), ((0, K_pad - K), (0, N_pad - N)))
    bp = jnp.pad(b.astype(jnp.float32), (0, N_pad - N)).reshape(1, N_pad)

    k_steps = K_pad // tk

    if k_steps == 1:
        grid = (M_pad // tm, N_pad // tn)
        grid_spec = pltpu.PrefetchScalarGridSpec(
            num_scalar_prefetch=0,
            grid=grid,
            in_specs=[
                pl.BlockSpec((tm, tk), lambda i, j: (i, 0)),
                pl.BlockSpec((tk, tn), lambda i, j: (0, j)),
                pl.BlockSpec((1, tn), lambda i, j: (0, j)),
            ],
            out_specs=pl.BlockSpec((tm, tn), lambda i, j: (i, j)),
            scratch_shapes=[],
        )
        kernel = functools.partial(
            _gemm_bias_act_single_kernel, apply_relu=apply_relu)
        dims = ("parallel", "parallel")
    else:
        grid = (M_pad // tm, N_pad // tn, k_steps)
        grid_spec = pltpu.PrefetchScalarGridSpec(
            num_scalar_prefetch=0,
            grid=grid,
            in_specs=[
                pl.BlockSpec((tm, tk), lambda i, j, k: (i, k)),
                pl.BlockSpec((tk, tn), lambda i, j, k: (k, j)),
                pl.BlockSpec((1, tn), lambda i, j, k: (0, j)),
            ],
            out_specs=pl.BlockSpec((tm, tn), lambda i, j, k: (i, j)),
            scratch_shapes=[pltpu.VMEM((tm, tn), jnp.float32)],
        )
        kernel = functools.partial(
            _gemm_bias_act_ktiled_kernel, apply_relu=apply_relu)
        dims = ("parallel", "parallel", "arbitrary")

    out = pl.pallas_call(
        kernel,
        out_shape=jax.ShapeDtypeStruct((M_pad, N_pad), out_dtype),
        grid_spec=grid_spec,
        compiler_params=pltpu.CompilerParams(dimension_semantics=dims),
    )(xp, wp, bp)
    return out[:M, :N]


# ----------------------------------------------------------------------------
# im2col glue (plain JAX, feeds the Pallas GEMM).
# K is ordered (Cin, kd, kh, kw) to match the flattened PyTorch weight layout.
# ----------------------------------------------------------------------------
def _im2col_3d(x, kd, kh, kw):
    B, Cin, D, H, W = x.shape
    Do, Ho, Wo = D - kd + 1, H - kh + 1, W - kw + 1
    cols = []
    for dk in range(kd):
        for hk in range(kh):
            for wk in range(kw):
                cols.append(x[:, :, dk:dk + Do, hk:hk + Ho, wk:wk + Wo])
    p = jnp.stack(cols, axis=2)                        # (B,Cin,kd*kh*kw,Do,Ho,Wo)
    p = p.reshape(B, Cin * kd * kh * kw, Do, Ho, Wo)   # K = (Cin, kd, kh, kw)
    p = jnp.transpose(p, (0, 2, 3, 4, 1))              # (B,Do,Ho,Wo,K)
    return p.reshape(B * Do * Ho * Wo, Cin * kd * kh * kw), (B, Do, Ho, Wo)


def _im2col_2d(x, kh, kw):
    B, Cin, H, W = x.shape
    Ho, Wo = H - kh + 1, W - kw + 1
    cols = []
    for hk in range(kh):
        for wk in range(kw):
            cols.append(x[:, :, hk:hk + Ho, wk:wk + Wo])
    p = jnp.stack(cols, axis=2)                        # (B,Cin,kh*kw,Ho,Wo)
    p = p.reshape(B, Cin * kh * kw, Ho, Wo)            # K = (Cin, kh, kw)
    p = jnp.transpose(p, (0, 2, 3, 1))                 # (B,Ho,Wo,K)
    return p.reshape(B * Ho * Wo, Cin * kh * kw), (B, Ho, Wo)


def conv3d_relu(x, w, b):
    # x: (B,Cin,D,H,W)  w: (Cout,Cin,kd,kh,kw)  b: (Cout,)
    Cout, Cin, kd, kh, kw = w.shape
    cols, (B, Do, Ho, Wo) = _im2col_3d(x, kd, kh, kw)
    wm = w.reshape(Cout, Cin * kd * kh * kw).T         # (K, Cout)
    y = matmul_bias_act(cols, wm, b, apply_relu=True, out_dtype=jnp.bfloat16)
    y = y.reshape(B, Do, Ho, Wo, Cout)
    return jnp.transpose(y, (0, 4, 1, 2, 3))           # NCDHW


def conv2d_relu(x, w, b):
    Cout, Cin, kh, kw = w.shape
    cols, (B, Ho, Wo) = _im2col_2d(x, kh, kw)
    wm = w.reshape(Cout, Cin * kh * kw).T
    y = matmul_bias_act(cols, wm, b, apply_relu=True, out_dtype=jnp.bfloat16)
    y = y.reshape(B, Ho, Wo, Cout)
    return jnp.transpose(y, (0, 3, 1, 2))              # NCHW


# ----------------------------------------------------------------------------
# HybridSN forward + parameter init (PyTorch-default uniform init).
# ----------------------------------------------------------------------------
def init_params(key, in_channels, patch_size, num_classes):
    d1 = in_channels - 6
    d3 = d1 - 6
    h3 = patch_size - 6
    c4_in = 32 * d3
    h4 = h3 - 2
    fc1_in = 64 * h4 * h4

    def _init(key, w_shape, fan_in):
        kw_, kb_ = jax.random.split(key)
        bound = 1.0 / jnp.sqrt(fan_in)
        w = jax.random.uniform(kw_, w_shape, jnp.float32, -bound, bound)
        b = jax.random.uniform(kb_, (w_shape[0],), jnp.float32, -bound, bound)
        return w, b

    keys = jax.random.split(key, 7)
    return {
        "conv1": _init(keys[0], (8, 1, 7, 3, 3), 1 * 7 * 3 * 3),
        "conv2": _init(keys[1], (16, 8, 5, 3, 3), 8 * 5 * 3 * 3),
        "conv3": _init(keys[2], (32, 16, 3, 3, 3), 16 * 3 * 3 * 3),
        "conv4": _init(keys[3], (64, c4_in, 3, 3), c4_in * 3 * 3),
        "fc1": _init(keys[4], (256, fc1_in), fc1_in),
        "fc2": _init(keys[5], (128, 256), 256),
        "fc3": _init(keys[6], (num_classes, 128), 128),
    }


def hybridsn_forward(params, x):
    # x: (B, 1, C_spectral, P, P) float32
    w, b = params["conv1"]; x = conv3d_relu(x, w, b)
    w, b = params["conv2"]; x = conv3d_relu(x, w, b)
    w, b = params["conv3"]; x = conv3d_relu(x, w, b)
    B, C, D, H, W = x.shape
    x = x.reshape(B, C * D, H, W)                      # matches torch .view
    w, b = params["conv4"]; x = conv2d_relu(x, w, b)
    x = x.reshape(B, -1)                               # (B, 64*Ho*Wo), CHW order
    w, b = params["fc1"]; x = matmul_bias_act(x, w.T, b, apply_relu=True)
    w, b = params["fc2"]; x = matmul_bias_act(x, w.T, b, apply_relu=True)
    w, b = params["fc3"]
    out = matmul_bias_act(x, w.T, b, apply_relu=False, out_dtype=jnp.float32)
    # Dropout(p=0.4) layers: eval-mode identity.
    return out


# ----------------------------------------------------------------------------
# Pure-JAX reference (fp32) for a sanity check.
# ----------------------------------------------------------------------------
def _ref_forward(params, x):
    def c3(x, w, b):
        y = jax.lax.conv_general_dilated(
            x, w, (1, 1, 1), "VALID",
            dimension_numbers=("NCDHW", "OIDHW", "NCDHW"))
        return jax.nn.relu(y + b[None, :, None, None, None])

    def c2(x, w, b):
        y = jax.lax.conv_general_dilated(
            x, w, (1, 1), "VALID",
            dimension_numbers=("NCHW", "OIHW", "NCHW"))
        return jax.nn.relu(y + b[None, :, None, None])

    w, b = params["conv1"]; x = c3(x, w, b)
    w, b = params["conv2"]; x = c3(x, w, b)
    w, b = params["conv3"]; x = c3(x, w, b)
    B, C, D, H, W = x.shape
    x = x.reshape(B, C * D, H, W)
    w, b = params["conv4"]; x = c2(x, w, b)
    x = x.reshape(B, -1)
    w, b = params["fc1"]; x = jax.nn.relu(x @ w.T + b)
    w, b = params["fc2"]; x = jax.nn.relu(x @ w.T + b)
    w, b = params["fc3"]
    return x @ w.T + b


if __name__ == "__main__":
    in_channels, patch_size, num_classes, batch = 16, 11, 16, 2

    key = jax.random.PRNGKey(0)
    kp, kx = jax.random.split(key)
    params = init_params(kp, in_channels, patch_size, num_classes)
    x = jax.random.normal(
        kx, (batch, 1, in_channels, patch_size, patch_size), jnp.float32)

    fwd = jax.jit(functools.partial(hybridsn_forward, params))
    out = jax.block_until_ready(fwd(x))

    assert out.shape == (batch, num_classes)
    assert bool(jnp.all(jnp.isfinite(out)))

    # Loose check against fp32 reference (kernel uses bf16 MXU operands).
    ref = _ref_forward(params, x)
    rel_err = float(jnp.max(jnp.abs(out - ref)) / (jnp.max(jnp.abs(ref)) + 1e-6))
    assert rel_err < 0.1, f"mismatch vs reference: rel_err={rel_err}"

    print("KERNEL_OK")
</pallas_src>

<mosaic_0001>
module attributes {stable_mosaic.version = 11 : i64} {
  func.func @_gemm_bias_act_single_kernel(%arg0: i32, %arg1: i32, %arg2: memref<512x128xbf16, #tpu.memory_space<vmem>>, %arg3: memref<128x128xbf16, #tpu.memory_space<vmem>>, %arg4: memref<1x128xf32, #tpu.memory_space<vmem>>, %arg5: memref<512x128xbf16, #tpu.memory_space<vmem>>) attributes {dimension_semantics = [#tpu.dimension_semantics<parallel>, #tpu.dimension_semantics<parallel>], iteration_bounds = array<i64: 4, 1>, scalar_prefetch = 0 : i64, scratch_operands = 0 : i64, tpu.core_type = #tpu.core_type<tc>, window_params = [{transform_indices = @transform_0, window_bounds = array<i64: 512, 128>}, {transform_indices = @transform_1, window_bounds = array<i64: 128, 128>}, {transform_indices = @transform_2, window_bounds = array<i64: 1, 128>}, {transform_indices = @transform_3, window_bounds = array<i64: 512, 128>}]} {
    %c0 = arith.constant 0 : index
    %c0_0 = arith.constant 0 : index
    %0 = vector.load %arg2[%c0, %c0_0] : memref<512x128xbf16, #tpu.memory_space<vmem>>, vector<512x128xbf16>
    %c0_1 = arith.constant 0 : index
    %c0_2 = arith.constant 0 : index
    %1 = vector.load %arg3[%c0_1, %c0_2] : memref<128x128xbf16, #tpu.memory_space<vmem>>, vector<128x128xbf16>
    %cst = arith.constant dense<0.000000e+00> : vector<512x128xf32>
    %2 = tpu.matmul %0, %1, %cst {dimension_numbers = #tpu.dot_dimension_numbers<[1], [0], [0], [1], [0, 0, 1, 1], [], []>} : vector<512x128xbf16>, vector<128x128xbf16>, vector<512x128xf32> -> vector<512x128xf32>
    %c0_3 = arith.constant 0 : index
    %c0_4 = arith.constant 0 : index
    %3 = vector.load %arg4[%c0_3, %c0_4] : memref<1x128xf32, #tpu.memory_space<vmem>>, vector<1x128xf32>
    %4 = vector.broadcast %3 : vector<1x128xf32> to vector<512x128xf32>
    %5 = arith.addf %2, %4 : vector<512x128xf32>
    %cst_5 = arith.constant 0.000000e+00 : f32
    %6 = vector.broadcast %cst_5 : f32 to vector<512x128xf32>
    %7 = arith.maximumf %5, %6 : vector<512x128xf32>
    %8 = arith.truncf %7 : vector<512x128xf32> to vector<512x128xbf16>
    %c0_6 = arith.constant 0 : index
    %c0_7 = arith.constant 0 : index
    %9 = vector.load %arg5[%c0_6, %c0_7] : memref<512x128xbf16, #tpu.memory_space<vmem>>, vector<512x128xbf16>
    tpu.vector_store %arg5[%c0_6, %c0_7], %8 {strides = array<i32>} : memref<512x128xbf16, #tpu.memory_space<vmem>>, vector<512x128xbf16>,
    return
  }
  func.func @transform_0(%arg0: i32, %arg1: i32) -> (i32, i32) {
    %c0_i32 = arith.constant 0 : i32
    %c0_i32_0 = arith.constant 0 : i32
    return %arg0, %c0_i32 : i32, i32
  }
  func.func @transform_1(%arg0: i32, %arg1: i32) -> (i32, i32) {
    %c0_i32 = arith.constant 0 : i32
    %c0_i32_0 = arith.constant 0 : i32
    return %c0_i32, %arg1 : i32, i32
  }
  func.func @transform_2(%arg0: i32, %arg1: i32) -> (i32, i32) {
    %c0_i32 = arith.constant 0 : i32
    %c0_i32_0 = arith.constant 0 : i32
    return %c0_i32, %arg1 : i32, i32
  }
  func.func @transform_3(%arg0: i32, %arg1: i32) -> (i32, i32) {
    %c0_i32 = arith.constant 0 : i32
    return %arg0, %arg1 : i32, i32
  }
}

module attributes {stable_mosaic.version = 11 : i64} {
  func.func @_gemm_bias_act_single_kernel(%arg0: i32, %arg1: i32, %arg2: memref<512x384xbf16, #tpu.memory_space<vmem>>, %arg3: memref<384x128xbf16, #tpu.memory_space<vmem>>, %arg4: memref<1x128xf32, #tpu.memory_space<vmem>>, %arg5: memref<512x128xbf16, #tpu.memory_space<vmem>>) attributes {dimension_semantics = [#tpu.dimension_semantics<parallel>, #tpu.dimension_semantics<parallel>], iteration_bounds = array<i64: 2, 1>, scalar_prefetch = 0 : i64, scratch_operands = 0 : i64, tpu.core_type = #tpu.core_type<tc>, window_params = [{transform_indices = @transform_0, window_bounds = array<i64: 512, 384>}, {transform_indices = @transform_1, window_bounds = array<i64: 384, 128>}, {transform_indices = @transform_2, window_bounds = array<i64: 1, 128>}, {transform_indices = @transform_3, window_bounds = array<i64: 512, 128>}]} {
    %c0 = arith.constant 0 : index
    %c0_0 = arith.constant 0 : index
    %0 = vector.load %arg2[%c0, %c0_0] : memref<512x384xbf16, #tpu.memory_space<vmem>>, vector<512x384xbf16>
    %c0_1 = arith.constant 0 : index
    %c0_2 = arith.constant 0 : index
    %1 = vector.load %arg3[%c0_1, %c0_2] : memref<384x128xbf16, #tpu.memory_space<vmem>>, vector<384x128xbf16>
    %cst = arith.constant dense<0.000000e+00> : vector<512x128xf32>
    %2 = tpu.matmul %0, %1, %cst {dimension_numbers = #tpu.dot_dimension_numbers<[1], [0], [0], [1], [0, 0, 1, 1], [], []>} : vector<512x384xbf16>, vector<384x128xbf16>, vector<512x128xf32> -> vector<512x128xf32>
    %c0_3 = arith.constant 0 : index
    %c0_4 = arith.constant 0 : index
    %3 = vector.load %arg4[%c0_3, %c0_4] : memref<1x128xf32, #tpu.memory_space<vmem>>, vector<1x128xf32>
    %4 = vector.broadcast %3 : vector<1x128xf32> to vector<512x128xf32>
    %5 = arith.addf %2, %4 : vector<512x128xf32>
    %cst_5 = arith.constant 0.000000e+00 : f32
    %6 = vector.broadcast %cst_5 : f32 to vector<512x128xf32>
    %7 = arith.maximumf %5, %6 : vector<512x128xf32>
    %8 = arith.truncf %7 : vector<512x128xf32> to vector<512x128xbf16>
    %c0_6 = arith.constant 0 : index
    %c0_7 = arith.constant 0 : index
    %9 = vector.load %arg5[%c0_6, %c0_7] : memref<512x128xbf16, #tpu.memory_space<vmem>>, vector<512x128xbf16>
    tpu.vector_store %arg5[%c0_6, %c0_7], %8 {strides = array<i32>} : memref<512x128xbf16, #tpu.memory_space<vmem>>, vector<512x128xbf16>,
    return
  }
  func.func @transform_0(%arg0: i32, %arg1: i32) -> (i32, i32) {
    %c0_i32 = arith.constant 0 : i32
    %c0_i32_0 = arith.constant 0 : i32
    return %arg0, %c0_i32 : i32, i32
  }
  func.func @transform_1(%arg0: i32, %arg1: i32) -> (i32, i32) {
    %c0_i32 = arith.constant 0 : i32
    %c0_i32_0 = arith.constant 0 : i32
    return %c0_i32, %arg1 : i32, i32
  }
  func.func @transform_2(%arg0: i32, %arg1: i32) -> (i32, i32) {
    %c0_i32 = arith.constant 0 : i32
    %c0_i32_0 = arith.constant 0 : i32
    return %c0_i32, %arg1 : i32, i32
  }
  func.func @transform_3(%arg0: i32, %arg1: i32) -> (i32, i32) {
    %c0_i32 = arith.constant 0 : i32
    return %arg0, %arg1 : i32, i32
  }
}

module attributes {stable_mosaic.version = 11 : i64} {
  func.func @_gemm_bias_act_single_kernel(%arg0: i32, %arg1: i32, %arg2: memref<200x512xbf16, #tpu.memory_space<vmem>>, %arg3: memref<512x128xbf16, #tpu.memory_space<vmem>>, %arg4: memref<1x128xf32, #tpu.memory_space<vmem>>, %arg5: memref<200x128xbf16, #tpu.memory_space<vmem>>) attributes {dimension_semantics = [#tpu.dimension_semantics<parallel>, #tpu.dimension_semantics<parallel>], iteration_bounds = array<i64: 1, 1>, scalar_prefetch = 0 : i64, scratch_operands = 0 : i64, tpu.core_type = #tpu.core_type<tc>, window_params = [{transform_indices = @transform_0, window_bounds = array<i64: 200, 512>}, {transform_indices = @transform_1, window_bounds = array<i64: 512, 128>}, {transform_indices = @transform_2, window_bounds = array<i64: 1, 128>}, {transform_indices = @transform_3, window_bounds = array<i64: 200, 128>}]} {
    %c0 = arith.constant 0 : index
    %c0_0 = arith.constant 0 : index
    %0 = vector.load %arg2[%c0, %c0_0] : memref<200x512xbf16, #tpu.memory_space<vmem>>, vector<200x512xbf16>
    %c0_1 = arith.constant 0 : index
    %c0_2 = arith.constant 0 : index
    %1 = vector.load %arg3[%c0_1, %c0_2] : memref<512x128xbf16, #tpu.memory_space<vmem>>, vector<512x128xbf16>
    %cst = arith.constant dense<0.000000e+00> : vector<200x128xf32>
    %2 = tpu.matmul %0, %1, %cst {dimension_numbers = #tpu.dot_dimension_numbers<[1], [0], [0], [1], [0, 0, 1, 1], [], []>} : vector<200x512xbf16>, vector<512x128xbf16>, vector<200x128xf32> -> vector<200x128xf32>
    %c0_3 = arith.constant 0 : index
    %c0_4 = arith.constant 0 : index
    %3 = vector.load %arg4[%c0_3, %c0_4] : memref<1x128xf32, #tpu.memory_space<vmem>>, vector<1x128xf32>
    %4 = vector.broadcast %3 : vector<1x128xf32> to vector<200x128xf32>
    %5 = arith.addf %2, %4 : vector<200x128xf32>
    %cst_5 = arith.constant 0.000000e+00 : f32
    %6 = vector.broadcast %cst_5 : f32 to vector<200x128xf32>
    %7 = arith.maximumf %5, %6 : vector<200x128xf32>
    %8 = arith.truncf %7 : vector<200x128xf32> to vector<200x128xbf16>
    %c0_6 = arith.constant 0 : index
    %c0_7 = arith.constant 0 : index
    %9 = vector.load %arg5[%c0_6, %c0_7] : memref<200x128xbf16, #tpu.memory_space<vmem>>, vector<200x128xbf16>
    tpu.vector_store %arg5[%c0_6, %c0_7], %8 {strides = array<i32>} : memref<200x128xbf16, #tpu.memory_space<vmem>>, vector<200x128xbf16>,
    return
  }
  func.func @transform_0(%arg0: i32, %arg1: i32) -> (i32, i32) {
    %c0_i32 = arith.constant 0 : i32
    %c0_i32_0 = arith.constant 0 : i32
    return %arg0, %c0_i32 : i32, i32
  }
  func.func @transform_1(%arg0: i32, %arg1: i32) -> (i32, i32) {
    %c0_i32 = arith.constant 0 : i32
    %c0_i32_0 = arith.constant 0 : i32
    return %c0_i32, %arg1 : i32, i32
  }
  func.func @transform_2(%arg0: i32, %arg1: i32) -> (i32, i32) {
    %c0_i32 = arith.constant 0 : i32
    %c0_i32_0 = arith.constant 0 : i32
    return %c0_i32, %arg1 : i32, i32
  }
  func.func @transform_3(%arg0: i32, %arg1: i32) -> (i32, i32) {
    %c0_i32 = arith.constant 0 : i32
    return %arg0, %arg1 : i32, i32
  }
}

module attributes {stable_mosaic.version = 11 : i64} {
  func.func @_gemm_bias_act_ktiled_kernel(%arg0: i32, %arg1: i32, %arg2: i32, %arg3: memref<24x384xbf16, #tpu.memory_space<vmem>>, %arg4: memref<384x128xbf16, #tpu.memory_space<vmem>>, %arg5: memref<1x128xf32, #tpu.memory_space<vmem>>, %arg6: memref<24x128xbf16, #tpu.memory_space<vmem>>, %arg7: memref<24x128xf32, #tpu.memory_space<vmem>>) attributes {dimension_semantics = [#tpu.dimension_semantics<parallel>, #tpu.dimension_semantics<parallel>, #tpu.dimension_semantics<arbitrary>], iteration_bounds = array<i64: 1, 1, 3>, scalar_prefetch = 0 : i64, scratch_operands = 1 : i64, tpu.core_type = #tpu.core_type<tc>, window_params = [{transform_indices = @transform_0, window_bounds = array<i64: 24, 384>}, {transform_indices = @transform_1, window_bounds = array<i64: 384, 128>}, {transform_indices = @transform_2, window_bounds = array<i64: 1, 128>}, {transform_indices = @transform_3, window_bounds = array<i64: 24, 128>}]} {
    %c0_i32 = arith.constant 0 : i32
    %0 = arith.cmpi eq, %arg2, %c0_i32 : i32
    %1 = arith.extui %0 : i1 to i32
    %c0_i32_0 = arith.constant 0 : i32
    %2 = arith.cmpi ne, %1, %c0_i32_0 : i32
    scf.if %2 {
      %cst_9 = arith.constant 0.000000e+00 : f32
      %12 = vector.broadcast %cst_9 : f32 to vector<24x128xf32>
      %c0_10 = arith.constant 0 : index
      %c0_11 = arith.constant 0 : index
      %13 = vector.load %arg7[%c0_10, %c0_11] : memref<24x128xf32, #tpu.memory_space<vmem>>, vector<24x128xf32>
      tpu.vector_store %arg7[%c0_10, %c0_11], %12 {strides = array<i32>} : memref<24x128xf32, #tpu.memory_space<vmem>>, vector<24x128xf32>,
    } else {
    }
    %c0 = arith.constant 0 : index
    %c0_1 = arith.constant 0 : index
    %3 = vector.load %arg7[%c0, %c0_1] : memref<24x128xf32, #tpu.memory_space<vmem>>, vector<24x128xf32>
    %c0_2 = arith.constant 0 : index
    %c0_3 = arith.constant 0 : index
    %4 = vector.load %arg3[%c0_2, %c0_3] : memref<24x384xbf16, #tpu.memory_space<vmem>>, vector<24x384xbf16>
    %c0_4 = arith.constant 0 : index
    %c0_5 = arith.constant 0 : index
    %5 = vector.load %arg4[%c0_4, %c0_5] : memref<384x128xbf16, #tpu.memory_space<vmem>>, vector<384x128xbf16>
    %cst = arith.constant dense<0.000000e+00> : vector<24x128xf32>
    %6 = tpu.matmul %4, %5, %cst {dimension_numbers = #tpu.dot_dimension_numbers<[1], [0], [0], [1], [0, 0, 1, 1], [], []>} : vector<24x384xbf16>, vector<384x128xbf16>, vector<24x128xf32> -> vector<24x128xf32>
    %7 = arith.addf %3, %6 : vector<24x128xf32>
    %c0_6 = arith.constant 0 : index
    %c0_7 = arith.constant 0 : index
    %8 = vector.load %arg7[%c0_6, %c0_7] : memref<24x128xf32, #tpu.memory_space<vmem>>, vector<24x128xf32>
    tpu.vector_store %arg7[%c0_6, %c0_7], %7 {strides = array<i32>} : memref<24x128xf32, #tpu.memory_space<vmem>>, vector<24x128xf32>,
    %c2_i32 = arith.constant 2 : i32
    %9 = arith.cmpi eq, %arg2, %c2_i32 : i32
    %10 = arith.extui %9 : i1 to i32
    %c0_i32_8 = arith.constant 0 : i32
    %11 = arith.cmpi ne, %10, %c0_i32_8 : i32
    scf.if %11 {
      %c0_9 = arith.constant 0 : index
      %c0_10 = arith.constant 0 : index
      %12 = vector.load %arg7[%c0_9, %c0_10] : memref<24x128xf32, #tpu.memory_space<vmem>>, vector<24x128xf32>
      %c0_11 = arith.constant 0 : index
      %c0_12 = arith.constant 0 : index
      %13 = vector.load %arg5[%c0_11, %c0_12] : memref<1x128xf32, #tpu.memory_space<vmem>>, vector<1x128xf32>
      %14 = vector.broadcast %13 : vector<1x128xf32> to vector<24x128xf32>
      %15 = arith.addf %12, %14 : vector<24x128xf32>
      %cst_13 = arith.constant 0.000000e+00 : f32
      %16 = vector.broadcast %cst_13 : f32 to vector<24x128xf32>
      %17 = arith.maximumf %15, %16 : vector<24x128xf32>
      %18 = arith.truncf %17 : vector<24x128xf32> to vector<24x128xbf16>
      %c0_14 = arith.constant 0 : index
      %c0_15 = arith.constant 0 : index
      %19 = vector.load %arg6[%c0_14, %c0_15] : memref<24x128xbf16, #tpu.memory_space<vmem>>, vector<24x128xbf16>
      tpu.vector_store %arg6[%c0_14, %c0_15], %18 {strides = array<i32>} : memref<24x128xbf16, #tpu.memory_space<vmem>>, vector<24x128xbf16>,
    } else {
    }
    return
  }
  func.func @transform_0(%arg0: i32, %arg1: i32, %arg2: i32) -> (i32, i32) {
    %c0_i32 = arith.constant 0 : i32
    return %arg0, %arg2 : i32, i32
  }
  func.func @transform_1(%arg0: i32, %arg1: i32, %arg2: i32) -> (i32, i32) {
    %c0_i32 = arith.constant 0 : i32
    return %arg2, %arg1 : i32, i32
  }
  func.func @transform_2(%arg0: i32, %arg1: i32, %arg2: i32) -> (i32, i32) {
    %c0_i32 = arith.constant 0 : i32
    %c0_i32_0 = arith.constant 0 : i32
    return %c0_i32, %arg1 : i32, i32
  }
  func.func @transform_3(%arg0: i32, %arg1: i32, %arg2: i32) -> (i32, i32) {
    %c0_i32 = arith.constant 0 : i32
    return %arg0, %arg1 : i32, i32
  }
}

module attributes {stable_mosaic.version = 11 : i64} {
  func.func @_gemm_bias_act_single_kernel(%arg0: i32, %arg1: i32, %arg2: memref<8x640xbf16, #tpu.memory_space<vmem>>, %arg3: memref<640x256xbf16, #tpu.memory_space<vmem>>, %arg4: memref<1x256xf32, #tpu.memory_space<vmem>>, %arg5: memref<8x256xbf16, #tpu.memory_space<vmem>>) attributes {dimension_semantics = [#tpu.dimension_semantics<parallel>, #tpu.dimension_semantics<parallel>], iteration_bounds = array<i64: 1, 1>, scalar_prefetch = 0 : i64, scratch_operands = 0 : i64, tpu.core_type = #tpu.core_type<tc>, window_params = [{transform_indices = @transform_0, window_bounds = array<i64: 8, 640>}, {transform_indices = @transform_1, window_bounds = array<i64: 640, 256>}, {transform_indices = @transform_2, window_bounds = array<i64: 1, 256>}, {transform_indices = @transform_3, window_bounds = array<i64: 8, 256>}]} {
    %c0 = arith.constant 0 : index
    %c0_0 = arith.constant 0 : index
    %0 = vector.load %arg2[%c0, %c0_0] : memref<8x640xbf16, #tpu.memory_space<vmem>>, vector<8x640xbf16>
    %c0_1 = arith.constant 0 : index
    %c0_2 = arith.constant 0 : index
    %1 = vector.load %arg3[%c0_1, %c0_2] : memref<640x256xbf16, #tpu.memory_space<vmem>>, vector<640x256xbf16>
    %cst = arith.constant dense<0.000000e+00> : vector<8x256xf32>
    %2 = tpu.matmul %0, %1, %cst {dimension_numbers = #tpu.dot_dimension_numbers<[1], [0], [0], [1], [0, 0, 1, 1], [], []>} : vector<8x640xbf16>, vector<640x256xbf16>, vector<8x256xf32> -> vector<8x256xf32>
    %c0_3 = arith.constant 0 : index
    %c0_4 = arith.constant 0 : index
    %3 = vector.load %arg4[%c0_3, %c0_4] : memref<1x256xf32, #tpu.memory_space<vmem>>, vector<1x256xf32>
    %4 = vector.broadcast %3 : vector<1x256xf32> to vector<8x256xf32>
    %5 = arith.addf %2, %4 : vector<8x256xf32>
    %cst_5 = arith.constant 0.000000e+00 : f32
    %6 = vector.broadcast %cst_5 : f32 to vector<8x256xf32>
    %7 = arith.maximumf %5, %6 : vector<8x256xf32>
    %8 = arith.truncf %7 : vector<8x256xf32> to vector<8x256xbf16>
    %c0_6 = arith.constant 0 : index
    %c0_7 = arith.constant 0 : index
    %9 = vector.load %arg5[%c0_6, %c0_7] : memref<8x256xbf16, #tpu.memory_space<vmem>>, vector<8x256xbf16>
    tpu.vector_store %arg5[%c0_6, %c0_7], %8 {strides = array<i32>} : memref<8x256xbf16, #tpu.memory_space<vmem>>, vector<8x256xbf16>,
    return
  }
  func.func @transform_0(%arg0: i32, %arg1: i32) -> (i32, i32) {
    %c0_i32 = arith.constant 0 : i32
    %c0_i32_0 = arith.constant 0 : i32
    return %arg0, %c0_i32 : i32, i32
  }
  func.func @transform_1(%arg0: i32, %arg1: i32) -> (i32, i32) {
    %c0_i32 = arith.constant 0 : i32
    %c0_i32_0 = arith.constant 0 : i32
    return %c0_i32, %arg1 : i32, i32
  }
  func.func @transform_2(%arg0: i32, %arg1: i32) -> (i32, i32) {
    %c0_i32 = arith.constant 0 : i32
    %c0_i32_0 = arith.constant 0 : i32
    return %c0_i32, %arg1 : i32, i32
  }
  func.func @transform_3(%arg0: i32, %arg1: i32) -> (i32, i32) {
    %c0_i32 = arith.constant 0 : i32
    return %arg0, %arg1 : i32, i32
  }
}

module attributes {stable_mosaic.version = 11 : i64} {
  func.func @_gemm_bias_act_single_kernel(%arg0: i32, %arg1: i32, %arg2: memref<8x128xbf16, #tpu.memory_space<vmem>>, %arg3: memref<128x128xbf16, #tpu.memory_space<vmem>>, %arg4: memref<1x128xf32, #tpu.memory_space<vmem>>, %arg5: memref<8x128xf32, #tpu.memory_space<vmem>>) attributes {dimension_semantics = [#tpu.dimension_semantics<parallel>, #tpu.dimension_semantics<parallel>], iteration_bounds = array<i64: 1, 1>, scalar_prefetch = 0 : i64, scratch_operands = 0 : i64, tpu.core_type = #tpu.core_type<tc>, window_params = [{transform_indices = @transform_0, window_bounds = array<i64: 8, 128>}, {transform_indices = @transform_1, window_bounds = array<i64: 128, 128>}, {transform_indices = @transform_2, window_bounds = array<i64: 1, 128>}, {transform_indices = @transform_3, window_bounds = array<i64: 8, 128>}]} {
    %c0 = arith.constant 0 : index
    %c0_0 = arith.constant 0 : index
    %0 = vector.load %arg2[%c0, %c0_0] : memref<8x128xbf16, #tpu.memory_space<vmem>>, vector<8x128xbf16>
    %c0_1 = arith.constant 0 : index
    %c0_2 = arith.constant 0 : index
    %1 = vector.load %arg3[%c0_1, %c0_2] : memref<128x128xbf16, #tpu.memory_space<vmem>>, vector<128x128xbf16>
    %cst = arith.constant dense<0.000000e+00> : vector<8x128xf32>
    %2 = tpu.matmul %0, %1, %cst {dimension_numbers = #tpu.dot_dimension_numbers<[1], [0], [0], [1], [0, 0, 1, 1], [], []>} : vector<8x128xbf16>, vector<128x128xbf16>, vector<8x128xf32> -> vector<8x128xf32>
    %c0_3 = arith.constant 0 : index
    %c0_4 = arith.constant 0 : index
    %3 = vector.load %arg4[%c0_3, %c0_4] : memref<1x128xf32, #tpu.memory_space<vmem>>, vector<1x128xf32>
    %4 = vector.broadcast %3 : vector<1x128xf32> to vector<8x128xf32>
    %5 = arith.addf %2, %4 : vector<8x128xf32>
    %c0_5 = arith.constant 0 : index
    %c0_6 = arith.constant 0 : index
    %6 = vector.load %arg5[%c0_5, %c0_6] : memref<8x128xf32, #tpu.memory_space<vmem>>, vector<8x128xf32>
    tpu.vector_store %arg5[%c0_5, %c0_6], %5 {strides = array<i32>} : memref<8x128xf32, #tpu.memory_space<vmem>>, vector<8x128xf32>,
    return
  }
  func.func @transform_0(%arg0: i32, %arg1: i32) -> (i32, i32) {
    %c0_i32 = arith.constant 0 : i32
    %c0_i32_0 = arith.constant 0 : i32
    return %arg0, %c0_i32 : i32, i32
  }
  func.func @transform_1(%arg0: i32, %arg1: i32) -> (i32, i32) {
    %c0_i32 = arith.constant 0 : i32
    %c0_i32_0 = arith.constant 0 : i32
    return %c0_i32, %arg1 : i32, i32
  }
  func.func @transform_2(%arg0: i32, %arg1: i32) -> (i32, i32) {
    %c0_i32 = arith.constant 0 : i32
    %c0_i32_0 = arith.constant 0 : i32
    return %c0_i32, %arg1 : i32, i32
  }
  func.func @transform_3(%arg0: i32, %arg1: i32) -> (i32, i32) {
    %c0_i32 = arith.constant 0 : i32
    return %arg0, %arg1 : i32, i32
  }
}

module attributes {stable_mosaic.version = 11 : i64} {
  func.func @_gemm_bias_act_single_kernel(%arg0: i32, %arg1: i32, %arg2: memref<8x256xbf16, #tpu.memory_space<vmem>>, %arg3: memref<256x128xbf16, #tpu.memory_space<vmem>>, %arg4: memref<1x128xf32, #tpu.memory_space<vmem>>, %arg5: memref<8x128xbf16, #tpu.memory_space<vmem>>) attributes {dimension_semantics = [#tpu.dimension_semantics<parallel>, #tpu.dimension_semantics<parallel>], iteration_bounds = array<i64: 1, 1>, scalar_prefetch = 0 : i64, scratch_operands = 0 : i64, tpu.core_type = #tpu.core_type<tc>, window_params = [{transform_indices = @transform_0, window_bounds = array<i64: 8, 256>}, {transform_indices = @transform_1, window_bounds = array<i64: 256, 128>}, {transform_indices = @transform_2, window_bounds = array<i64: 1, 128>}, {transform_indices = @transform_3, window_bounds = array<i64: 8, 128>}]} {
    %c0 = arith.constant 0 : index
    %c0_0 = arith.constant 0 : index
    %0 = vector.load %arg2[%c0, %c0_0] : memref<8x256xbf16, #tpu.memory_space<vmem>>, vector<8x256xbf16>
    %c0_1 = arith.constant 0 : index
    %c0_2 = arith.constant 0 : index
    %1 = vector.load %arg3[%c0_1, %c0_2] : memref<256x128xbf16, #tpu.memory_space<vmem>>, vector<256x128xbf16>
    %cst = arith.constant dense<0.000000e+00> : vector<8x128xf32>
    %2 = tpu.matmul %0, %1, %cst {dimension_numbers = #tpu.dot_dimension_numbers<[1], [0], [0], [1], [0, 0, 1, 1], [], []>} : vector<8x256xbf16>, vector<256x128xbf16>, vector<8x128xf32> -> vector<8x128xf32>
    %c0_3 = arith.constant 0 : index
    %c0_4 = arith.constant 0 : index
    %3 = vector.load %arg4[%c0_3, %c0_4] : memref<1x128xf32, #tpu.memory_space<vmem>>, vector<1x128xf32>
    %4 = vector.broadcast %3 : vector<1x128xf32> to vector<8x128xf32>
    %5 = arith.addf %2, %4 : vector<8x128xf32>
    %cst_5 = arith.constant 0.000000e+00 : f32
    %6 = vector.broadcast %cst_5 : f32 to vector<8x128xf32>
    %7 = arith.maximumf %5, %6 : vector<8x128xf32>
    %8 = arith.truncf %7 : vector<8x128xf32> to vector<8x128xbf16>
    %c0_6 = arith.constant 0 : index
    %c0_7 = arith.constant 0 : index
    %9 = vector.load %arg5[%c0_6, %c0_7] : memref<8x128xbf16, #tpu.memory_space<vmem>>, vector<8x128xbf16>
    tpu.vector_store %arg5[%c0_6, %c0_7], %8 {strides = array<i32>} : memref<8x128xbf16, #tpu.memory_space<vmem>>, vector<8x128xbf16>,
    return
  }
  func.func @transform_0(%arg0: i32, %arg1: i32) -> (i32, i32) {
    %c0_i32 = arith.constant 0 : i32
    %c0_i32_0 = arith.constant 0 : i32
    return %arg0, %c0_i32 : i32, i32
  }
  func.func @transform_1(%arg0: i32, %arg1: i32) -> (i32, i32) {
    %c0_i32 = arith.constant 0 : i32
    %c0_i32_0 = arith.constant 0 : i32
    return %c0_i32, %arg1 : i32, i32
  }
  func.func @transform_2(%arg0: i32, %arg1: i32) -> (i32, i32) {
    %c0_i32 = arith.constant 0 : i32
    %c0_i32_0 = arith.constant 0 : i32
    return %c0_i32, %arg1 : i32, i32
  }
  func.func @transform_3(%arg0: i32, %arg1: i32) -> (i32, i32) {
    %c0_i32 = arith.constant 0 : i32
    return %arg0, %arg1 : i32, i32
  }
}

</mosaic_0001>

<llo_original>
// kernel: hybridsn_forward.7
$region0: #{hybridsn_forward.7}
  #allocation0 [shape = 'u32[]', space=smem, size = 0x4, offset = 0x4, fixed_abs, tag = 'smem constant byte address 0x4 - core index']
  #allocation1 [shape = 'u32[144,128]{1,0:T(1,128)}', space=vmem, size = 0x12000, scoped, tag = 'internal scratch']
  %s0 = inlined_call_operand.vmem [shape: bf16[2048,128], index: 0, kind: input, shape index: {}]
  %s1 = inlined_call_operand.vmem [shape: bf16[128,128], index: 1, kind: input, shape index: {}]
  %s2 = inlined_call_operand.vmem [shape: f32[1,128], index: 2, kind: input, shape index: {}]
  %s3 = inlined_call_operand.vmem [shape: bf16[2048,128], index: 3, kind: output, shape index: {}]
  %s4 = sld [smem:[#allocation0]]
  $region45: #{hybridsn_forward.7} parent=0
    _
  %s6 = ssub.s32 1, %s4
  %s7 = scalar_select 0, %s6, %s4
  loop: start=0, step=1, limit=6
  $region2: #{hybridsn_forward.7} parent=0 // loop_pre_header
    _
  $region3: #{hybridsn_forward.7} parent=0 // loop_header
    %s9 = sphi 0, %s13
    %p10 = scmp.ge.s32.totalorder %s9, 6
    %s16 = sphi 0, %s28
    %s17 = sphi 0, %s24
    %s18 = sphi 0, %s16
    %s19 = sphi 0, %s17
    %s20 = sphi 0, %s18
    %s21 = sphi 0, %s19
    %s31 = sphi 0, %s33
    %s34 = sphi 0, %s31
    %s35 = sphi 0, %s34
    %s51 = sphi 0, %s35
    %s57 = sphi 0, %s59
    %s60 = sphi 0, %s57
    %s61 = sphi 0, %s60
    %s77 = sphi 0, %s61
    %s83 = sphi 0, %s85
    %s86 = sphi 0, %s83
    %s87 = sphi 0, %s86
    %s103 = sphi 0, %s87
    %s111 = sphi 0, %s113
    %s114 = sphi 0, %s111
    %s115 = sphi 0, %s114
    %s131 = sphi 0, %s115
  $region4: #{hybridsn_forward.7} parent=0 // loop_header_branch
    %12 = sbr.rel (%p10) target = $region8
  $region5: #{hybridsn_forward.7} parent=0 // loop_body
    %s14 = ssub.s32 %s9, 1
    %s15 = ssub.s32 %s9, 2
    %s22 = sadd.s32 1, %s17
    %p23 = scmp.ge.s32.totalorder %s22, 1
    %s24 = scalar_select %p23, 0, %s22
    %s25 = sadd.s32 1, %s16
    %s26 = scalar_select %p23, %s25, %s16
    %p27 = scmp.ge.s32.totalorder %s26, 4
    %s28 = scalar_select %p27, 0, %s26
    %s29 = ssub.s32 %s16, %s28
    %p30 = scmp.eq.s32.totalorder %s29, 0
    %s32 = sadd.s32 %s31, 1
    %s33 = scalar_select %p30, %s31, %s32
    %p36 = pneg %p30
    %p37 = scmp.eq.s32.totalorder %s9, 3
    %p38 = por %p36, %p37
    %p39 = scmp.ne.s32.totalorder %s31, %s34
    %p40 = scmp.eq.s32.totalorder %s9, 0
    %p41 = por %p39, %p40
    %p42 = scmp.ne.s32.totalorder %s31, %s34
    %p43 = scmp.eq.s32.totalorder %s14, 3
    %p44 = por %p42, %p43
    %p45 = scmp.ne.s32.totalorder %s34, %s35
    %p46 = scmp.eq.s32.totalorder %s14, 0
    %p47 = por %p45, %p46
    %p48 = scmp.ne.s32.totalorder %s34, %s35
    %p49 = scmp.eq.s32.totalorder %s15, 3
    %p50 = por %p48, %p49
    %p52 = scmp.ne.s32.totalorder %s35, %s51
    %p53 = scmp.eq.s32.totalorder %s15, 0
    %p54 = por %p52, %p53
    %s55 = ssub.s32 %s17, %s24
    %p56 = scmp.eq.s32.totalorder %s55, 0
    %s58 = sadd.s32 %s57, 1
    %s59 = scalar_select %p56, %s57, %s58
    %p62 = pneg %p56
    %p63 = scmp.eq.s32.totalorder %s9, 3
    %p64 = por %p62, %p63
    %p65 = scmp.ne.s32.totalorder %s57, %s60
    %p66 = scmp.eq.s32.totalorder %s9, 0
    %p67 = por %p65, %p66
    %p68 = scmp.ne.s32.totalorder %s57, %s60
    %p69 = scmp.eq.s32.totalorder %s14, 3
    %p70 = por %p68, %p69
    %p71 = scmp.ne.s32.totalorder %s60, %s61
    %p72 = scmp.eq.s32.totalorder %s14, 0
    %p73 = por %p71, %p72
    %p74 = scmp.ne.s32.totalorder %s60, %s61
    %p75 = scmp.eq.s32.totalorder %s15, 3
    %p76 = por %p74, %p75
    %p78 = scmp.ne.s32.totalorder %s61, %s77
    %p79 = scmp.eq.s32.totalorder %s15, 0
    %p80 = por %p78, %p79
    %s81 = ssub.s32 %s17, %s24
    %p82 = scmp.eq.s32.totalorder %s81, 0
    %s84 = sadd.s32 %s83, 1
    %s85 = scalar_select %p82, %s83, %s84
    %p88 = pneg %p82
    %p89 = scmp.eq.s32.totalorder %s9, 3
    %p90 = por %p88, %p89
    %p91 = scmp.ne.s32.totalorder %s83, %s86
    %p92 = scmp.eq.s32.totalorder %s9, 0
    %p93 = por %p91, %p92
    %p94 = scmp.ne.s32.totalorder %s83, %s86
    %p95 = scmp.eq.s32.totalorder %s14, 3
    %p96 = por %p94, %p95
    %p97 = scmp.ne.s32.totalorder %s86, %s87
    %p98 = scmp.eq.s32.totalorder %s14, 0
    %p99 = por %p97, %p98
    %p100 = scmp.ne.s32.totalorder %s86, %s87
    %p101 = scmp.eq.s32.totalorder %s15, 3
    %p102 = por %p100, %p101
    %p104 = scmp.ne.s32.totalorder %s87, %s103
    %p105 = scmp.eq.s32.totalorder %s15, 0
    %p106 = por %p104, %p105
    %s107 = ssub.s32 %s16, %s28
    %s108 = ssub.s32 %s17, %s24
    %s109 = sor.u32 %s107, %s108
    %p110 = scmp.eq.s32.totalorder %s109, 0
    %s112 = sadd.s32 %s111, 1
    %s113 = scalar_select %p110, %s111, %s112
    %p116 = pneg %p110
    %p117 = scmp.eq.s32.totalorder %s9, 3
    %p118 = por %p116, %p117
    %p119 = scmp.ne.s32.totalorder %s111, %s114
    %p120 = scmp.eq.s32.totalorder %s9, 0
    %p121 = por %p119, %p120
    %p122 = scmp.ne.s32.totalorder %s111, %s114
    %p123 = scmp.eq.s32.totalorder %s14, 3
    %p124 = por %p122, %p123
    %p125 = scmp.ne.s32.totalorder %s114, %s115
    %p126 = scmp.eq.s32.totalorder %s14, 0
    %p127 = por %p125, %p126
    %p128 = scmp.ne.s32.totalorder %s114, %s115
    %p129 = scmp.eq.s32.totalorder %s15, 3
    %p130 = por %p128, %p129
    %p132 = scmp.ne.s32.totalorder %s115, %s131
    %p133 = scmp.eq.s32.totalorder %s15, 0
    %p134 = por %p132, %p133
    %p135 = scmp.le.s32.totalorder 1, %s9
    %p136 = scmp.lt.s32.totalorder %s9, 5
    %p137 = pnand %p135, %p136
    %p138 = pneg %p137
    // Predicated region
    $region9: #{hybridsn_forward.7} parent=5 // pred_check
      _
    $region10: #{hybridsn_forward.7} parent=5 // pred_check_branch
      %140 = sbr.rel (%p137) target = $region12
    $region11: #{hybridsn_forward.7} parent=5 // pred_region
      %s141 = ssub.s32 %s9, 1
      // Predicated region
      $region13: #{hybridsn_forward.7} parent=11 // pred_check
        %p142 = pneg %p73
      $region14: #{hybridsn_forward.7} parent=11 // pred_check_branch
        %144 = sbr.rel (%p142) target = $region16
      $region15: #{hybridsn_forward.7} parent=11 // pred_region
        %p145 = scmp.lt.s32.totalorder %s19, 0
        %s146 = scalar_select %p145, %s19, 0
        %s147 = smul.addr %s146, 4
        %s148 = scalar_lea.vmem %s1, %s147
      $region16: #{hybridsn_forward.7} parent=11 // pred_fallthru
        _
      // Predicated region
      $region17: #{hybridsn_forward.7} parent=11 // pred_check
        %p149 = pneg %p99
      $region18: #{hybridsn_forward.7} parent=11 // pred_check_branch
        %151 = sbr.rel (%p149) target = $region20
      $region19: #{hybridsn_forward.7} parent=11 // pred_region
        %p152 = scmp.lt.s32.totalorder %s19, 0
        %s153 = scalar_select %p152, %s19, 0
        %s154 = scalar_lea.vmem %s2, %s153
      $region20: #{hybridsn_forward.7} parent=11 // pred_fallthru
        _
    $region12: #{hybridsn_forward.7} parent=5 // pred_fallthru
      _
    %p155 = scmp.lt.s32.totalorder %s9, 4
    // Predicated region
    $region21: #{hybridsn_forward.7} parent=5 // pred_check
      %p156 = pneg %p155
    $region22: #{hybridsn_forward.7} parent=5 // pred_check_branch
      %158 = sbr.rel (%p156) target = $region24
    $region23: #{hybridsn_forward.7} parent=5 // pred_region
      // Predicated region
      $region25: #{hybridsn_forward.7} parent=23 // pred_check
        %p159 = pneg %p41
      $region26: #{hybridsn_forward.7} parent=23 // pred_check_branch
        %161 = sbr.rel (%p159) target = $region28
      $region27: #{hybridsn_forward.7} parent=23 // pred_region
        %s162 = smul.u32 64, %s16
        %p163 = scmp.lt.s32.totalorder %s162, 255
        %s164 = scalar_select %p163, %s162, 255
        %s165 = smul.addr %s164, 4
        %s166 = scalar_lea.vmem %s0, %s165
        %s167 = smul.u32 64, %s16
      $region28: #{hybridsn_forward.7} parent=23 // pred_fallthru
        _
    $region24: #{hybridsn_forward.7} parent=5 // pred_fallthru
      _
    %p168 = scmp.le.s32.totalorder 1, %s9
    %p169 = scmp.lt.s32.totalorder %s9, 5
    %p170 = pnand %p168, %p169
    %p171 = pneg %p170
    // Predicated region
    $region29: #{hybridsn_forward.7} parent=5 // pred_check
      _
    $region30: #{hybridsn_forward.7} parent=5 // pred_check_branch
      %173 = sbr.rel (%p170) target = $region32
    $region31: #{hybridsn_forward.7} parent=5 // pred_region
      %s174 = ssub.s32 %s9, 1
      %s175 = smul.u32 64, %s18
      %p176 = scmp.lt.s32.totalorder %s175, 255
      %s177 = scalar_select %p176, %s175, 255
      %s178 = smul.addr %s177, 4
      %s179 = scalar_lea.vmem %s0, %s178
      %p180 = pneg %p47
      %p181 = pneg %p44
      %p182 = scmp.lt.s32.totalorder %s19, 0
      %s183 = scalar_select %p182, %s19, 0
      %s184 = smul.addr %s183, 4
      %s185 = scalar_lea.vmem %s1, %s184
      %p186 = pneg %p73
      %p187 = pneg %p70
      %p188 = scmp.lt.s32.totalorder %s19, 0
      %s189 = scalar_select %p188, %s19, 0
      %s190 = scalar_lea.vmem %s2, %s189
      %p191 = pneg %p99
      %p192 = pneg %p96
      %p193 = pneg %p127
      %p194 = pneg %p124
      %s195 = smul.u32 64, %s18
      %p196 = scmp.lt.s32.totalorder %s195, 255
      %s197 = scalar_select %p196, %s195, 255
      %p198 = scmp.lt.s32.totalorder %s19, 0
      %s199 = scalar_select %p198, %s19, 0
      %s200 = sadd.s32 %s199, %s197
      %s201 = smul.addr %s200, 4
      %s202 = scalar_lea.vmem %s3, %s201
      %s203 = smul.u32 64, %s18
      %p204 = scmp.lt.s32.totalorder %s203, 255
      %s205 = scalar_select %p204, %s203, 255
      %s206 = smul.addr %s205, 4
      %s207 = scalar_lea.vmem %s0, %s206
      %s208 = smul.u32 64, %s18
      %p209 = scmp.lt.s32.totalorder %s19, 0
      %s210 = scalar_select %p209, %s19, 0
      %s211 = smul.addr %s210, 4
      %s212 = scalar_lea.vmem %s1, %s211
      %p213 = scmp.lt.s32.totalorder %s19, 0
      %s214 = scalar_select %p213, %s19, 0
      %s215 = scalar_lea.vmem %s2, %s214
      %s216 = smul.u32 64, %s18
      %p217 = scmp.lt.s32.totalorder %s216, 255
      %s218 = scalar_select %p217, %s216, 255
      %p219 = scmp.lt.s32.totalorder %s19, 0
      %s220 = scalar_select %p219, %s19, 0
      %s221 = sadd.s32 %s220, %s218
      %s222 = smul.addr %s221, 4
      %s223 = scalar_lea.vmem %s3, %s222
      %s224 = smul.u32 64, %s18
      %v226 = vld [vmem:[%s207] sm:$0xf]
      %v227 = vld [vmem:[%s207 + $0x4] sm:$0xf]
      %v228 = vld [vmem:[%s207 + $0x8] sm:$0xf]
      %v229 = vld [vmem:[%s207 + $0xc] sm:$0xf]
      %v230 = vld [vmem:[%s207 + $0x10] sm:$0xf]
      %v231 = vld [vmem:[%s207 + $0x14] sm:$0xf]
      %v232 = vld [vmem:[%s207 + $0x18] sm:$0xf]
      %v233 = vld [vmem:[%s207 + $0x1c] sm:$0xf]
      %v234 = vld [vmem:[%s207 + $0x20] sm:$0xf]
      %v235 = vld [vmem:[%s207 + $0x24] sm:$0xf]
      %v236 = vld [vmem:[%s207 + $0x28] sm:$0xf]
      %v237 = vld [vmem:[%s207 + $0x2c] sm:$0xf]
      %v238 = vld [vmem:[%s207 + $0x30] sm:$0xf]
      %v239 = vld [vmem:[%s207 + $0x34] sm:$0xf]
      %v240 = vld [vmem:[%s207 + $0x38] sm:$0xf]
      %v241 = vld [vmem:[%s207 + $0x3c] sm:$0xf]
      %v242 = vld [vmem:[%s207 + $0x40] sm:$0xf]
      %v243 = vld [vmem:[%s207 + $0x44] sm:$0xf]
      %v244 = vld [vmem:[%s207 + $0x48] sm:$0xf]
      %v245 = vld [vmem:[%s207 + $0x4c] sm:$0xf]
      %v246 = vld [vmem:[%s207 + $0x50] sm:$0xf]
      %v247 = vld [vmem:[%s207 + $0x54] sm:$0xf]
      %v248 = vld [vmem:[%s207 + $0x58] sm:$0xf]
      %v249 = vld [vmem:[%s207 + $0x5c] sm:$0xf]
      %v250 = vld [vmem:[%s207 + $0x60] sm:$0xf]
      %v251 = vld [vmem:[%s207 + $0x64] sm:$0xf]
      %v252 = vld [vmem:[%s207 + $0x68] sm:$0xf]
      %v253 = vld [vmem:[%s207 + $0x6c] sm:$0xf]
      %v254 = vld [vmem:[%s207 + $0x70] sm:$0xf]
      %v255 = vld [vmem:[%s207 + $0x74] sm:$0xf]
      %v256 = vld [vmem:[%s207 + $0x78] sm:$0xf]
      %v257 = vld [vmem:[%s207 + $0x7c] sm:$0xf]
      %v258 = vld [vmem:[%s207 + $0x80] sm:$0xf]
      %v259 = vld [vmem:[%s207 + $0x84] sm:$0xf]
      %v260 = vld [vmem:[%s207 + $0x88] sm:$0xf]
      %v261 = vld [vmem:[%s207 + $0x8c] sm:$0xf]
      %v262 = vld [vmem:[%s207 + $0x90] sm:$0xf]
      %v263 = vld [vmem:[%s207 + $0x94] sm:$0xf]
      %v264 = vld [vmem:[%s207 + $0x98] sm:$0xf]
      %v265 = vld [vmem:[%s207 + $0x9c] sm:$0xf]
      %v266 = vld [vmem:[%s207 + $0xa0] sm:$0xf]
      %v267 = vld [vmem:[%s207 + $0xa4] sm:$0xf]
      %v268 = vld [vmem:[%s207 + $0xa8] sm:$0xf]
      %v269 = vld [vmem:[%s207 + $0xac] sm:$0xf]
      %v270 = vld [vmem:[%s207 + $0xb0] sm:$0xf]
      %v271 = vld [vmem:[%s207 + $0xb4] sm:$0xf]
      %v272 = vld [vmem:[%s207 + $0xb8] sm:$0xf]
      %v273 = vld [vmem:[%s207 + $0xbc] sm:$0xf]
      %v274 = vld [vmem:[%s207 + $0xc0] sm:$0xf]
      %v275 = vld [vmem:[%s207 + $0xc4] sm:$0xf]
      %v276 = vld [vmem:[%s207 + $0xc8] sm:$0xf]
      %v277 = vld [vmem:[%s207 + $0xcc] sm:$0xf]
      %v278 = vld [vmem:[%s207 + $0xd0] sm:$0xf]
      %v279 = vld [vmem:[%s207 + $0xd4] sm:$0xf]
      %v280 = vld [vmem:[%s207 + $0xd8] sm:$0xf]
      %v281 = vld [vmem:[%s207 + $0xdc] sm:$0xf]
      %v282 = vld [vmem:[%s207 + $0xe0] sm:$0xf]
      %v283 = vld [vmem:[%s207 + $0xe4] sm:$0xf]
      %v284 = vld [vmem:[%s207 + $0xe8] sm:$0xf]
      %v285 = vld [vmem:[%s207 + $0xec] sm:$0xf]
      %v286 = vld [vmem:[%s207 + $0xf0] sm:$0xf]
      %v287 = vld [vmem:[%s207 + $0xf4] sm:$0xf]
      %v288 = vld [vmem:[%s207 + $0xf8] sm:$0xf]
      %v289 = vld [vmem:[%s207 + $0xfc] sm:$0xf]
      %v290 = vld [vmem:[%s212] sm:$0xf]
      %v291 = vld [vmem:[%s212 + $0x4] sm:$0xf]
      %v292 = vld [vmem:[%s212 + $0x8] sm:$0xf]
      %v293 = vld [vmem:[%s212 + $0xc] sm:$0xf]
      %v294 = vld [vmem:[%s212 + $0x10] sm:$0xf]
      %v295 = vld [vmem:[%s212 + $0x14] sm:$0xf]
      %v296 = vld [vmem:[%s212 + $0x18] sm:$0xf]
      %v297 = vld [vmem:[%s212 + $0x1c] sm:$0xf]
      %v298 = vld [vmem:[%s212 + $0x20] sm:$0xf]
      %v299 = vld [vmem:[%s212 + $0x24] sm:$0xf]
      %v300 = vld [vmem:[%s212 + $0x28] sm:$0xf]
      %v301 = vld [vmem:[%s212 + $0x2c] sm:$0xf]
      %v302 = vld [vmem:[%s212 + $0x30] sm:$0xf]
      %v303 = vld [vmem:[%s212 + $0x34] sm:$0xf]
      %v304 = vld [vmem:[%s212 + $0x38] sm:$0xf]
      %v305 = vld [vmem:[%s212 + $0x3c] sm:$0xf]
      %v306 = vld [vmem:[%s215] sm:$0x1]
      %v308 = vlaneseq
      %v309 = vshrl.u32 %v308, 7
      %v310 = vsub.s32 0, %v309
      %v311 = vrot.slane %v306, %v310
      %v377 = vunpack.c.l.b16 %v226
      %v378 = vunpack.c.l.b16 %v227
      %v379 = vunpack.c.l.b16 %v228
      %v380 = vunpack.c.l.b16 %v229
      %v381 = vunpack.c.l.b16 %v230
      %v382 = vunpack.c.l.b16 %v231
      %v383 = vunpack.c.l.b16 %v232
      %v384 = vunpack.c.l.b16 %v233
      %v385 = vunpack.c.l.b16 %v234
      %v386 = vunpack.c.l.b16 %v235
      %v387 = vunpack.c.l.b16 %v236
      %v388 = vunpack.c.l.b16 %v237
      %v389 = vunpack.c.l.b16 %v238
      %v390 = vunpack.c.l.b16 %v239
      %v391 = vunpack.c.l.b16 %v240
      %v392 = vunpack.c.l.b16 %v241
      %v393 = vunpack.c.l.b16 %v242
      %v394 = vunpack.c.l.b16 %v243
      %v395 = vunpack.c.l.b16 %v244
      %v396 = vunpack.c.l.b16 %v245
      %v397 = vunpack.c.l.b16 %v246
      %v398 = vunpack.c.l.b16 %v247
      %v399 = vunpack.c.l.b16 %v248
      %v400 = vunpack.c.l.b16 %v249
      %v401 = vunpack.c.l.b16 %v250
      %v402 = vunpack.c.l.b16 %v251
      %v403 = vunpack.c.l.b16 %v252
      %v404 = vunpack.c.l.b16 %v253
      %v405 = vunpack.c.l.b16 %v254
      %v406 = vunpack.c.l.b16 %v255
      %v407 = vunpack.c.l.b16 %v256
      %v408 = vunpack.c.l.b16 %v257
      %v409 = vunpack.c.l.b16 %v258
      %v410 = vunpack.c.l.b16 %v259
      %v411 = vunpack.c.l.b16 %v260
      %v412 = vunpack.c.l.b16 %v261
      %v413 = vunpack.c.l.b16 %v262
      %v414 = vunpack.c.l.b16 %v263
      %v415 = vunpack.c.l.b16 %v264
      %v416 = vunpack.c.l.b16 %v265
      %v417 = vunpack.c.l.b16 %v266
      %v418 = vunpack.c.l.b16 %v267
      %v419 = vunpack.c.l.b16 %v268
      %v420 = vunpack.c.l.b16 %v269
      %v421 = vunpack.c.l.b16 %v270
      %v422 = vunpack.c.l.b16 %v271
      %v423 = vunpack.c.l.b16 %v272
      %v424 = vunpack.c.l.b16 %v273
      %v425 = vunpack.c.l.b16 %v274
      %v426 = vunpack.c.l.b16 %v275
      %v427 = vunpack.c.l.b16 %v276
      %v428 = vunpack.c.l.b16 %v277
      %v429 = vunpack.c.l.b16 %v278
      %v430 = vunpack.c.l.b16 %v279
      %v431 = vunpack.c.l.b16 %v280
      %v432 = vunpack.c.l.b16 %v281
      %v433 = vunpack.c.l.b16 %v282
      %v434 = vunpack.c.l.b16 %v283
      %v435 = vunpack.c.l.b16 %v284
      %v436 = vunpack.c.l.b16 %v285
      %v437 = vunpack.c.l.b16 %v286
      %v438 = vunpack.c.l.b16 %v287
      %v439 = vunpack.c.l.b16 %v288
      %v440 = vunpack.c.l.b16 %v289
      %v441 = vpack.c.b16 %v378, %v377
      %v442 = vpack.c.b16 %v380, %v379
      %v443 = vpack.c.b16 %v382, %v381
      %v444 = vpack.c.b16 %v384, %v383
      %v445 = vpack.c.b16 %v386, %v385
      %v446 = vpack.c.b16 %v388, %v387
      %v447 = vpack.c.b16 %v390, %v389
      %v448 = vpack.c.b16 %v392, %v391
      %v449 = vpack.c.b16 %v394, %v393
      %v450 = vpack.c.b16 %v396, %v395
      %v451 = vpack.c.b16 %v398, %v397
      %v452 = vpack.c.b16 %v400, %v399
      %v453 = vpack.c.b16 %v402, %v401
      %v454 = vpack.c.b16 %v404, %v403
      %v455 = vpack.c.b16 %v406, %v405
      %v456 = vpack.c.b16 %v408, %v407
      %v457 = vpack.c.b16 %v410, %v409
      %v458 = vpack.c.b16 %v412, %v411
      %v459 = vpack.c.b16 %v414, %v413
      %v460 = vpack.c.b16 %v416, %v415
      %v461 = vpack.c.b16 %v418, %v417
      %v462 = vpack.c.b16 %v420, %v419
      %v463 = vpack.c.b16 %v422, %v421
      %v464 = vpack.c.b16 %v424, %v423
      %v465 = vpack.c.b16 %v426, %v425
      %v466 = vpack.c.b16 %v428, %v427
      %v467 = vpack.c.b16 %v430, %v429
      %v468 = vpack.c.b16 %v432, %v431
      %v469 = vpack.c.b16 %v434, %v433
      %v470 = vpack.c.b16 %v436, %v435
      %v471 = vpack.c.b16 %v438, %v437
      %v472 = vpack.c.b16 %v440, %v439
      %v521 = vunpack.c.l.b16 %v290
      %v522 = vunpack.c.l.b16 %v291
      %v523 = vunpack.c.l.b16 %v292
      %v524 = vunpack.c.l.b16 %v293
      %v525 = vunpack.c.l.b16 %v294
      %v526 = vunpack.c.l.b16 %v295
      %v527 = vunpack.c.l.b16 %v296
      %v528 = vunpack.c.l.b16 %v297
      %v529 = vunpack.c.l.b16 %v298
      %v530 = vunpack.c.l.b16 %v299
      %v531 = vunpack.c.l.b16 %v300
      %v532 = vunpack.c.l.b16 %v301
      %v533 = vunpack.c.l.b16 %v302
      %v534 = vunpack.c.l.b16 %v303
      %v535 = vunpack.c.l.b16 %v304
      %v536 = vunpack.c.l.b16 %v305
      %v537 = vpack.c.b16 %v522, %v521
      %v538 = vpack.c.b16 %v524, %v523
      %v539 = vpack.c.b16 %v526, %v525
      %v540 = vpack.c.b16 %v528, %v527
      %v541 = vpack.c.b16 %v530, %v529
      %v542 = vpack.c.b16 %v532, %v531
      %v543 = vpack.c.b16 %v534, %v533
      %v544 = vpack.c.b16 %v536, %v535
      %553 = vmatprep.subr.bf16.mxu0 0
      %554 = vmatpush1.bf16.msra.mxu0 %v544
      %555 = vmatprep.subr.bf16.mxu0 0
      %556 = vmatpush1.bf16.msra.mxu0 %v543
      %557 = vmatprep.subr.bf16.mxu0 0
      %558 = vmatpush1.bf16.msra.mxu0 %v542
      %559 = vmatprep.subr.bf16.mxu0 0
      %560 = vmatpush1.bf16.msra.mxu0 %v541
      %561 = vmatprep.subr.bf16.mxu0 0
      %562 = vmatpush1.bf16.msra.mxu0 %v540
      %563 = vmatprep.subr.bf16.mxu0 0
      %564 = vmatpush1.bf16.msra.mxu0 %v539
      %565 = vmatprep.subr.bf16.mxu0 0
      %566 = vmatpush1.bf16.msra.mxu0 %v538
      %567 = vmatprep.subr.bf16.mxu0 0
      %568 = vmatpush1.bf16.msra.mxu0 %v537
      %569 = vmatprep.subr.bf16.mxu0 0
      %570 = vmatpush2.bf16.msra.mxu0 0
      %571 = vmatprep.subr.bf16.mxu0 0
      %572 = vmatpush2.bf16.msra.mxu0 0
      %573 = vmatprep.subr.bf16.mxu0 0
      %574 = vmatpush2.bf16.msra.mxu0 0
      %575 = vmatprep.subr.bf16.mxu0 0
      %576 = vmatpush2.bf16.msra.mxu0 0
      %577 = vmatprep.subr.bf16.mxu0 0
      %578 = vmatpush2.bf16.msra.mxu0 0
      %579 = vmatprep.subr.bf16.mxu0 0
      %580 = vmatpush2.bf16.msra.mxu0 0
      %581 = vmatprep.subr.bf16.mxu0 0
      %582 = vmatpush2.bf16.msra.mxu0 0
      %583 = vmatprep.subr.bf16.mxu0 0
      %584 = vmatpush2.bf16.msra.mxu0 0
      %585 = vmatprep.mubr.bf16.mxu0 0
      %586 = vmatmul.mubr.bf16.gmra.mxu0 %v441
      %v587 = vpop.f32.mrf.mxu0
      %v588 = vadd.f32 %v311, %v587
      %v589 = vpop.f32.mrf.mxu0
      %v590 = vpop.f32.mrf.mxu0
      %v591 = vadd.f32 %v311, %v590
      %v592 = vpop.f32.mrf.mxu0
      %593 = vmatprep.mubr.bf16.mxu0 0
      %594 = vmatmul.mubr.bf16.gmra.mxu0 %v442
      %v595 = vpop.f32.mrf.mxu0
      %v596 = vadd.f32 %v311, %v595
      %v597 = vpop.f32.mrf.mxu0
      %v598 = vpop.f32.mrf.mxu0
      %v599 = vadd.f32 %v311, %v598
      %v600 = vpop.f32.mrf.mxu0
      %601 = vmatprep.mubr.bf16.mxu0 0
      %602 = vmatmul.mubr.bf16.gmra.mxu0 %v443
      %v603 = vpop.f32.mrf.mxu0
      %v604 = vadd.f32 %v311, %v603
      %v605 = vpop.f32.mrf.mxu0
      %v606 = vpop.f32.mrf.mxu0
      %v607 = vadd.f32 %v311, %v606
      %v608 = vpop.f32.mrf.mxu0
      %609 = vmatprep.mubr.bf16.mxu0 0
      %610 = vmatmul.mubr.bf16.gmra.mxu0 %v444
      %v611 = vpop.f32.mrf.mxu0
      %v612 = vadd.f32 %v311, %v611
      %v613 = vpop.f32.mrf.mxu0
      %v614 = vpop.f32.mrf.mxu0
      %v615 = vadd.f32 %v311, %v614
      %v616 = vpop.f32.mrf.mxu0
      %617 = vmatprep.mubr.bf16.mxu0 0
      %618 = vmatmul.mubr.bf16.gmra.mxu0 %v445
      %v619 = vpop.f32.mrf.mxu0
      %v620 = vadd.f32 %v311, %v619
      %v621 = vpop.f32.mrf.mxu0
      %v622 = vpop.f32.mrf.mxu0
      %v623 = vadd.f32 %v311, %v622
      %v624 = vpop.f32.mrf.mxu0
      %625 = vmatprep.mubr.bf16.mxu0 0
      %626 = vmatmul.mubr.bf16.gmra.mxu0 %v446
      %v627 = vpop.f32.mrf.mxu0
      %v628 = vadd.f32 %v311, %v627
      %v629 = vpop.f32.mrf.mxu0
      %v630 = vpop.f32.mrf.mxu0
      %v631 = vadd.f32 %v311, %v630
      %v632 = vpop.f32.mrf.mxu0
      %633 = vmatprep.mubr.bf16.mxu0 0
      %634 = vmatmul.mubr.bf16.gmra.mxu0 %v447
      %v635 = vpop.f32.mrf.mxu0
      %v636 = vadd.f32 %v311, %v635
      %v637 = vpop.f32.mrf.mxu0
      %v638 = vpop.f32.mrf.mxu0
      %v639 = vadd.f32 %v311, %v638
      %v640 = vpop.f32.mrf.mxu0
      %641 = vmatprep.mubr.bf16.mxu0 0
      %642 = vmatmul.mubr.bf16.gmra.mxu0 %v448
      %v643 = vpop.f32.mrf.mxu0
      %v644 = vadd.f32 %v311, %v643
      %v645 = vpop.f32.mrf.mxu0
      %v646 = vpop.f32.mrf.mxu0
      %v647 = vadd.f32 %v311, %v646
      %v648 = vpop.f32.mrf.mxu0
      %649 = vmatprep.mubr.bf16.mxu0 0
      %650 = vmatmul.mubr.bf16.gmra.mxu0 %v449
      %v651 = vpop.f32.mrf.mxu0
      %v652 = vadd.f32 %v311, %v651
      %v653 = vpop.f32.mrf.mxu0
      %v654 = vpop.f32.mrf.mxu0
      %v655 = vadd.f32 %v311, %v654
      %v656 = vpop.f32.mrf.mxu0
      %657 = vmatprep.mubr.bf16.mxu0 0
      %658 = vmatmul.mubr.bf16.gmra.mxu0 %v450
      %v659 = vpop.f32.mrf.mxu0
      %v660 = vadd.f32 %v311, %v659
      %v661 = vpop.f32.mrf.mxu0
      %v662 = vpop.f32.mrf.mxu0
      %v663 = vadd.f32 %v311, %v662
      %v664 = vpop.f32.mrf.mxu0
      %665 = vmatprep.mubr.bf16.mxu0 0
      %666 = vmatmul.mubr.bf16.gmra.mxu0 %v451
      %v667 = vpop.f32.mrf.mxu0
      %v668 = vadd.f32 %v311, %v667
      %v669 = vpop.f32.mrf.mxu0
      %v670 = vpop.f32.mrf.mxu0
      %v671 = vadd.f32 %v311, %v670
      %v672 = vpop.f32.mrf.mxu0
      %673 = vmatprep.mubr.bf16.mxu0 0
      %674 = vmatmul.mubr.bf16.gmra.mxu0 %v452
      %v675 = vpop.f32.mrf.mxu0
      %v676 = vadd.f32 %v311, %v675
      %v677 = vpop.f32.mrf.mxu0
      %v678 = vpop.f32.mrf.mxu0
      %v679 = vadd.f32 %v311, %v678
      %v680 = vpop.f32.mrf.mxu0
      %681 = vmatprep.mubr.bf16.mxu0 0
      %682 = vmatmul.mubr.bf16.gmra.mxu0 %v453
      %v683 = vpop.f32.mrf.mxu0
      %v684 = vadd.f32 %v311, %v683
      %v685 = vpop.f32.mrf.mxu0
      %v686 = vpop.f32.mrf.mxu0
      %v687 = vadd.f32 %v311, %v686
      %v688 = vpop.f32.mrf.mxu0
      %689 = vmatprep.mubr.bf16.mxu0 0
      %690 = vmatmul.mubr.bf16.gmra.mxu0 %v454
      %v691 = vpop.f32.mrf.mxu0
      %v692 = vadd.f32 %v311, %v691
      %v693 = vpop.f32.mrf.mxu0
      %v694 = vpop.f32.mrf.mxu0
      %v695 = vadd.f32 %v311, %v694
      %v696 = vpop.f32.mrf.mxu0
      %697 = vmatprep.mubr.bf16.mxu0 0
      %698 = vmatmul.mubr.bf16.gmra.mxu0 %v455
      %v699 = vpop.f32.mrf.mxu0
      %v700 = vadd.f32 %v311, %v699
      %v701 = vpop.f32.mrf.mxu0
      %v702 = vpop.f32.mrf.mxu0
      %v703 = vadd.f32 %v311, %v702
      %v704 = vpop.f32.mrf.mxu0
      %705 = vmatprep.mubr.bf16.mxu0 0
      %706 = vmatmul.mubr.bf16.gmra.mxu0 %v456
      %v707 = vpop.f32.mrf.mxu0
      %v708 = vadd.f32 %v311, %v707
      %v709 = vpop.f32.mrf.mxu0
      %v710 = vpop.f32.mrf.mxu0
      %v711 = vadd.f32 %v311, %v710
      %v712 = vpop.f32.mrf.mxu0
      %713 = vmatprep.mubr.bf16.mxu0 0
      %714 = vmatmul.mubr.bf16.gmra.mxu0 %v457
      %v715 = vpop.f32.mrf.mxu0
      %v716 = vadd.f32 %v311, %v715
      %v717 = vpop.f32.mrf.mxu0
      %v718 = vpop.f32.mrf.mxu0
      %v719 = vadd.f32 %v311, %v718
      %v720 = vpop.f32.mrf.mxu0
      %721 = vmatprep.mubr.bf16.mxu0 0
      %722 = vmatmul.mubr.bf16.gmra.mxu0 %v458
      %v723 = vpop.f32.mrf.mxu0
      %v724 = vadd.f32 %v311, %v723
      %v725 = vpop.f32.mrf.mxu0
      %v726 = vpop.f32.mrf.mxu0
      %v727 = vadd.f32 %v311, %v726
      %v728 = vpop.f32.mrf.mxu0
      %729 = vmatprep.mubr.bf16.mxu0 0
      %730 = vmatmul.mubr.bf16.gmra.mxu0 %v459
      %v731 = vpop.f32.mrf.mxu0
      %v732 = vadd.f32 %v311, %v731
      %v733 = vpop.f32.mrf.mxu0
      %v734 = vpop.f32.mrf.mxu0
      %v735 = vadd.f32 %v311, %v734
      %v736 = vpop.f32.mrf.mxu0
      %737 = vmatprep.mubr.bf16.mxu0 0
      %738 = vmatmul.mubr.bf16.gmra.mxu0 %v460
      %v739 = vpop.f32.mrf.mxu0
      %v740 = vadd.f32 %v311, %v739
      %v741 = vpop.f32.mrf.mxu0
      %v742 = vpop.f32.mrf.mxu0
      %v743 = vadd.f32 %v311, %v742
      %v744 = vpop.f32.mrf.mxu0
      %745 = vmatprep.mubr.bf16.mxu0 0
      %746 = vmatmul.mubr.bf16.gmra.mxu0 %v461
      %v747 = vpop.f32.mrf.mxu0
      %v748 = vadd.f32 %v311, %v747
      %v749 = vpop.f32.mrf.mxu0
      %v750 = vpop.f32.mrf.mxu0
      %v751 = vadd.f32 %v311, %v750
      %v752 = vpop.f32.mrf.mxu0
      %753 = vmatprep.mubr.bf16.mxu0 0
      %754 = vmatmul.mubr.bf16.gmra.mxu0 %v462
      %v755 = vpop.f32.mrf.mxu0
      %v756 = vadd.f32 %v311, %v755
      %v757 = vpop.f32.mrf.mxu0
      %v758 = vpop.f32.mrf.mxu0
      %v759 = vadd.f32 %v311, %v758
      %v760 = vpop.f32.mrf.mxu0
      %761 = vmatprep.mubr.bf16.mxu0 0
      %762 = vmatmul.mubr.bf16.gmra.mxu0 %v463
      %v763 = vpop.f32.mrf.mxu0
      %v764 = vadd.f32 %v311, %v763
      %v765 = vpop.f32.mrf.mxu0
      %v766 = vpop.f32.mrf.mxu0
      %v767 = vadd.f32 %v311, %v766
      %v768 = vpop.f32.mrf.mxu0
      %769 = vmatprep.mubr.bf16.mxu0 0
      %770 = vmatmul.mubr.bf16.gmra.mxu0 %v464
      %v771 = vpop.f32.mrf.mxu0
      %v772 = vadd.f32 %v311, %v771
      %v773 = vpop.f32.mrf.mxu0
      %v774 = vpop.f32.mrf.mxu0
      %v775 = vadd.f32 %v311, %v774
      %v776 = vpop.f32.mrf.mxu0
      %777 = vmatprep.mubr.bf16.mxu0 0
      %778 = vmatmul.mubr.bf16.gmra.mxu0 %v465
      %v779 = vpop.f32.mrf.mxu0
      %v780 = vadd.f32 %v311, %v779
      %v781 = vpop.f32.mrf.mxu0
      %v782 = vpop.f32.mrf.mxu0
      %v783 = vadd.f32 %v311, %v782
      %v784 = vpop.f32.mrf.mxu0
      %785 = vmatprep.mubr.bf16.mxu0 0
      %786 = vmatmul.mubr.bf16.gmra.mxu0 %v466
      %v787 = vpop.f32.mrf.mxu0
      %v788 = vadd.f32 %v311, %v787
      %v789 = vpop.f32.mrf.mxu0
      %v790 = vpop.f32.mrf.mxu0
      %v791 = vadd.f32 %v311, %v790
      %v792 = vpop.f32.mrf.mxu0
      %793 = vmatprep.mubr.bf16.mxu0 0
      %794 = vmatmul.mubr.bf16.gmra.mxu0 %v467
      %v795 = vpop.f32.mrf.mxu0
      %v796 = vadd.f32 %v311, %v795
      %v797 = vpop.f32.mrf.mxu0
      %v798 = vpop.f32.mrf.mxu0
      %v799 = vadd.f32 %v311, %v798
      %v800 = vpop.f32.mrf.mxu0
      %801 = vmatprep.mubr.bf16.mxu0 0
      %802 = vmatmul.mubr.bf16.gmra.mxu0 %v468
      %v803 = vpop.f32.mrf.mxu0
      %v804 = vadd.f32 %v311, %v803
      %v805 = vpop.f32.mrf.mxu0
      %v806 = vpop.f32.mrf.mxu0
      %v807 = vadd.f32 %v311, %v806
      %v808 = vpop.f32.mrf.mxu0
      %809 = vmatprep.mubr.bf16.mxu0 0
      %810 = vmatmul.mubr.bf16.gmra.mxu0 %v469
      %v811 = vpop.f32.mrf.mxu0
      %v812 = vadd.f32 %v311, %v811
      %v813 = vpop.f32.mrf.mxu0
      %v814 = vpop.f32.mrf.mxu0
      %v815 = vadd.f32 %v311, %v814
      %v816 = vpop.f32.mrf.mxu0
      %817 = vmatprep.mubr.bf16.mxu0 0
      %818 = vmatmul.mubr.bf16.gmra.mxu0 %v470
      %v819 = vpop.f32.mrf.mxu0
      %v820 = vadd.f32 %v311, %v819
      %v821 = vpop.f32.mrf.mxu0
      %v822 = vpop.f32.mrf.mxu0
      %v823 = vadd.f32 %v311, %v822
      %v824 = vpop.f32.mrf.mxu0
      %825 = vmatprep.mubr.bf16.mxu0 0
      %826 = vmatmul.mubr.bf16.gmra.mxu0 %v471
      %v827 = vpop.f32.mrf.mxu0
      %v828 = vadd.f32 %v311, %v827
      %v829 = vpop.f32.mrf.mxu0
      %v830 = vpop.f32.mrf.mxu0
      %v831 = vadd.f32 %v311, %v830
      %v832 = vpop.f32.mrf.mxu0
      %833 = vmatprep.mubr.bf16.mxu0 0
      %834 = vmatmul.mubr.bf16.gmra.mxu0 %v472
      %v835 = vpop.f32.mrf.mxu0
      %v836 = vadd.f32 %v311, %v835
      %v837 = vpop.f32.mrf.mxu0
      %v838 = vpop.f32.mrf.mxu0
      %v839 = vadd.f32 %v311, %v838
      %v840 = vpop.f32.mrf.mxu0
      %841 = vdwg.mxu0
      %v842 = vmax.f32 %v588, 0.0
      %v843 = vmax.f32 %v591, 0.0
      %v844 = vmax.f32 %v596, 0.0
      %v845 = vmax.f32 %v599, 0.0
      %v846 = vmax.f32 %v604, 0.0
      %v847 = vmax.f32 %v607, 0.0
      %v848 = vmax.f32 %v612, 0.0
      %v849 = vmax.f32 %v615, 0.0
      %v850 = vmax.f32 %v620, 0.0
      %v851 = vmax.f32 %v623, 0.0
      %v852 = vmax.f32 %v628, 0.0
      %v853 = vmax.f32 %v631, 0.0
      %v854 = vmax.f32 %v636, 0.0
      %v855 = vmax.f32 %v639, 0.0
      %v856 = vmax.f32 %v644, 0.0
      %v857 = vmax.f32 %v647, 0.0
      %v858 = vmax.f32 %v652, 0.0
      %v859 = vmax.f32 %v655, 0.0
      %v860 = vmax.f32 %v660, 0.0
      %v861 = vmax.f32 %v663, 0.0
      %v862 = vmax.f32 %v668, 0.0
      %v863 = vmax.f32 %v671, 0.0
      %v864 = vmax.f32 %v676, 0.0
      %v865 = vmax.f32 %v679, 0.0
      %v866 = vmax.f32 %v684, 0.0
      %v867 = vmax.f32 %v687, 0.0
      %v868 = vmax.f32 %v692, 0.0
      %v869 = vmax.f32 %v695, 0.0
      %v870 = vmax.f32 %v700, 0.0
      %v871 = vmax.f32 %v703, 0.0
      %v872 = vmax.f32 %v708, 0.0
      %v873 = vmax.f32 %v711, 0.0
      %v874 = vmax.f32 %v716, 0.0
      %v875 = vmax.f32 %v719, 0.0
      %v876 = vmax.f32 %v724, 0.0
      %v877 = vmax.f32 %v727, 0.0
      %v878 = vmax.f32 %v732, 0.0
      %v879 = vmax.f32 %v735, 0.0
      %v880 = vmax.f32 %v740, 0.0
      %v881 = vmax.f32 %v743, 0.0
      %v882 = vmax.f32 %v748, 0.0
      %v883 = vmax.f32 %v751, 0.0
      %v884 = vmax.f32 %v756, 0.0
      %v885 = vmax.f32 %v759, 0.0
      %v886 = vmax.f32 %v764, 0.0
      %v887 = vmax.f32 %v767, 0.0
      %v888 = vmax.f32 %v772, 0.0
      %v889 = vmax.f32 %v775, 0.0
      %v890 = vmax.f32 %v780, 0.0
      %v891 = vmax.f32 %v783, 0.0
      %v892 = vmax.f32 %v788, 0.0
      %v893 = vmax.f32 %v791, 0.0
      %v894 = vmax.f32 %v796, 0.0
      %v895 = vmax.f32 %v799, 0.0
      %v896 = vmax.f32 %v804, 0.0
      %v897 = vmax.f32 %v807, 0.0
      %v898 = vmax.f32 %v812, 0.0
      %v899 = vmax.f32 %v815, 0.0
      %v900 = vmax.f32 %v820, 0.0
      %v901 = vmax.f32 %v823, 0.0
      %v902 = vmax.f32 %v828, 0.0
      %v903 = vmax.f32 %v831, 0.0
      %v904 = vmax.f32 %v836, 0.0
      %v905 = vmax.f32 %v839, 0.0
      %v906 = vpack.c.bf16 %v843, %v842
      %v907 = vpack.c.bf16 %v845, %v844
      %v908 = vpack.c.bf16 %v847, %v846
      %v909 = vpack.c.bf16 %v849, %v848
      %v910 = vpack.c.bf16 %v851, %v850
      %v911 = vpack.c.bf16 %v853, %v852
      %v912 = vpack.c.bf16 %v855, %v854
      %v913 = vpack.c.bf16 %v857, %v856
      %v914 = vpack.c.bf16 %v859, %v858
      %v915 = vpack.c.bf16 %v861, %v860
      %v916 = vpack.c.bf16 %v863, %v862
      %v917 = vpack.c.bf16 %v865, %v864
      %v918 = vpack.c.bf16 %v867, %v866
      %v919 = vpack.c.bf16 %v869, %v868
      %v920 = vpack.c.bf16 %v871, %v870
      %v921 = vpack.c.bf16 %v873, %v872
      %v922 = vpack.c.bf16 %v875, %v874
      %v923 = vpack.c.bf16 %v877, %v876
      %v924 = vpack.c.bf16 %v879, %v878
      %v925 = vpack.c.bf16 %v881, %v880
      %v926 = vpack.c.bf16 %v883, %v882
      %v927 = vpack.c.bf16 %v885, %v884
      %v928 = vpack.c.bf16 %v887, %v886
      %v929 = vpack.c.bf16 %v889, %v888
      %v930 = vpack.c.bf16 %v891, %v890
      %v931 = vpack.c.bf16 %v893, %v892
      %v932 = vpack.c.bf16 %v895, %v894
      %v933 = vpack.c.bf16 %v897, %v896
      %v934 = vpack.c.bf16 %v899, %v898
      %v935 = vpack.c.bf16 %v901, %v900
      %v936 = vpack.c.bf16 %v903, %v902
      %v937 = vpack.c.bf16 %v905, %v904
      %v970 = vunpack.c.l.b16 %v906
      %v971 = vunpack.c.h.b16 %v906
      %v972 = vunpack.c.l.b16 %v907
      %v973 = vunpack.c.h.b16 %v907
      %v974 = vunpack.c.l.b16 %v908
      %v975 = vunpack.c.h.b16 %v908
      %v976 = vunpack.c.l.b16 %v909
      %v977 = vunpack.c.h.b16 %v909
      %v978 = vunpack.c.l.b16 %v910
      %v979 = vunpack.c.h.b16 %v910
      %v980 = vunpack.c.l.b16 %v911
      %v981 = vunpack.c.h.b16 %v911
      %v982 = vunpack.c.l.b16 %v912
      %v983 = vunpack.c.h.b16 %v912
      %v984 = vunpack.c.l.b16 %v913
      %v985 = vunpack.c.h.b16 %v913
      %v986 = vunpack.c.l.b16 %v914
      %v987 = vunpack.c.h.b16 %v914
      %v988 = vunpack.c.l.b16 %v915
      %v989 = vunpack.c.h.b16 %v915
      %v990 = vunpack.c.l.b16 %v916
      %v991 = vunpack.c.h.b16 %v916
      %v992 = vunpack.c.l.b16 %v917
      %v993 = vunpack.c.h.b16 %v917
      %v994 = vunpack.c.l.b16 %v918
      %v995 = vunpack.c.h.b16 %v918
      %v996 = vunpack.c.l.b16 %v919
      %v997 = vunpack.c.h.b16 %v919
      %v998 = vunpack.c.l.b16 %v920
      %v999 = vunpack.c.h.b16 %v920
      %v1000 = vunpack.c.l.b16 %v921
      %v1001 = vunpack.c.h.b16 %v921
      %v1002 = vunpack.c.l.b16 %v922
      %v1003 = vunpack.c.h.b16 %v922
      %v1004 = vunpack.c.l.b16 %v923
      %v1005 = vunpack.c.h.b16 %v923
      %v1006 = vunpack.c.l.b16 %v924
      %v1007 = vunpack.c.h.b16 %v924
      %v1008 = vunpack.c.l.b16 %v925
      %v1009 = vunpack.c.h.b16 %v925
      %v1010 = vunpack.c.l.b16 %v926
      %v1011 = vunpack.c.h.b16 %v926
      %v1012 = vunpack.c.l.b16 %v927
      %v1013 = vunpack.c.h.b16 %v927
      %v1014 = vunpack.c.l.b16 %v928
      %v1015 = vunpack.c.h.b16 %v928
      %v1016 = vunpack.c.l.b16 %v929
      %v1017 = vunpack.c.h.b16 %v929
      %v1018 = vunpack.c.l.b16 %v930
      %v1019 = vunpack.c.h.b16 %v930
      %v1020 = vunpack.c.l.b16 %v931
      %v1021 = vunpack.c.h.b16 %v931
      %v1022 = vunpack.c.l.b16 %v932
      %v1023 = vunpack.c.h.b16 %v932
      %v1024 = vunpack.c.l.b16 %v933
      %v1025 = vunpack.c.h.b16 %v933
      %v1026 = vunpack.c.l.b16 %v934
      %v1027 = vunpack.c.h.b16 %v934
      %v1028 = vunpack.c.l.b16 %v935
      %v1029 = vunpack.c.h.b16 %v935
      %v1030 = vunpack.c.l.b16 %v936
      %v1031 = vunpack.c.h.b16 %v936
      %v1032 = vunpack.c.l.b16 %v937
      %v1033 = vunpack.c.h.b16 %v937
      %v1034 = vpack.c.b16 %v970, %v970
      %v1035 = vpack.c.b16 %v971, %v971
      %v1036 = vpack.c.b16 %v972, %v972
      %v1037 = vpack.c.b16 %v973, %v973
      %v1038 = vpack.c.b16 %v974, %v974
      %v1039 = vpack.c.b16 %v975, %v975
      %v1040 = vpack.c.b16 %v976, %v976
      %v1041 = vpack.c.b16 %v977, %v977
      %v1042 = vpack.c.b16 %v978, %v978
      %v1043 = vpack.c.b16 %v979, %v979
      %v1044 = vpack.c.b16 %v980, %v980
      %v1045 = vpack.c.b16 %v981, %v981
      %v1046 = vpack.c.b16 %v982, %v982
      %v1047 = vpack.c.b16 %v983, %v983
      %v1048 = vpack.c.b16 %v984, %v984
      %v1049 = vpack.c.b16 %v985, %v985
      %v1050 = vpack.c.b16 %v986, %v986
      %v1051 = vpack.c.b16 %v987, %v987
      %v1052 = vpack.c.b16 %v988, %v988
      %v1053 = vpack.c.b16 %v989, %v989
      %v1054 = vpack.c.b16 %v990, %v990
      %v1055 = vpack.c.b16 %v991, %v991
      %v1056 = vpack.c.b16 %v992, %v992
      %v1057 = vpack.c.b16 %v993, %v993
      %v1058 = vpack.c.b16 %v994, %v994
      %v1059 = vpack.c.b16 %v995, %v995
      %v1060 = vpack.c.b16 %v996, %v996
      %v1061 = vpack.c.b16 %v997, %v997
      %v1062 = vpack.c.b16 %v998, %v998
      %v1063 = vpack.c.b16 %v999, %v999
      %v1064 = vpack.c.b16 %v1000, %v1000
      %v1065 = vpack.c.b16 %v1001, %v1001
      %v1066 = vpack.c.b16 %v1002, %v1002
      %v1067 = vpack.c.b16 %v1003, %v1003
      %v1068 = vpack.c.b16 %v1004, %v1004
      %v1069 = vpack.c.b16 %v1005, %v1005
      %v1070 = vpack.c.b16 %v1006, %v1006
      %v1071 = vpack.c.b16 %v1007, %v1007
      %v1072 = vpack.c.b16 %v1008, %v1008
      %v1073 = vpack.c.b16 %v1009, %v1009
      %v1074 = vpack.c.b16 %v1010, %v1010
      %v1075 = vpack.c.b16 %v1011, %v1011
      %v1076 = vpack.c.b16 %v1012, %v1012
      %v1077 = vpack.c.b16 %v1013, %v1013
      %v1078 = vpack.c.b16 %v1014, %v1014
      %v1079 = vpack.c.b16 %v1015, %v1015
      %v1080 = vpack.c.b16 %v1016, %v1016
      %v1081 = vpack.c.b16 %v1017, %v1017
      %v1082 = vpack.c.b16 %v1018, %v1018
      %v1083 = vpack.c.b16 %v1019, %v1019
      %v1084 = vpack.c.b16 %v1020, %v1020
      %v1085 = vpack.c.b16 %v1021, %v1021
      %v1086 = vpack.c.b16 %v1022, %v1022
      %v1087 = vpack.c.b16 %v1023, %v1023
      %v1088 = vpack.c.b16 %v1024, %v1024
      %v1089 = vpack.c.b16 %v1025, %v1025
      %v1090 = vpack.c.b16 %v1026, %v1026
      %v1091 = vpack.c.b16 %v1027, %v1027
      %v1092 = vpack.c.b16 %v1028, %v1028
      %v1093 = vpack.c.b16 %v1029, %v1029
      %v1094 = vpack.c.b16 %v1030, %v1030
      %v1095 = vpack.c.b16 %v1031, %v1031
      %v1096 = vpack.c.b16 %v1032, %v1032
      %v1097 = vpack.c.b16 %v1033, %v1033
      %1162 = vst [vmem:[%s223] sm:$0xf] %v1034
      %1163 = vst [vmem:[%s223 + $0x4] sm:$0xf] %v1035
      %1164 = vst [vmem:[%s223 + $0x8] sm:$0xf] %v1036
      %1165 = vst [vmem:[%s223 + $0xc] sm:$0xf] %v1037
      %1166 = vst [vmem:[%s223 + $0x10] sm:$0xf] %v1038
      %1167 = vst [vmem:[%s223 + $0x14] sm:$0xf] %v1039
      %1168 = vst [vmem:[%s223 + $0x18] sm:$0xf] %v1040
      %1169 = vst [vmem:[%s223 + $0x1c] sm:$0xf] %v1041
      %1170 = vst [vmem:[%s223 + $0x20] sm:$0xf] %v1042
      %1171 = vst [vmem:[%s223 + $0x24] sm:$0xf] %v1043
      %1172 = vst [vmem:[%s223 + $0x28] sm:$0xf] %v1044
      %1173 = vst [vmem:[%s223 + $0x2c] sm:$0xf] %v1045
      %1174 = vst [vmem:[%s223 + $0x30] sm:$0xf] %v1046
      %1175 = vst [vmem:[%s223 + $0x34] sm:$0xf] %v1047
      %1176 = vst [vmem:[%s223 + $0x38] sm:$0xf] %v1048
      %1177 = vst [vmem:[%s223 + $0x3c] sm:$0xf] %v1049
      %1178 = vst [vmem:[%s223 + $0x40] sm:$0xf] %v1050
      %1179 = vst [vmem:[%s223 + $0x44] sm:$0xf] %v1051
      %1180 = vst [vmem:[%s223 + $0x48] sm:$0xf] %v1052
      %1181 = vst [vmem:[%s223 + $0x4c] sm:$0xf] %v1053
      %1182 = vst [vmem:[%s223 + $0x50] sm:$0xf] %v1054
      %1183 = vst [vmem:[%s223 + $0x54] sm:$0xf] %v1055
      %1184 = vst [vmem:[%s223 + $0x58] sm:$0xf] %v1056
      %1185 = vst [vmem:[%s223 + $0x5c] sm:$0xf] %v1057
      %1186 = vst [vmem:[%s223 + $0x60] sm:$0xf] %v1058
      %1187 = vst [vmem:[%s223 + $0x64] sm:$0xf] %v1059
      %1188 = vst [vmem:[%s223 + $0x68] sm:$0xf] %v1060
      %1189 = vst [vmem:[%s223 + $0x6c] sm:$0xf] %v1061
      %1190 = vst [vmem:[%s223 + $0x70] sm:$0xf] %v1062
      %1191 = vst [vmem:[%s223 + $0x74] sm:$0xf] %v1063
      %1192 = vst [vmem:[%s223 + $0x78] sm:$0xf] %v1064
      %1193 = vst [vmem:[%s223 + $0x7c] sm:$0xf] %v1065
      %1194 = vst [vmem:[%s223 + $0x80] sm:$0xf] %v1066
      %1195 = vst [vmem:[%s223 + $0x84] sm:$0xf] %v1067
      %1196 = vst [vmem:[%s223 + $0x88] sm:$0xf] %v1068
      %1197 = vst [vmem:[%s223 + $0x8c] sm:$0xf] %v1069
      %1198 = vst [vmem:[%s223 + $0x90] sm:$0xf] %v1070
      %1199 = vst [vmem:[%s223 + $0x94] sm:$0xf] %v1071
      %1200 = vst [vmem:[%s223 + $0x98] sm:$0xf] %v1072
      %1201 = vst [vmem:[%s223 + $0x9c] sm:$0xf] %v1073
      %1202 = vst [vmem:[%s223 + $0xa0] sm:$0xf] %v1074
      %1203 = vst [vmem:[%s223 + $0xa4] sm:$0xf] %v1075
      %1204 = vst [vmem:[%s223 + $0xa8] sm:$0xf] %v1076
      %1205 = vst [vmem:[%s223 + $0xac] sm:$0xf] %v1077
      %1206 = vst [vmem:[%s223 + $0xb0] sm:$0xf] %v1078
      %1207 = vst [vmem:[%s223 + $0xb4] sm:$0xf] %v1079
      %1208 = vst [vmem:[%s223 + $0xb8] sm:$0xf] %v1080
      %1209 = vst [vmem:[%s223 + $0xbc] sm:$0xf] %v1081
      %1210 = vst [vmem:[%s223 + $0xc0] sm:$0xf] %v1082
      %1211 = vst [vmem:[%s223 + $0xc4] sm:$0xf] %v1083
      %1212 = vst [vmem:[%s223 + $0xc8] sm:$0xf] %v1084
      %1213 = vst [vmem:[%s223 + $0xcc] sm:$0xf] %v1085
      %1214 = vst [vmem:[%s223 + $0xd0] sm:$0xf] %v1086
      %1215 = vst [vmem:[%s223 + $0xd4] sm:$0xf] %v1087
      %1216 = vst [vmem:[%s223 + $0xd8] sm:$0xf] %v1088
      %1217 = vst [vmem:[%s223 + $0xdc] sm:$0xf] %v1089
      %1218 = vst [vmem:[%s223 + $0xe0] sm:$0xf] %v1090
      %1219 = vst [vmem:[%s223 + $0xe4] sm:$0xf] %v1091
      %1220 = vst [vmem:[%s223 + $0xe8] sm:$0xf] %v1092
      %1221 = vst [vmem:[%s223 + $0xec] sm:$0xf] %v1093
      %1222 = vst [vmem:[%s223 + $0xf0] sm:$0xf] %v1094
      %1223 = vst [vmem:[%s223 + $0xf4] sm:$0xf] %v1095
      %1224 = vst [vmem:[%s223 + $0xf8] sm:$0xf] %v1096
      %1225 = vst [vmem:[%s223 + $0xfc] sm:$0xf] %v1097
      %s1226 = smul.u32 64, %s18
      %p1227 = scmp.lt.s32.totalorder %s1226, 255
      %s1228 = scalar_select %p1227, %s1226, 255
      %p1229 = scmp.lt.s32.totalorder %s19, 0
      %s1230 = scalar_select %p1229, %s19, 0
      %s1231 = sadd.s32 %s1230, %s1228
      %s1232 = smul.addr %s1231, 4
      %s1233 = scalar_lea.vmem %s3, %s1232
      // Predicated region
      $region33: #{hybridsn_forward.7} parent=31 // pred_check
        %p1234 = pneg %p124
      $region34: #{hybridsn_forward.7} parent=31 // pred_check_branch
        %1236 = sbr.rel (%p1234) target = $region36
      $region35: #{hybridsn_forward.7} parent=31 // pred_region
        %s1237 = smul.u32 64, %s18
      $region36: #{hybridsn_forward.7} parent=31 // pred_fallthru
        _
    $region32: #{hybridsn_forward.7} parent=5 // pred_fallthru
      _
    %p1238 = scmp.le.s32.totalorder 2, %s9
    // Predicated region
    $region37: #{hybridsn_forward.7} parent=5 // pred_check
      %p1239 = pneg %p1238
    $region38: #{hybridsn_forward.7} parent=5 // pred_check_branch
      %1241 = sbr.rel (%p1239) target = $region40
    $region39: #{hybridsn_forward.7} parent=5 // pred_region
      %s1242 = ssub.s32 %s9, 2
      // Predicated region
      $region41: #{hybridsn_forward.7} parent=39 // pred_check
        %p1243 = pneg %p130
      $region42: #{hybridsn_forward.7} parent=39 // pred_check_branch
        %1245 = sbr.rel (%p1243) target = $region44
      $region43: #{hybridsn_forward.7} parent=39 // pred_region
        %s1246 = smul.u32 64, %s20
        %p1247 = scmp.lt.s32.totalorder %s1246, 255
        %s1248 = scalar_select %p1247, %s1246, 255
        %p1249 = scmp.lt.s32.totalorder %s21, 0
        %s1250 = scalar_select %p1249, %s21, 0
        %s1251 = sadd.s32 %s1250, %s1248
        %s1252 = smul.addr %s1251, 4
        %s1253 = scalar_lea.vmem %s3, %s1252
      $region44: #{hybridsn_forward.7} parent=39 // pred_fallthru
        _
    $region40: #{hybridsn_forward.7} parent=5 // pred_fallthru
      _
  $region6: #{hybridsn_forward.7} parent=0 // loop_footer
    %s13 = sadd.s32 1, %s9
  $region7: #{hybridsn_forward.7} parent=0 // loop_footer_branch
    %8 = sbr.rel target = $region3
  $region8: #{hybridsn_forward.7} parent=0 // loop_exit
    _

// kernel: hybridsn_forward.8
$region0: #{hybridsn_forward.8}
  #allocation0 [shape = 'u32[]', space=smem, size = 0x4, offset = 0x4, fixed_abs, tag = 'smem constant byte address 0x4 - core index']
  #allocation1 [shape = 'u32[144,128]{1,0:T(1,128)}', space=vmem, size = 0x12000, scoped, tag = 'internal scratch']
  %s0 = inlined_call_operand.vmem [shape: bf16[1024,384], index: 0, kind: input, shape index: {}]
  %s1 = inlined_call_operand.vmem [shape: bf16[384,128], index: 1, kind: input, shape index: {}]
  %s2 = inlined_call_operand.vmem [shape: f32[1,128], index: 2, kind: input, shape index: {}]
  %s3 = inlined_call_operand.vmem [shape: bf16[1024,128], index: 3, kind: output, shape index: {}]
  %s4 = sld [smem:[#allocation0]]
  $region45: #{hybridsn_forward.8} parent=0
    _
  %s6 = ssub.s32 1, %s4
  %s7 = scalar_select 0, %s6, %s4
  loop: start=0, step=1, limit=4
  $region2: #{hybridsn_forward.8} parent=0 // loop_pre_header
    _
  $region3: #{hybridsn_forward.8} parent=0 // loop_header
    %s9 = sphi 0, %s13
    %p10 = scmp.ge.s32.totalorder %s9, 4
    %s16 = sphi 0, %s28
    %s17 = sphi 0, %s24
    %s18 = sphi 0, %s16
    %s19 = sphi 0, %s17
    %s20 = sphi 0, %s18
    %s21 = sphi 0, %s19
    %s31 = sphi 0, %s33
    %s34 = sphi 0, %s31
    %s35 = sphi 0, %s34
    %s51 = sphi 0, %s35
    %s57 = sphi 0, %s59
    %s60 = sphi 0, %s57
    %s61 = sphi 0, %s60
    %s77 = sphi 0, %s61
    %s83 = sphi 0, %s85
    %s86 = sphi 0, %s83
    %s87 = sphi 0, %s86
    %s103 = sphi 0, %s87
    %s111 = sphi 0, %s113
    %s114 = sphi 0, %s111
    %s115 = sphi 0, %s114
    %s131 = sphi 0, %s115
  $region4: #{hybridsn_forward.8} parent=0 // loop_header_branch
    %12 = sbr.rel (%p10) target = $region8
  $region5: #{hybridsn_forward.8} parent=0 // loop_body
    %s14 = ssub.s32 %s9, 1
    %s15 = ssub.s32 %s9, 2
    %s22 = sadd.s32 1, %s17
    %p23 = scmp.ge.s32.totalorder %s22, 1
    %s24 = scalar_select %p23, 0, %s22
    %s25 = sadd.s32 1, %s16
    %s26 = scalar_select %p23, %s25, %s16
    %p27 = scmp.ge.s32.totalorder %s26, 2
    %s28 = scalar_select %p27, 0, %s26
    %s29 = ssub.s32 %s16, %s28
    %p30 = scmp.eq.s32.totalorder %s29, 0
    %s32 = sadd.s32 %s31, 1
    %s33 = scalar_select %p30, %s31, %s32
    %p36 = pneg %p30
    %p37 = scmp.eq.s32.totalorder %s9, 1
    %p38 = por %p36, %p37
    %p39 = scmp.ne.s32.totalorder %s31, %s34
    %p40 = scmp.eq.s32.totalorder %s9, 0
    %p41 = por %p39, %p40
    %p42 = scmp.ne.s32.totalorder %s31, %s34
    %p43 = scmp.eq.s32.totalorder %s14, 1
    %p44 = por %p42, %p43
    %p45 = scmp.ne.s32.totalorder %s34, %s35
    %p46 = scmp.eq.s32.totalorder %s14, 0
    %p47 = por %p45, %p46
    %p48 = scmp.ne.s32.totalorder %s34, %s35
    %p49 = scmp.eq.s32.totalorder %s15, 1
    %p50 = por %p48, %p49
    %p52 = scmp.ne.s32.totalorder %s35, %s51
    %p53 = scmp.eq.s32.totalorder %s15, 0
    %p54 = por %p52, %p53
    %s55 = ssub.s32 %s17, %s24
    %p56 = scmp.eq.s32.totalorder %s55, 0
    %s58 = sadd.s32 %s57, 1
    %s59 = scalar_select %p56, %s57, %s58
    %p62 = pneg %p56
    %p63 = scmp.eq.s32.totalorder %s9, 1
    %p64 = por %p62, %p63
    %p65 = scmp.ne.s32.totalorder %s57, %s60
    %p66 = scmp.eq.s32.totalorder %s9, 0
    %p67 = por %p65, %p66
    %p68 = scmp.ne.s32.totalorder %s57, %s60
    %p69 = scmp.eq.s32.totalorder %s14, 1
    %p70 = por %p68, %p69
    %p71 = scmp.ne.s32.totalorder %s60, %s61
    %p72 = scmp.eq.s32.totalorder %s14, 0
    %p73 = por %p71, %p72
    %p74 = scmp.ne.s32.totalorder %s60, %s61
    %p75 = scmp.eq.s32.totalorder %s15, 1
    %p76 = por %p74, %p75
    %p78 = scmp.ne.s32.totalorder %s61, %s77
    %p79 = scmp.eq.s32.totalorder %s15, 0
    %p80 = por %p78, %p79
    %s81 = ssub.s32 %s17, %s24
    %p82 = scmp.eq.s32.totalorder %s81, 0
    %s84 = sadd.s32 %s83, 1
    %s85 = scalar_select %p82, %s83, %s84
    %p88 = pneg %p82
    %p89 = scmp.eq.s32.totalorder %s9, 1
    %p90 = por %p88, %p89
    %p91 = scmp.ne.s32.totalorder %s83, %s86
    %p92 = scmp.eq.s32.totalorder %s9, 0
    %p93 = por %p91, %p92
    %p94 = scmp.ne.s32.totalorder %s83, %s86
    %p95 = scmp.eq.s32.totalorder %s14, 1
    %p96 = por %p94, %p95
    %p97 = scmp.ne.s32.totalorder %s86, %s87
    %p98 = scmp.eq.s32.totalorder %s14, 0
    %p99 = por %p97, %p98
    %p100 = scmp.ne.s32.totalorder %s86, %s87
    %p101 = scmp.eq.s32.totalorder %s15, 1
    %p102 = por %p100, %p101
    %p104 = scmp.ne.s32.totalorder %s87, %s103
    %p105 = scmp.eq.s32.totalorder %s15, 0
    %p106 = por %p104, %p105
    %s107 = ssub.s32 %s16, %s28
    %s108 = ssub.s32 %s17, %s24
    %s109 = sor.u32 %s107, %s108
    %p110 = scmp.eq.s32.totalorder %s109, 0
    %s112 = sadd.s32 %s111, 1
    %s113 = scalar_select %p110, %s111, %s112
    %p116 = pneg %p110
    %p117 = scmp.eq.s32.totalorder %s9, 1
    %p118 = por %p116, %p117
    %p119 = scmp.ne.s32.totalorder %s111, %s114
    %p120 = scmp.eq.s32.totalorder %s9, 0
    %p121 = por %p119, %p120
    %p122 = scmp.ne.s32.totalorder %s111, %s114
    %p123 = scmp.eq.s32.totalorder %s14, 1
    %p124 = por %p122, %p123
    %p125 = scmp.ne.s32.totalorder %s114, %s115
    %p126 = scmp.eq.s32.totalorder %s14, 0
    %p127 = por %p125, %p126
    %p128 = scmp.ne.s32.totalorder %s114, %s115
    %p129 = scmp.eq.s32.totalorder %s15, 1
    %p130 = por %p128, %p129
    %p132 = scmp.ne.s32.totalorder %s115, %s131
    %p133 = scmp.eq.s32.totalorder %s15, 0
    %p134 = por %p132, %p133
    %p135 = scmp.le.s32.totalorder 1, %s9
    %p136 = scmp.lt.s32.totalorder %s9, 3
    %p137 = pnand %p135, %p136
    %p138 = pneg %p137
    // Predicated region
    $region9: #{hybridsn_forward.8} parent=5 // pred_check
      _
    $region10: #{hybridsn_forward.8} parent=5 // pred_check_branch
      %140 = sbr.rel (%p137) target = $region12
    $region11: #{hybridsn_forward.8} parent=5 // pred_region
      %s141 = ssub.s32 %s9, 1
      // Predicated region
      $region13: #{hybridsn_forward.8} parent=11 // pred_check
        %p142 = pneg %p73
      $region14: #{hybridsn_forward.8} parent=11 // pred_check_branch
        %144 = sbr.rel (%p142) target = $region16
      $region15: #{hybridsn_forward.8} parent=11 // pred_region
        %p145 = scmp.lt.s32.totalorder %s19, 0
        %s146 = scalar_select %p145, %s19, 0
        %s147 = smul.addr %s146, 4
        %s148 = scalar_lea.vmem %s1, %s147
      $region16: #{hybridsn_forward.8} parent=11 // pred_fallthru
        _
      // Predicated region
      $region17: #{hybridsn_forward.8} parent=11 // pred_check
        %p149 = pneg %p99
      $region18: #{hybridsn_forward.8} parent=11 // pred_check_branch
        %151 = sbr.rel (%p149) target = $region20
      $region19: #{hybridsn_forward.8} parent=11 // pred_region
        %p152 = scmp.lt.s32.totalorder %s19, 0
        %s153 = scalar_select %p152, %s19, 0
        %s154 = scalar_lea.vmem %s2, %s153
      $region20: #{hybridsn_forward.8} parent=11 // pred_fallthru
        _
    $region12: #{hybridsn_forward.8} parent=5 // pred_fallthru
      _
    %p155 = scmp.lt.s32.totalorder %s9, 2
    // Predicated region
    $region21: #{hybridsn_forward.8} parent=5 // pred_check
      %p156 = pneg %p155
    $region22: #{hybridsn_forward.8} parent=5 // pred_check_branch
      %158 = sbr.rel (%p156) target = $region24
    $region23: #{hybridsn_forward.8} parent=5 // pred_region
      // Predicated region
      $region25: #{hybridsn_forward.8} parent=23 // pred_check
        %p159 = pneg %p41
      $region26: #{hybridsn_forward.8} parent=23 // pred_check_branch
        %161 = sbr.rel (%p159) target = $region28
      $region27: #{hybridsn_forward.8} parent=23 // pred_region
        %s162 = smul.u32 64, %s16
        %p163 = scmp.lt.s32.totalorder %s162, 127
        %s164 = scalar_select %p163, %s162, 127
        %s165 = smul.addr %s164, 3
        %s166 = smul.addr %s165, 4
        %s167 = scalar_lea.vmem %s0, %s166
        %s168 = smul.u32 64, %s16
      $region28: #{hybridsn_forward.8} parent=23 // pred_fallthru
        _
    $region24: #{hybridsn_forward.8} parent=5 // pred_fallthru
      _
    %p169 = scmp.le.s32.totalorder 1, %s9
    %p170 = scmp.lt.s32.totalorder %s9, 3
    %p171 = pnand %p169, %p170
    %p172 = pneg %p171
    // Predicated region
    $region29: #{hybridsn_forward.8} parent=5 // pred_check
      _
    $region30: #{hybridsn_forward.8} parent=5 // pred_check_branch
      %174 = sbr.rel (%p171) target = $region32
    $region31: #{hybridsn_forward.8} parent=5 // pred_region
      %s175 = ssub.s32 %s9, 1
      %s176 = smul.u32 64, %s18
      %p177 = scmp.lt.s32.totalorder %s176, 127
      %s178 = scalar_select %p177, %s176, 127
      %s179 = smul.addr %s178, 3
      %s180 = smul.addr %s179, 4
      %s181 = scalar_lea.vmem %s0, %s180
      %p182 = pneg %p47
      %p183 = pneg %p44
      %p184 = scmp.lt.s32.totalorder %s19, 0
      %s185 = scalar_select %p184, %s19, 0
      %s186 = smul.addr %s185, 4
      %s187 = scalar_lea.vmem %s1, %s186
      %p188 = pneg %p73
      %p189 = pneg %p70
      %p190 = scmp.lt.s32.totalorder %s19, 0
      %s191 = scalar_select %p190, %s19, 0
      %s192 = scalar_lea.vmem %s2, %s191
      %p193 = pneg %p99
      %p194 = pneg %p96
      %p195 = pneg %p127
      %p196 = pneg %p124
      %s197 = smul.u32 64, %s18
      %p198 = scmp.lt.s32.totalorder %s197, 127
      %s199 = scalar_select %p198, %s197, 127
      %p200 = scmp.lt.s32.totalorder %s19, 0
      %s201 = scalar_select %p200, %s19, 0
      %s202 = sadd.s32 %s201, %s199
      %s203 = smul.addr %s202, 4
      %s204 = scalar_lea.vmem %s3, %s203
      %s205 = smul.u32 64, %s18
      %p206 = scmp.lt.s32.totalorder %s205, 127
      %s207 = scalar_select %p206, %s205, 127
      %s208 = smul.addr %s207, 3
      %s209 = smul.addr %s208, 4
      %s210 = scalar_lea.vmem %s0, %s209
      %s211 = smul.u32 64, %s18
      %p212 = scmp.lt.s32.totalorder %s19, 0
      %s213 = scalar_select %p212, %s19, 0
      %s214 = smul.addr %s213, 4
      %s215 = scalar_lea.vmem %s1, %s214
      %p216 = scmp.lt.s32.totalorder %s19, 0
      %s217 = scalar_select %p216, %s19, 0
      %s218 = scalar_lea.vmem %s2, %s217
      %s219 = smul.u32 64, %s18
      %p220 = scmp.lt.s32.totalorder %s219, 127
      %s221 = scalar_select %p220, %s219, 127
      %p222 = scmp.lt.s32.totalorder %s19, 0
      %s223 = scalar_select %p222, %s19, 0
      %s224 = sadd.s32 %s223, %s221
      %s225 = smul.addr %s224, 4
      %s226 = scalar_lea.vmem %s3, %s225
      %s227 = smul.u32 64, %s18
      %v229 = vld [vmem:[%s210] sm:$0xff]
      %v230 = vld [vmem:[%s210 + $0x8] sm:$0xf]
      %v231 = vld [vmem:[%s210 + $0xc] sm:$0xff]
      %v232 = vld [vmem:[%s210 + $0x14] sm:$0xf]
      %v233 = vld [vmem:[%s210 + $0x18] sm:$0xff]
      %v234 = vld [vmem:[%s210 + $0x20] sm:$0xf]
      %v235 = vld [vmem:[%s210 + $0x24] sm:$0xff]
      %v236 = vld [vmem:[%s210 + $0x2c] sm:$0xf]
      %v237 = vld [vmem:[%s210 + $0x30] sm:$0xff]
      %v238 = vld [vmem:[%s210 + $0x38] sm:$0xf]
      %v239 = vld [vmem:[%s210 + $0x3c] sm:$0xff]
      %v240 = vld [vmem:[%s210 + $0x44] sm:$0xf]
      %v241 = vld [vmem:[%s210 + $0x48] sm:$0xff]
      %v242 = vld [vmem:[%s210 + $0x50] sm:$0xf]
      %v243 = vld [vmem:[%s210 + $0x54] sm:$0xff]
      %v244 = vld [vmem:[%s210 + $0x5c] sm:$0xf]
      %v245 = vld [vmem:[%s210 + $0x60] sm:$0xff]
      %v246 = vld [vmem:[%s210 + $0x68] sm:$0xf]
      %v247 = vld [vmem:[%s210 + $0x6c] sm:$0xff]
      %v248 = vld [vmem:[%s210 + $0x74] sm:$0xf]
      %v249 = vld [vmem:[%s210 + $0x78] sm:$0xff]
      %v250 = vld [vmem:[%s210 + $0x80] sm:$0xf]
      %v251 = vld [vmem:[%s210 + $0x84] sm:$0xff]
      %v252 = vld [vmem:[%s210 + $0x8c] sm:$0xf]
      %v253 = vld [vmem:[%s210 + $0x90] sm:$0xff]
      %v254 = vld [vmem:[%s210 + $0x98] sm:$0xf]
      %v255 = vld [vmem:[%s210 + $0x9c] sm:$0xff]
      %v256 = vld [vmem:[%s210 + $0xa4] sm:$0xf]
      %v257 = vld [vmem:[%s210 + $0xa8] sm:$0xff]
      %v258 = vld [vmem:[%s210 + $0xb0] sm:$0xf]
      %v259 = vld [vmem:[%s210 + $0xb4] sm:$0xff]
      %v260 = vld [vmem:[%s210 + $0xbc] sm:$0xf]
      %v261 = vld [vmem:[%s210 + $0xc0] sm:$0xff]
      %v262 = vld [vmem:[%s210 + $0xc8] sm:$0xf]
      %v263 = vld [vmem:[%s210 + $0xcc] sm:$0xff]
      %v264 = vld [vmem:[%s210 + $0xd4] sm:$0xf]
      %v265 = vld [vmem:[%s210 + $0xd8] sm:$0xff]
      %v266 = vld [vmem:[%s210 + $0xe0] sm:$0xf]
      %v267 = vld [vmem:[%s210 + $0xe4] sm:$0xff]
      %v268 = vld [vmem:[%s210 + $0xec] sm:$0xf]
      %v269 = vld [vmem:[%s210 + $0xf0] sm:$0xff]
      %v270 = vld [vmem:[%s210 + $0xf8] sm:$0xf]
      %v271 = vld [vmem:[%s210 + $0xfc] sm:$0xff]
      %v272 = vld [vmem:[%s210 + $0x104] sm:$0xf]
      %v273 = vld [vmem:[%s210 + $0x108] sm:$0xff]
      %v274 = vld [vmem:[%s210 + $0x110] sm:$0xf]
      %v275 = vld [vmem:[%s210 + $0x114] sm:$0xff]
      %v276 = vld [vmem:[%s210 + $0x11c] sm:$0xf]
      %v277 = vld [vmem:[%s210 + $0x120] sm:$0xff]
      %v278 = vld [vmem:[%s210 + $0x128] sm:$0xf]
      %v279 = vld [vmem:[%s210 + $0x12c] sm:$0xff]
      %v280 = vld [vmem:[%s210 + $0x134] sm:$0xf]
      %v281 = vld [vmem:[%s210 + $0x138] sm:$0xff]
      %v282 = vld [vmem:[%s210 + $0x140] sm:$0xf]
      %v283 = vld [vmem:[%s210 + $0x144] sm:$0xff]
      %v284 = vld [vmem:[%s210 + $0x14c] sm:$0xf]
      %v285 = vld [vmem:[%s210 + $0x150] sm:$0xff]
      %v286 = vld [vmem:[%s210 + $0x158] sm:$0xf]
      %v287 = vld [vmem:[%s210 + $0x15c] sm:$0xff]
      %v288 = vld [vmem:[%s210 + $0x164] sm:$0xf]
      %v289 = vld [vmem:[%s210 + $0x168] sm:$0xff]
      %v290 = vld [vmem:[%s210 + $0x170] sm:$0xf]
      %v291 = vld [vmem:[%s210 + $0x174] sm:$0xff]
      %v292 = vld [vmem:[%s210 + $0x17c] sm:$0xf]
      %v293 = vld [vmem:[%s210 + $0x180] sm:$0xff]
      %v294 = vld [vmem:[%s210 + $0x188] sm:$0xf]
      %v295 = vld [vmem:[%s210 + $0x18c] sm:$0xff]
      %v296 = vld [vmem:[%s210 + $0x194] sm:$0xf]
      %v297 = vld [vmem:[%s210 + $0x198] sm:$0xff]
      %v298 = vld [vmem:[%s210 + $0x1a0] sm:$0xf]
      %v299 = vld [vmem:[%s210 + $0x1a4] sm:$0xff]
      %v300 = vld [vmem:[%s210 + $0x1ac] sm:$0xf]
      %v301 = vld [vmem:[%s210 + $0x1b0] sm:$0xff]
      %v302 = vld [vmem:[%s210 + $0x1b8] sm:$0xf]
      %v303 = vld [vmem:[%s210 + $0x1bc] sm:$0xff]
      %v304 = vld [vmem:[%s210 + $0x1c4] sm:$0xf]
      %v305 = vld [vmem:[%s210 + $0x1c8] sm:$0xff]
      %v306 = vld [vmem:[%s210 + $0x1d0] sm:$0xf]
      %v307 = vld [vmem:[%s210 + $0x1d4] sm:$0xff]
      %v308 = vld [vmem:[%s210 + $0x1dc] sm:$0xf]
      %v309 = vld [vmem:[%s210 + $0x1e0] sm:$0xff]
      %v310 = vld [vmem:[%s210 + $0x1e8] sm:$0xf]
      %v311 = vld [vmem:[%s210 + $0x1ec] sm:$0xff]
      %v312 = vld [vmem:[%s210 + $0x1f4] sm:$0xf]
      %v313 = vld [vmem:[%s210 + $0x1f8] sm:$0xff]
      %v314 = vld [vmem:[%s210 + $0x200] sm:$0xf]
      %v315 = vld [vmem:[%s210 + $0x204] sm:$0xff]
      %v316 = vld [vmem:[%s210 + $0x20c] sm:$0xf]
      %v317 = vld [vmem:[%s210 + $0x210] sm:$0xff]
      %v318 = vld [vmem:[%s210 + $0x218] sm:$0xf]
      %v319 = vld [vmem:[%s210 + $0x21c] sm:$0xff]
      %v320 = vld [vmem:[%s210 + $0x224] sm:$0xf]
      %v321 = vld [vmem:[%s210 + $0x228] sm:$0xff]
      %v322 = vld [vmem:[%s210 + $0x230] sm:$0xf]
      %v323 = vld [vmem:[%s210 + $0x234] sm:$0xff]
      %v324 = vld [vmem:[%s210 + $0x23c] sm:$0xf]
      %v325 = vld [vmem:[%s210 + $0x240] sm:$0xff]
      %v326 = vld [vmem:[%s210 + $0x248] sm:$0xf]
      %v327 = vld [vmem:[%s210 + $0x24c] sm:$0xff]
      %v328 = vld [vmem:[%s210 + $0x254] sm:$0xf]
      %v329 = vld [vmem:[%s210 + $0x258] sm:$0xff]
      %v330 = vld [vmem:[%s210 + $0x260] sm:$0xf]
      %v331 = vld [vmem:[%s210 + $0x264] sm:$0xff]
      %v332 = vld [vmem:[%s210 + $0x26c] sm:$0xf]
      %v333 = vld [vmem:[%s210 + $0x270] sm:$0xff]
      %v334 = vld [vmem:[%s210 + $0x278] sm:$0xf]
      %v335 = vld [vmem:[%s210 + $0x27c] sm:$0xff]
      %v336 = vld [vmem:[%s210 + $0x284] sm:$0xf]
      %v337 = vld [vmem:[%s210 + $0x288] sm:$0xff]
      %v338 = vld [vmem:[%s210 + $0x290] sm:$0xf]
      %v339 = vld [vmem:[%s210 + $0x294] sm:$0xff]
      %v340 = vld [vmem:[%s210 + $0x29c] sm:$0xf]
      %v341 = vld [vmem:[%s210 + $0x2a0] sm:$0xff]
      %v342 = vld [vmem:[%s210 + $0x2a8] sm:$0xf]
      %v343 = vld [vmem:[%s210 + $0x2ac] sm:$0xff]
      %v344 = vld [vmem:[%s210 + $0x2b4] sm:$0xf]
      %v345 = vld [vmem:[%s210 + $0x2b8] sm:$0xff]
      %v346 = vld [vmem:[%s210 + $0x2c0] sm:$0xf]
      %v347 = vld [vmem:[%s210 + $0x2c4] sm:$0xff]
      %v348 = vld [vmem:[%s210 + $0x2cc] sm:$0xf]
      %v349 = vld [vmem:[%s210 + $0x2d0] sm:$0xff]
      %v350 = vld [vmem:[%s210 + $0x2d8] sm:$0xf]
      %v351 = vld [vmem:[%s210 + $0x2dc] sm:$0xff]
      %v352 = vld [vmem:[%s210 + $0x2e4] sm:$0xf]
      %v353 = vld [vmem:[%s210 + $0x2e8] sm:$0xff]
      %v354 = vld [vmem:[%s210 + $0x2f0] sm:$0xf]
      %v355 = vld [vmem:[%s210 + $0x2f4] sm:$0xff]
      %v356 = vld [vmem:[%s210 + $0x2fc] sm:$0xf]
      %v357 = vld [vmem:[%s215] sm:$0xf]
      %v358 = vld [vmem:[%s215 + $0x4] sm:$0xf]
      %v359 = vld [vmem:[%s215 + $0x8] sm:$0xf]
      %v360 = vld [vmem:[%s215 + $0xc] sm:$0xf]
      %v361 = vld [vmem:[%s215 + $0x10] sm:$0xf]
      %v362 = vld [vmem:[%s215 + $0x14] sm:$0xf]
      %v363 = vld [vmem:[%s215 + $0x18] sm:$0xf]
      %v364 = vld [vmem:[%s215 + $0x1c] sm:$0xf]
      %v365 = vld [vmem:[%s215 + $0x20] sm:$0xf]
      %v366 = vld [vmem:[%s215 + $0x24] sm:$0xf]
      %v367 = vld [vmem:[%s215 + $0x28] sm:$0xf]
      %v368 = vld [vmem:[%s215 + $0x2c] sm:$0xf]
      %v369 = vld [vmem:[%s215 + $0x30] sm:$0xf]
      %v370 = vld [vmem:[%s215 + $0x34] sm:$0xf]
      %v371 = vld [vmem:[%s215 + $0x38] sm:$0xf]
      %v372 = vld [vmem:[%s215 + $0x3c] sm:$0xf]
      %v373 = vld [vmem:[%s215 + $0x40] sm:$0xf]
      %v374 = vld [vmem:[%s215 + $0x44] sm:$0xf]
      %v375 = vld [vmem:[%s215 + $0x48] sm:$0xf]
      %v376 = vld [vmem:[%s215 + $0x4c] sm:$0xf]
      %v377 = vld [vmem:[%s215 + $0x50] sm:$0xf]
      %v378 = vld [vmem:[%s215 + $0x54] sm:$0xf]
      %v379 = vld [vmem:[%s215 + $0x58] sm:$0xf]
      %v380 = vld [vmem:[%s215 + $0x5c] sm:$0xf]
      %v381 = vld [vmem:[%s215 + $0x60] sm:$0xf]
      %v382 = vld [vmem:[%s215 + $0x64] sm:$0xf]
      %v383 = vld [vmem:[%s215 + $0x68] sm:$0xf]
      %v384 = vld [vmem:[%s215 + $0x6c] sm:$0xf]
      %v385 = vld [vmem:[%s215 + $0x70] sm:$0xf]
      %v386 = vld [vmem:[%s215 + $0x74] sm:$0xf]
      %v387 = vld [vmem:[%s215 + $0x78] sm:$0xf]
      %v388 = vld [vmem:[%s215 + $0x7c] sm:$0xf]
      %v389 = vld [vmem:[%s215 + $0x80] sm:$0xf]
      %v390 = vld [vmem:[%s215 + $0x84] sm:$0xf]
      %v391 = vld [vmem:[%s215 + $0x88] sm:$0xf]
      %v392 = vld [vmem:[%s215 + $0x8c] sm:$0xf]
      %v393 = vld [vmem:[%s215 + $0x90] sm:$0xf]
      %v394 = vld [vmem:[%s215 + $0x94] sm:$0xf]
      %v395 = vld [vmem:[%s215 + $0x98] sm:$0xf]
      %v396 = vld [vmem:[%s215 + $0x9c] sm:$0xf]
      %v397 = vld [vmem:[%s215 + $0xa0] sm:$0xf]
      %v398 = vld [vmem:[%s215 + $0xa4] sm:$0xf]
      %v399 = vld [vmem:[%s215 + $0xa8] sm:$0xf]
      %v400 = vld [vmem:[%s215 + $0xac] sm:$0xf]
      %v401 = vld [vmem:[%s215 + $0xb0] sm:$0xf]
      %v402 = vld [vmem:[%s215 + $0xb4] sm:$0xf]
      %v403 = vld [vmem:[%s215 + $0xb8] sm:$0xf]
      %v404 = vld [vmem:[%s215 + $0xbc] sm:$0xf]
      %v405 = vld [vmem:[%s218] sm:$0x1]
      %v407 = vlaneseq
      %v408 = vshrl.u32 %v407, 7
      %v409 = vsub.s32 0, %v408
      %v410 = vrot.slane %v405, %v409
      %v540 = vunpack.c.l.b16 %v229
      %v541 = vunpack.c.h.b16 %v229
      %v542 = vunpack.c.l.b16 %v230
      %v543 = vunpack.c.l.b16 %v231
      %v544 = vunpack.c.h.b16 %v231
      %v545 = vunpack.c.l.b16 %v232
      %v546 = vunpack.c.l.b16 %v233
      %v547 = vunpack.c.h.b16 %v233
      %v548 = vunpack.c.l.b16 %v234
      %v549 = vunpack.c.l.b16 %v235
      %v550 = vunpack.c.h.b16 %v235
      %v551 = vunpack.c.l.b16 %v236
      %v552 = vunpack.c.l.b16 %v237
      %v553 = vunpack.c.h.b16 %v237
      %v554 = vunpack.c.l.b16 %v238
      %v555 = vunpack.c.l.b16 %v239
      %v556 = vunpack.c.h.b16 %v239
      %v557 = vunpack.c.l.b16 %v240
      %v558 = vunpack.c.l.b16 %v241
      %v559 = vunpack.c.h.b16 %v241
      %v560 = vunpack.c.l.b16 %v242
      %v561 = vunpack.c.l.b16 %v243
      %v562 = vunpack.c.h.b16 %v243
      %v563 = vunpack.c.l.b16 %v244
      %v564 = vunpack.c.l.b16 %v245
      %v565 = vunpack.c.h.b16 %v245
      %v566 = vunpack.c.l.b16 %v246
      %v567 = vunpack.c.l.b16 %v247
      %v568 = vunpack.c.h.b16 %v247
      %v569 = vunpack.c.l.b16 %v248
      %v570 = vunpack.c.l.b16 %v249
      %v571 = vunpack.c.h.b16 %v249
      %v572 = vunpack.c.l.b16 %v250
      %v573 = vunpack.c.l.b16 %v251
      %v574 = vunpack.c.h.b16 %v251
      %v575 = vunpack.c.l.b16 %v252
      %v576 = vunpack.c.l.b16 %v253
      %v577 = vunpack.c.h.b16 %v253
      %v578 = vunpack.c.l.b16 %v254
      %v579 = vunpack.c.l.b16 %v255
      %v580 = vunpack.c.h.b16 %v255
      %v581 = vunpack.c.l.b16 %v256
      %v582 = vunpack.c.l.b16 %v257
      %v583 = vunpack.c.h.b16 %v257
      %v584 = vunpack.c.l.b16 %v258
      %v585 = vunpack.c.l.b16 %v259
      %v586 = vunpack.c.h.b16 %v259
      %v587 = vunpack.c.l.b16 %v260
      %v588 = vunpack.c.l.b16 %v261
      %v589 = vunpack.c.h.b16 %v261
      %v590 = vunpack.c.l.b16 %v262
      %v591 = vunpack.c.l.b16 %v263
      %v592 = vunpack.c.h.b16 %v263
      %v593 = vunpack.c.l.b16 %v264
      %v594 = vunpack.c.l.b16 %v265
      %v595 = vunpack.c.h.b16 %v265
      %v596 = vunpack.c.l.b16 %v266
      %v597 = vunpack.c.l.b16 %v267
      %v598 = vunpack.c.h.b16 %v267
      %v599 = vunpack.c.l.b16 %v268
      %v600 = vunpack.c.l.b16 %v269
      %v601 = vunpack.c.h.b16 %v269
      %v602 = vunpack.c.l.b16 %v270
      %v603 = vunpack.c.l.b16 %v271
      %v604 = vunpack.c.h.b16 %v271
      %v605 = vunpack.c.l.b16 %v272
      %v606 = vunpack.c.l.b16 %v273
      %v607 = vunpack.c.h.b16 %v273
      %v608 = vunpack.c.l.b16 %v274
      %v609 = vunpack.c.l.b16 %v275
      %v610 = vunpack.c.h.b16 %v275
      %v611 = vunpack.c.l.b16 %v276
      %v612 = vunpack.c.l.b16 %v277
      %v613 = vunpack.c.h.b16 %v277
      %v614 = vunpack.c.l.b16 %v278
      %v615 = vunpack.c.l.b16 %v279
      %v616 = vunpack.c.h.b16 %v279
      %v617 = vunpack.c.l.b16 %v280
      %v618 = vunpack.c.l.b16 %v281
      %v619 = vunpack.c.h.b16 %v281
      %v620 = vunpack.c.l.b16 %v282
      %v621 = vunpack.c.l.b16 %v283
      %v622 = vunpack.c.h.b16 %v283
      %v623 = vunpack.c.l.b16 %v284
      %v624 = vunpack.c.l.b16 %v285
      %v625 = vunpack.c.h.b16 %v285
      %v626 = vunpack.c.l.b16 %v286
      %v627 = vunpack.c.l.b16 %v287
      %v628 = vunpack.c.h.b16 %v287
      %v629 = vunpack.c.l.b16 %v288
      %v630 = vunpack.c.l.b16 %v289
      %v631 = vunpack.c.h.b16 %v289
      %v632 = vunpack.c.l.b16 %v290
      %v633 = vunpack.c.l.b16 %v291
      %v634 = vunpack.c.h.b16 %v291
      %v635 = vunpack.c.l.b16 %v292
      %v636 = vunpack.c.l.b16 %v293
      %v637 = vunpack.c.h.b16 %v293
      %v638 = vunpack.c.l.b16 %v294
      %v639 = vunpack.c.l.b16 %v295
      %v640 = vunpack.c.h.b16 %v295
      %v641 = vunpack.c.l.b16 %v296
      %v642 = vunpack.c.l.b16 %v297
      %v643 = vunpack.c.h.b16 %v297
      %v644 = vunpack.c.l.b16 %v298
      %v645 = vunpack.c.l.b16 %v299
      %v646 = vunpack.c.h.b16 %v299
      %v647 = vunpack.c.l.b16 %v300
      %v648 = vunpack.c.l.b16 %v301
      %v649 = vunpack.c.h.b16 %v301
      %v650 = vunpack.c.l.b16 %v302
      %v651 = vunpack.c.l.b16 %v303
      %v652 = vunpack.c.h.b16 %v303
      %v653 = vunpack.c.l.b16 %v304
      %v654 = vunpack.c.l.b16 %v305
      %v655 = vunpack.c.h.b16 %v305
      %v656 = vunpack.c.l.b16 %v306
      %v657 = vunpack.c.l.b16 %v307
      %v658 = vunpack.c.h.b16 %v307
      %v659 = vunpack.c.l.b16 %v308
      %v660 = vunpack.c.l.b16 %v309
      %v661 = vunpack.c.h.b16 %v309
      %v662 = vunpack.c.l.b16 %v310
      %v663 = vunpack.c.l.b16 %v311
      %v664 = vunpack.c.h.b16 %v311
      %v665 = vunpack.c.l.b16 %v312
      %v666 = vunpack.c.l.b16 %v313
      %v667 = vunpack.c.h.b16 %v313
      %v668 = vunpack.c.l.b16 %v314
      %v669 = vunpack.c.l.b16 %v315
      %v670 = vunpack.c.h.b16 %v315
      %v671 = vunpack.c.l.b16 %v316
      %v672 = vunpack.c.l.b16 %v317
      %v673 = vunpack.c.h.b16 %v317
      %v674 = vunpack.c.l.b16 %v318
      %v675 = vunpack.c.l.b16 %v319
      %v676 = vunpack.c.h.b16 %v319
      %v677 = vunpack.c.l.b16 %v320
      %v678 = vunpack.c.l.b16 %v321
      %v679 = vunpack.c.h.b16 %v321
      %v680 = vunpack.c.l.b16 %v322
      %v681 = vunpack.c.l.b16 %v323
      %v682 = vunpack.c.h.b16 %v323
      %v683 = vunpack.c.l.b16 %v324
      %v684 = vunpack.c.l.b16 %v325
      %v685 = vunpack.c.h.b16 %v325
      %v686 = vunpack.c.l.b16 %v326
      %v687 = vunpack.c.l.b16 %v327
      %v688 = vunpack.c.h.b16 %v327
      %v689 = vunpack.c.l.b16 %v328
      %v690 = vunpack.c.l.b16 %v329
      %v691 = vunpack.c.h.b16 %v329
      %v692 = vunpack.c.l.b16 %v330
      %v693 = vunpack.c.l.b16 %v331
      %v694 = vunpack.c.h.b16 %v331
      %v695 = vunpack.c.l.b16 %v332
      %v696 = vunpack.c.l.b16 %v333
      %v697 = vunpack.c.h.b16 %v333
      %v698 = vunpack.c.l.b16 %v334
      %v699 = vunpack.c.l.b16 %v335
      %v700 = vunpack.c.h.b16 %v335
      %v701 = vunpack.c.l.b16 %v336
      %v702 = vunpack.c.l.b16 %v337
      %v703 = vunpack.c.h.b16 %v337
      %v704 = vunpack.c.l.b16 %v338
      %v705 = vunpack.c.l.b16 %v339
      %v706 = vunpack.c.h.b16 %v339
      %v707 = vunpack.c.l.b16 %v340
      %v708 = vunpack.c.l.b16 %v341
      %v709 = vunpack.c.h.b16 %v341
      %v710 = vunpack.c.l.b16 %v342
      %v711 = vunpack.c.l.b16 %v343
      %v712 = vunpack.c.h.b16 %v343
      %v713 = vunpack.c.l.b16 %v344
      %v714 = vunpack.c.l.b16 %v345
      %v715 = vunpack.c.h.b16 %v345
      %v716 = vunpack.c.l.b16 %v346
      %v717 = vunpack.c.l.b16 %v347
      %v718 = vunpack.c.h.b16 %v347
      %v719 = vunpack.c.l.b16 %v348
      %v720 = vunpack.c.l.b16 %v349
      %v721 = vunpack.c.h.b16 %v349
      %v722 = vunpack.c.l.b16 %v350
      %v723 = vunpack.c.l.b16 %v351
      %v724 = vunpack.c.h.b16 %v351
      %v725 = vunpack.c.l.b16 %v352
      %v726 = vunpack.c.l.b16 %v353
      %v727 = vunpack.c.h.b16 %v353
      %v728 = vunpack.c.l.b16 %v354
      %v729 = vunpack.c.l.b16 %v355
      %v730 = vunpack.c.h.b16 %v355
      %v731 = vunpack.c.l.b16 %v356
      %v732 = vpack.c.b16 %v543, %v540
      %v733 = vpack.c.b16 %v544, %v541
      %v734 = vpack.c.b16 %v545, %v542
      %v735 = vpack.c.b16 %v549, %v546
      %v736 = vpack.c.b16 %v550, %v547
      %v737 = vpack.c.b16 %v551, %v548
      %v738 = vpack.c.b16 %v555, %v552
      %v739 = vpack.c.b16 %v556, %v553
      %v740 = vpack.c.b16 %v557, %v554
      %v741 = vpack.c.b16 %v561, %v558
      %v742 = vpack.c.b16 %v562, %v559
      %v743 = vpack.c.b16 %v563, %v560
      %v744 = vpack.c.b16 %v567, %v564
      %v745 = vpack.c.b16 %v568, %v565
      %v746 = vpack.c.b16 %v569, %v566
      %v747 = vpack.c.b16 %v573, %v570
      %v748 = vpack.c.b16 %v574, %v571
      %v749 = vpack.c.b16 %v575, %v572
      %v750 = vpack.c.b16 %v579, %v576
      %v751 = vpack.c.b16 %v580, %v577
      %v752 = vpack.c.b16 %v581, %v578
      %v753 = vpack.c.b16 %v585, %v582
      %v754 = vpack.c.b16 %v586, %v583
      %v755 = vpack.c.b16 %v587, %v584
      %v756 = vpack.c.b16 %v591, %v588
      %v757 = vpack.c.b16 %v592, %v589
      %v758 = vpack.c.b16 %v593, %v590
      %v759 = vpack.c.b16 %v597, %v594
      %v760 = vpack.c.b16 %v598, %v595
      %v761 = vpack.c.b16 %v599, %v596
      %v762 = vpack.c.b16 %v603, %v600
      %v763 = vpack.c.b16 %v604, %v601
      %v764 = vpack.c.b16 %v605, %v602
      %v765 = vpack.c.b16 %v609, %v606
      %v766 = vpack.c.b16 %v610, %v607
      %v767 = vpack.c.b16 %v611, %v608
      %v768 = vpack.c.b16 %v615, %v612
      %v769 = vpack.c.b16 %v616, %v613
      %v770 = vpack.c.b16 %v617, %v614
      %v771 = vpack.c.b16 %v621, %v618
      %v772 = vpack.c.b16 %v622, %v619
      %v773 = vpack.c.b16 %v623, %v620
      %v774 = vpack.c.b16 %v627, %v624
      %v775 = vpack.c.b16 %v628, %v625
      %v776 = vpack.c.b16 %v629, %v626
      %v777 = vpack.c.b16 %v633, %v630
      %v778 = vpack.c.b16 %v634, %v631
      %v779 = vpack.c.b16 %v635, %v632
      %v780 = vpack.c.b16 %v639, %v636
      %v781 = vpack.c.b16 %v640, %v637
      %v782 = vpack.c.b16 %v641, %v638
      %v783 = vpack.c.b16 %v645, %v642
      %v784 = vpack.c.b16 %v646, %v643
      %v785 = vpack.c.b16 %v647, %v644
      %v786 = vpack.c.b16 %v651, %v648
      %v787 = vpack.c.b16 %v652, %v649
      %v788 = vpack.c.b16 %v653, %v650
      %v789 = vpack.c.b16 %v657, %v654
      %v790 = vpack.c.b16 %v658, %v655
      %v791 = vpack.c.b16 %v659, %v656
      %v792 = vpack.c.b16 %v663, %v660
      %v793 = vpack.c.b16 %v664, %v661
      %v794 = vpack.c.b16 %v665, %v662
      %v795 = vpack.c.b16 %v669, %v666
      %v796 = vpack.c.b16 %v670, %v667
      %v797 = vpack.c.b16 %v671, %v668
      %v798 = vpack.c.b16 %v675, %v672
      %v799 = vpack.c.b16 %v676, %v673
      %v800 = vpack.c.b16 %v677, %v674
      %v801 = vpack.c.b16 %v681, %v678
      %v802 = vpack.c.b16 %v682, %v679
      %v803 = vpack.c.b16 %v683, %v680
      %v804 = vpack.c.b16 %v687, %v684
      %v805 = vpack.c.b16 %v688, %v685
      %v806 = vpack.c.b16 %v689, %v686
      %v807 = vpack.c.b16 %v693, %v690
      %v808 = vpack.c.b16 %v694, %v691
      %v809 = vpack.c.b16 %v695, %v692
      %v810 = vpack.c.b16 %v699, %v696
      %v811 = vpack.c.b16 %v700, %v697
      %v812 = vpack.c.b16 %v701, %v698
      %v813 = vpack.c.b16 %v705, %v702
      %v814 = vpack.c.b16 %v706, %v703
      %v815 = vpack.c.b16 %v707, %v704
      %v816 = vpack.c.b16 %v711, %v708
      %v817 = vpack.c.b16 %v712, %v709
      %v818 = vpack.c.b16 %v713, %v710
      %v819 = vpack.c.b16 %v717, %v714
      %v820 = vpack.c.b16 %v718, %v715
      %v821 = vpack.c.b16 %v719, %v716
      %v822 = vpack.c.b16 %v723, %v720
      %v823 = vpack.c.b16 %v724, %v721
      %v824 = vpack.c.b16 %v725, %v722
      %v825 = vpack.c.b16 %v729, %v726
      %v826 = vpack.c.b16 %v730, %v727
      %v827 = vpack.c.b16 %v731, %v728
      %v972 = vunpack.c.l.b16 %v357
      %v973 = vunpack.c.l.b16 %v358
      %v974 = vunpack.c.l.b16 %v359
      %v975 = vunpack.c.l.b16 %v360
      %v976 = vunpack.c.l.b16 %v361
      %v977 = vunpack.c.l.b16 %v362
      %v978 = vunpack.c.l.b16 %v363
      %v979 = vunpack.c.l.b16 %v364
      %v980 = vunpack.c.l.b16 %v365
      %v981 = vunpack.c.l.b16 %v366
      %v982 = vunpack.c.l.b16 %v367
      %v983 = vunpack.c.l.b16 %v368
      %v984 = vunpack.c.l.b16 %v369
      %v985 = vunpack.c.l.b16 %v370
      %v986 = vunpack.c.l.b16 %v371
      %v987 = vunpack.c.l.b16 %v372
      %v988 = vunpack.c.l.b16 %v373
      %v989 = vunpack.c.l.b16 %v374
      %v990 = vunpack.c.l.b16 %v375
      %v991 = vunpack.c.l.b16 %v376
      %v992 = vunpack.c.l.b16 %v377
      %v993 = vunpack.c.l.b16 %v378
      %v994 = vunpack.c.l.b16 %v379
      %v995 = vunpack.c.l.b16 %v380
      %v996 = vunpack.c.l.b16 %v381
      %v997 = vunpack.c.l.b16 %v382
      %v998 = vunpack.c.l.b16 %v383
      %v999 = vunpack.c.l.b16 %v384
      %v1000 = vunpack.c.l.b16 %v385
      %v1001 = vunpack.c.l.b16 %v386
      %v1002 = vunpack.c.l.b16 %v387
      %v1003 = vunpack.c.l.b16 %v388
      %v1004 = vunpack.c.l.b16 %v389
      %v1005 = vunpack.c.l.b16 %v390
      %v1006 = vunpack.c.l.b16 %v391
      %v1007 = vunpack.c.l.b16 %v392
      %v1008 = vunpack.c.l.b16 %v393
      %v1009 = vunpack.c.l.b16 %v394
      %v1010 = vunpack.c.l.b16 %v395
      %v1011 = vunpack.c.l.b16 %v396
      %v1012 = vunpack.c.l.b16 %v397
      %v1013 = vunpack.c.l.b16 %v398
      %v1014 = vunpack.c.l.b16 %v399
      %v1015 = vunpack.c.l.b16 %v400
      %v1016 = vunpack.c.l.b16 %v401
      %v1017 = vunpack.c.l.b16 %v402
      %v1018 = vunpack.c.l.b16 %v403
      %v1019 = vunpack.c.l.b16 %v404
      %v1020 = vpack.c.b16 %v973, %v972
      %v1021 = vpack.c.b16 %v975, %v974
      %v1022 = vpack.c.b16 %v977, %v976
      %v1023 = vpack.c.b16 %v979, %v978
      %v1024 = vpack.c.b16 %v981, %v980
      %v1025 = vpack.c.b16 %v983, %v982
      %v1026 = vpack.c.b16 %v985, %v984
      %v1027 = vpack.c.b16 %v987, %v986
      %v1028 = vpack.c.b16 %v989, %v988
      %v1029 = vpack.c.b16 %v991, %v990
      %v1030 = vpack.c.b16 %v993, %v992
      %v1031 = vpack.c.b16 %v995, %v994
      %v1032 = vpack.c.b16 %v997, %v996
      %v1033 = vpack.c.b16 %v999, %v998
      %v1034 = vpack.c.b16 %v1001, %v1000
      %v1035 = vpack.c.b16 %v1003, %v1002
      %v1036 = vpack.c.b16 %v1005, %v1004
      %v1037 = vpack.c.b16 %v1007, %v1006
      %v1038 = vpack.c.b16 %v1009, %v1008
      %v1039 = vpack.c.b16 %v1011, %v1010
      %v1040 = vpack.c.b16 %v1013, %v1012
      %v1041 = vpack.c.b16 %v1015, %v1014
      %v1042 = vpack.c.b16 %v1017, %v1016
      %v1043 = vpack.c.b16 %v1019, %v1018
      %1068 = vmatprep.subr.bf16.mxu0 0
      %1069 = vmatpush1.bf16.msra.mxu0 %v1027
      %1070 = vmatprep.subr.bf16.mxu0 0
      %1071 = vmatpush1.bf16.msra.mxu0 %v1026
      %1072 = vmatprep.subr.bf16.mxu0 0
      %1073 = vmatpush1.bf16.msra.mxu0 %v1025
      %1074 = vmatprep.subr.bf16.mxu0 0
      %1075 = vmatpush1.bf16.msra.mxu0 %v1024
      %1076 = vmatprep.subr.bf16.mxu0 0
      %1077 = vmatpush1.bf16.msra.mxu0 %v1023
      %1078 = vmatprep.subr.bf16.mxu0 0
      %1079 = vmatpush1.bf16.msra.mxu0 %v1022
      %1080 = vmatprep.subr.bf16.mxu0 0
      %1081 = vmatpush1.bf16.msra.mxu0 %v1021
      %1082 = vmatprep.subr.bf16.mxu0 0
      %1083 = vmatpush1.bf16.msra.mxu0 %v1020
      %1084 = vmatprep.subr.bf16.mxu0 0
      %1085 = vmatpush2.bf16.msra.mxu0 %v1035
      %1086 = vmatprep.subr.bf16.mxu0 0
      %1087 = vmatpush2.bf16.msra.mxu0 %v1034
      %1088 = vmatprep.subr.bf16.mxu0 0
      %1089 = vmatpush2.bf16.msra.mxu0 %v1033
      %1090 = vmatprep.subr.bf16.mxu0 0
      %1091 = vmatpush2.bf16.msra.mxu0 %v1032
      %1092 = vmatprep.subr.bf16.mxu0 0
      %1093 = vmatpush2.bf16.msra.mxu0 %v1031
      %1094 = vmatprep.subr.bf16.mxu0 0
      %1095 = vmatpush2.bf16.msra.mxu0 %v1030
      %1096 = vmatprep.subr.bf16.mxu0 0
      %1097 = vmatpush2.bf16.msra.mxu0 %v1029
      %1098 = vmatprep.subr.bf16.mxu0 0
      %1099 = vmatpush2.bf16.msra.mxu0 %v1028
      %1100 = vmatprep.mubr.bf16.mxu0 %v733
      %1101 = vmatmul.mubr.bf16.gmra.mxu0 %v732
      %v1102 = vpop.f32.mrf.mxu0
      %v1103 = vadd.f32 %v410, %v1102
      %v1104 = vpop.f32.mrf.mxu0
      %v1105 = vpop.f32.mrf.mxu0
      %v1106 = vadd.f32 %v410, %v1105
      %v1107 = vpop.f32.mrf.mxu0
      %1108 = vmatprep.mubr.bf16.mxu0 %v736
      %1109 = vmatmul.mubr.bf16.gmra.mxu0 %v735
      %v1110 = vpop.f32.mrf.mxu0
      %v1111 = vadd.f32 %v410, %v1110
      %v1112 = vpop.f32.mrf.mxu0
      %v1113 = vpop.f32.mrf.mxu0
      %v1114 = vadd.f32 %v410, %v1113
      %v1115 = vpop.f32.mrf.mxu0
      %1116 = vmatprep.mubr.bf16.mxu0 %v739
      %1117 = vmatmul.mubr.bf16.gmra.mxu0 %v738
      %v1118 = vpop.f32.mrf.mxu0
      %v1119 = vadd.f32 %v410, %v1118
      %v1120 = vpop.f32.mrf.mxu0
      %v1121 = vpop.f32.mrf.mxu0
      %v1122 = vadd.f32 %v410, %v1121
      %v1123 = vpop.f32.mrf.mxu0
      %1124 = vmatprep.mubr.bf16.mxu0 %v742
      %1125 = vmatmul.mubr.bf16.gmra.mxu0 %v741
      %v1126 = vpop.f32.mrf.mxu0
      %v1127 = vadd.f32 %v410, %v1126
      %v1128 = vpop.f32.mrf.mxu0
      %v1129 = vpop.f32.mrf.mxu0
      %v1130 = vadd.f32 %v410, %v1129
      %v1131 = vpop.f32.mrf.mxu0
      %1132 = vmatprep.mubr.bf16.mxu0 %v745
      %1133 = vmatmul.mubr.bf16.gmra.mxu0 %v744
      %v1134 = vpop.f32.mrf.mxu0
      %v1135 = vadd.f32 %v410, %v1134
      %v1136 = vpop.f32.mrf.mxu0
      %v1137 = vpop.f32.mrf.mxu0
      %v1138 = vadd.f32 %v410, %v1137
      %v1139 = vpop.f32.mrf.mxu0
      %1140 = vmatprep.mubr.bf16.mxu0 %v748
      %1141 = vmatmul.mubr.bf16.gmra.mxu0 %v747
      %v1142 = vpop.f32.mrf.mxu0
      %v1143 = vadd.f32 %v410, %v1142
      %v1144 = vpop.f32.mrf.mxu0
      %v1145 = vpop.f32.mrf.mxu0
      %v1146 = vadd.f32 %v410, %v1145
      %v1147 = vpop.f32.mrf.mxu0
      %1148 = vmatprep.mubr.bf16.mxu0 %v751
      %1149 = vmatmul.mubr.bf16.gmra.mxu0 %v750
      %v1150 = vpop.f32.mrf.mxu0
      %v1151 = vadd.f32 %v410, %v1150
      %v1152 = vpop.f32.mrf.mxu0
      %v1153 = vpop.f32.mrf.mxu0
      %v1154 = vadd.f32 %v410, %v1153
      %v1155 = vpop.f32.mrf.mxu0
      %1156 = vmatprep.mubr.bf16.mxu0 %v754
      %1157 = vmatmul.mubr.bf16.gmra.mxu0 %v753
      %v1158 = vpop.f32.mrf.mxu0
      %v1159 = vadd.f32 %v410, %v1158
      %v1160 = vpop.f32.mrf.mxu0
      %v1161 = vpop.f32.mrf.mxu0
      %v1162 = vadd.f32 %v410, %v1161
      %v1163 = vpop.f32.mrf.mxu0
      %1164 = vmatprep.mubr.bf16.mxu0 %v757
      %1165 = vmatmul.mubr.bf16.gmra.mxu0 %v756
      %v1166 = vpop.f32.mrf.mxu0
      %v1167 = vadd.f32 %v410, %v1166
      %v1168 = vpop.f32.mrf.mxu0
      %v1169 = vpop.f32.mrf.mxu0
      %v1170 = vadd.f32 %v410, %v1169
      %v1171 = vpop.f32.mrf.mxu0
      %1172 = vmatprep.mubr.bf16.mxu0 %v760
      %1173 = vmatmul.mubr.bf16.gmra.mxu0 %v759
      %v1174 = vpop.f32.mrf.mxu0
      %v1175 = vadd.f32 %v410, %v1174
      %v1176 = vpop.f32.mrf.mxu0
      %v1177 = vpop.f32.mrf.mxu0
      %v1178 = vadd.f32 %v410, %v1177
      %v1179 = vpop.f32.mrf.mxu0
      %1180 = vmatprep.mubr.bf16.mxu0 %v763
      %1181 = vmatmul.mubr.bf16.gmra.mxu0 %v762
      %v1182 = vpop.f32.mrf.mxu0
      %v1183 = vadd.f32 %v410, %v1182
      %v1184 = vpop.f32.mrf.mxu0
      %v1185 = vpop.f32.mrf.mxu0
      %v1186 = vadd.f32 %v410, %v1185
      %v1187 = vpop.f32.mrf.mxu0
      %1188 = vmatprep.mubr.bf16.mxu0 %v766
      %1189 = vmatmul.mubr.bf16.gmra.mxu0 %v765
      %v1190 = vpop.f32.mrf.mxu0
      %v1191 = vadd.f32 %v410, %v1190
      %v1192 = vpop.f32.mrf.mxu0
      %v1193 = vpop.f32.mrf.mxu0
      %v1194 = vadd.f32 %v410, %v1193
      %v1195 = vpop.f32.mrf.mxu0
      %1196 = vmatprep.mubr.bf16.mxu0 %v769
      %1197 = vmatmul.mubr.bf16.gmra.mxu0 %v768
      %v1198 = vpop.f32.mrf.mxu0
      %v1199 = vadd.f32 %v410, %v1198
      %v1200 = vpop.f32.mrf.mxu0
      %v1201 = vpop.f32.mrf.mxu0
      %v1202 = vadd.f32 %v410, %v1201
      %v1203 = vpop.f32.mrf.mxu0
      %1204 = vmatprep.mubr.bf16.mxu0 %v772
      %1205 = vmatmul.mubr.bf16.gmra.mxu0 %v771
      %v1206 = vpop.f32.mrf.mxu0
      %v1207 = vadd.f32 %v410, %v1206
      %v1208 = vpop.f32.mrf.mxu0
      %v1209 = vpop.f32.mrf.mxu0
      %v1210 = vadd.f32 %v410, %v1209
      %v1211 = vpop.f32.mrf.mxu0
      %1212 = vmatprep.mubr.bf16.mxu0 %v775
      %1213 = vmatmul.mubr.bf16.gmra.mxu0 %v774
      %v1214 = vpop.f32.mrf.mxu0
      %v1215 = vadd.f32 %v410, %v1214
      %v1216 = vpop.f32.mrf.mxu0
      %v1217 = vpop.f32.mrf.mxu0
      %v1218 = vadd.f32 %v410, %v1217
      %v1219 = vpop.f32.mrf.mxu0
      %1220 = vmatprep.mubr.bf16.mxu0 %v778
      %1221 = vmatmul.mubr.bf16.gmra.mxu0 %v777
      %v1222 = vpop.f32.mrf.mxu0
      %v1223 = vadd.f32 %v410, %v1222
      %v1224 = vpop.f32.mrf.mxu0
      %v1225 = vpop.f32.mrf.mxu0
      %v1226 = vadd.f32 %v410, %v1225
      %v1227 = vpop.f32.mrf.mxu0
      %1228 = vmatprep.mubr.bf16.mxu0 %v781
      %1229 = vmatmul.mubr.bf16.gmra.mxu0 %v780
      %v1230 = vpop.f32.mrf.mxu0
      %v1231 = vadd.f32 %v410, %v1230
      %v1232 = vpop.f32.mrf.mxu0
      %v1233 = vpop.f32.mrf.mxu0
      %v1234 = vadd.f32 %v410, %v1233
      %v1235 = vpop.f32.mrf.mxu0
      %1236 = vmatprep.mubr.bf16.mxu0 %v784
      %1237 = vmatmul.mubr.bf16.gmra.mxu0 %v783
      %v1238 = vpop.f32.mrf.mxu0
      %v1239 = vadd.f32 %v410, %v1238
      %v1240 = vpop.f32.mrf.mxu0
      %v1241 = vpop.f32.mrf.mxu0
      %v1242 = vadd.f32 %v410, %v1241
      %v1243 = vpop.f32.mrf.mxu0
      %1244 = vmatprep.mubr.bf16.mxu0 %v787
      %1245 = vmatmul.mubr.bf16.gmra.mxu0 %v786
      %v1246 = vpop.f32.mrf.mxu0
      %v1247 = vadd.f32 %v410, %v1246
      %v1248 = vpop.f32.mrf.mxu0
      %v1249 = vpop.f32.mrf.mxu0
      %v1250 = vadd.f32 %v410, %v1249
      %v1251 = vpop.f32.mrf.mxu0
      %1252 = vmatprep.mubr.bf16.mxu0 %v790
      %1253 = vmatmul.mubr.bf16.gmra.mxu0 %v789
      %v1254 = vpop.f32.mrf.mxu0
      %v1255 = vadd.f32 %v410, %v1254
      %v1256 = vpop.f32.mrf.mxu0
      %v1257 = vpop.f32.mrf.mxu0
      %v1258 = vadd.f32 %v410, %v1257
      %v1259 = vpop.f32.mrf.mxu0
      %1260 = vmatprep.mubr.bf16.mxu0 %v793
      %1261 = vmatmul.mubr.bf16.gmra.mxu0 %v792
      %v1262 = vpop.f32.mrf.mxu0
      %v1263 = vadd.f32 %v410, %v1262
      %v1264 = vpop.f32.mrf.mxu0
      %v1265 = vpop.f32.mrf.mxu0
      %v1266 = vadd.f32 %v410, %v1265
      %v1267 = vpop.f32.mrf.mxu0
      %1268 = vmatprep.mubr.bf16.mxu0 %v796
      %1269 = vmatmul.mubr.bf16.gmra.mxu0 %v795
      %v1270 = vpop.f32.mrf.mxu0
      %v1271 = vadd.f32 %v410, %v1270
      %v1272 = vpop.f32.mrf.mxu0
      %v1273 = vpop.f32.mrf.mxu0
      %v1274 = vadd.f32 %v410, %v1273
      %v1275 = vpop.f32.mrf.mxu0
      %1276 = vmatprep.mubr.bf16.mxu0 %v799
      %1277 = vmatmul.mubr.bf16.gmra.mxu0 %v798
      %v1278 = vpop.f32.mrf.mxu0
      %v1279 = vadd.f32 %v410, %v1278
      %v1280 = vpop.f32.mrf.mxu0
      %v1281 = vpop.f32.mrf.mxu0
      %v1282 = vadd.f32 %v410, %v1281
      %v1283 = vpop.f32.mrf.mxu0
      %1284 = vmatprep.mubr.bf16.mxu0 %v802
      %1285 = vmatmul.mubr.bf16.gmra.mxu0 %v801
      %v1286 = vpop.f32.mrf.mxu0
      %v1287 = vadd.f32 %v410, %v1286
      %v1288 = vpop.f32.mrf.mxu0
      %v1289 = vpop.f32.mrf.mxu0
      %v1290 = vadd.f32 %v410, %v1289
      %v1291 = vpop.f32.mrf.mxu0
      %1292 = vmatprep.mubr.bf16.mxu0 %v805
      %1293 = vmatmul.mubr.bf16.gmra.mxu0 %v804
      %v1294 = vpop.f32.mrf.mxu0
      %v1295 = vadd.f32 %v410, %v1294
      %v1296 = vpop.f32.mrf.mxu0
      %v1297 = vpop.f32.mrf.mxu0
      %v1298 = vadd.f32 %v410, %v1297
      %v1299 = vpop.f32.mrf.mxu0
      %1300 = vmatprep.mubr.bf16.mxu0 %v808
      %1301 = vmatmul.mubr.bf16.gmra.mxu0 %v807
      %v1302 = vpop.f32.mrf.mxu0
      %v1303 = vadd.f32 %v410, %v1302
      %v1304 = vpop.f32.mrf.mxu0
      %v1305 = vpop.f32.mrf.mxu0
      %v1306 = vadd.f32 %v410, %v1305
      %v1307 = vpop.f32.mrf.mxu0
      %1308 = vmatprep.mubr.bf16.mxu0 %v811
      %1309 = vmatmul.mubr.bf16.gmra.mxu0 %v810
      %v1310 = vpop.f32.mrf.mxu0
      %v1311 = vadd.f32 %v410, %v1310
      %v1312 = vpop.f32.mrf.mxu0
      %v1313 = vpop.f32.mrf.mxu0
      %v1314 = vadd.f32 %v410, %v1313
      %v1315 = vpop.f32.mrf.mxu0
      %1316 = vmatprep.mubr.bf16.mxu0 %v814
      %1317 = vmatmul.mubr.bf16.gmra.mxu0 %v813
      %v1318 = vpop.f32.mrf.mxu0
      %v1319 = vadd.f32 %v410, %v1318
      %v1320 = vpop.f32.mrf.mxu0
      %v1321 = vpop.f32.mrf.mxu0
      %v1322 = vadd.f32 %v410, %v1321
      %v1323 = vpop.f32.mrf.mxu0
      %1324 = vmatprep.mubr.bf16.mxu0 %v817
      %1325 = vmatmul.mubr.bf16.gmra.mxu0 %v816
      %v1326 = vpop.f32.mrf.mxu0
      %v1327 = vadd.f32 %v410, %v1326
      %v1328 = vpop.f32.mrf.mxu0
      %v1329 = vpop.f32.mrf.mxu0
      %v1330 = vadd.f32 %v410, %v1329
      %v1331 = vpop.f32.mrf.mxu0
      %1332 = vmatprep.mubr.bf16.mxu0 %v820
      %1333 = vmatmul.mubr.bf16.gmra.mxu0 %v819
      %v1334 = vpop.f32.mrf.mxu0
      %v1335 = vadd.f32 %v410, %v1334
      %v1336 = vpop.f32.mrf.mxu0
      %v1337 = vpop.f32.mrf.mxu0
      %v1338 = vadd.f32 %v410, %v1337
      %v1339 = vpop.f32.mrf.mxu0
      %1340 = vmatprep.mubr.bf16.mxu0 %v823
      %1341 = vmatmul.mubr.bf16.gmra.mxu0 %v822
      %v1342 = vpop.f32.mrf.mxu0
      %v1343 = vadd.f32 %v410, %v1342
      %v1344 = vpop.f32.mrf.mxu0
      %v1345 = vpop.f32.mrf.mxu0
      %v1346 = vadd.f32 %v410, %v1345
      %v1347 = vpop.f32.mrf.mxu0
      %1348 = vmatprep.mubr.bf16.mxu0 %v826
      %1349 = vmatmul.mubr.bf16.gmra.mxu0 %v825
      %v1350 = vpop.f32.mrf.mxu0
      %v1351 = vadd.f32 %v410, %v1350
      %v1352 = vpop.f32.mrf.mxu0
      %v1353 = vpop.f32.mrf.mxu0
      %v1354 = vadd.f32 %v410, %v1353
      %v1355 = vpop.f32.mrf.mxu0
      %1356 = vdwg.mxu0
      %1357 = vmatprep.subr.bf16.mxu0 0
      %1358 = vmatpush1.bf16.msra.mxu0 %v1043
      %1359 = vmatprep.subr.bf16.mxu0 0
      %1360 = vmatpush1.bf16.msra.mxu0 %v1042
      %1361 = vmatprep.subr.bf16.mxu0 0
      %1362 = vmatpush1.bf16.msra.mxu0 %v1041
      %1363 = vmatprep.subr.bf16.mxu0 0
      %1364 = vmatpush1.bf16.msra.mxu0 %v1040
      %1365 = vmatprep.subr.bf16.mxu0 0
      %1366 = vmatpush1.bf16.msra.mxu0 %v1039
      %1367 = vmatprep.subr.bf16.mxu0 0
      %1368 = vmatpush1.bf16.msra.mxu0 %v1038
      %1369 = vmatprep.subr.bf16.mxu0 0
      %1370 = vmatpush1.bf16.msra.mxu0 %v1037
      %1371 = vmatprep.subr.bf16.mxu0 0
      %1372 = vmatpush1.bf16.msra.mxu0 %v1036
      %1373 = vmatprep.subr.bf16.mxu0 0
      %1374 = vmatpush2.bf16.msra.mxu0 0
      %1375 = vmatprep.subr.bf16.mxu0 0
      %1376 = vmatpush2.bf16.msra.mxu0 0
      %1377 = vmatprep.subr.bf16.mxu0 0
      %1378 = vmatpush2.bf16.msra.mxu0 0
      %1379 = vmatprep.subr.bf16.mxu0 0
      %1380 = vmatpush2.bf16.msra.mxu0 0
      %1381 = vmatprep.subr.bf16.mxu0 0
      %1382 = vmatpush2.bf16.msra.mxu0 0
      %1383 = vmatprep.subr.bf16.mxu0 0
      %1384 = vmatpush2.bf16.msra.mxu0 0
      %1385 = vmatprep.subr.bf16.mxu0 0
      %1386 = vmatpush2.bf16.msra.mxu0 0
      %1387 = vmatprep.subr.bf16.mxu0 0
      %1388 = vmatpush2.bf16.msra.mxu0 0
      %1389 = vmatprep.mubr.bf16.mxu0 0
      %1390 = vmatmul.mubr.bf16.gmra.mxu0 %v734
      %v1391 = vpop.f32.mrf.mxu0
      %v1392 = vadd.f32 %v1103, %v1391
      %v1393 = vpop.f32.mrf.mxu0
      %v1394 = vpop.f32.mrf.mxu0
      %v1395 = vadd.f32 %v1106, %v1394
      %v1396 = vpop.f32.mrf.mxu0
      %1397 = vmatprep.mubr.bf16.mxu0 0
      %1398 = vmatmul.mubr.bf16.gmra.mxu0 %v737
      %v1399 = vpop.f32.mrf.mxu0
      %v1400 = vadd.f32 %v1111, %v1399
      %v1401 = vpop.f32.mrf.mxu0
      %v1402 = vpop.f32.mrf.mxu0
      %v1403 = vadd.f32 %v1114, %v1402
      %v1404 = vpop.f32.mrf.mxu0
      %1405 = vmatprep.mubr.bf16.mxu0 0
      %1406 = vmatmul.mubr.bf16.gmra.mxu0 %v740
      %v1407 = vpop.f32.mrf.mxu0
      %v1408 = vadd.f32 %v1119, %v1407
      %v1409 = vpop.f32.mrf.mxu0
      %v1410 = vpop.f32.mrf.mxu0
      %v1411 = vadd.f32 %v1122, %v1410
      %v1412 = vpop.f32.mrf.mxu0
      %1413 = vmatprep.mubr.bf16.mxu0 0
      %1414 = vmatmul.mubr.bf16.gmra.mxu0 %v743
      %v1415 = vpop.f32.mrf.mxu0
      %v1416 = vadd.f32 %v1127, %v1415
      %v1417 = vpop.f32.mrf.mxu0
      %v1418 = vpop.f32.mrf.mxu0
      %v1419 = vadd.f32 %v1130, %v1418
      %v1420 = vpop.f32.mrf.mxu0
      %1421 = vmatprep.mubr.bf16.mxu0 0
      %1422 = vmatmul.mubr.bf16.gmra.mxu0 %v746
      %v1423 = vpop.f32.mrf.mxu0
      %v1424 = vadd.f32 %v1135, %v1423
      %v1425 = vpop.f32.mrf.mxu0
      %v1426 = vpop.f32.mrf.mxu0
      %v1427 = vadd.f32 %v1138, %v1426
      %v1428 = vpop.f32.mrf.mxu0
      %1429 = vmatprep.mubr.bf16.mxu0 0
      %1430 = vmatmul.mubr.bf16.gmra.mxu0 %v749
      %v1431 = vpop.f32.mrf.mxu0
      %v1432 = vadd.f32 %v1143, %v1431
      %v1433 = vpop.f32.mrf.mxu0
      %v1434 = vpop.f32.mrf.mxu0
      %v1435 = vadd.f32 %v1146, %v1434
      %v1436 = vpop.f32.mrf.mxu0
      %1437 = vmatprep.mubr.bf16.mxu0 0
      %1438 = vmatmul.mubr.bf16.gmra.mxu0 %v752
      %v1439 = vpop.f32.mrf.mxu0
      %v1440 = vadd.f32 %v1151, %v1439
      %v1441 = vpop.f32.mrf.mxu0
      %v1442 = vpop.f32.mrf.mxu0
      %v1443 = vadd.f32 %v1154, %v1442
      %v1444 = vpop.f32.mrf.mxu0
      %1445 = vmatprep.mubr.bf16.mxu0 0
      %1446 = vmatmul.mubr.bf16.gmra.mxu0 %v755
      %v1447 = vpop.f32.mrf.mxu0
      %v1448 = vadd.f32 %v1159, %v1447
      %v1449 = vpop.f32.mrf.mxu0
      %v1450 = vpop.f32.mrf.mxu0
      %v1451 = vadd.f32 %v1162, %v1450
      %v1452 = vpop.f32.mrf.mxu0
      %1453 = vmatprep.mubr.bf16.mxu0 0
      %1454 = vmatmul.mubr.bf16.gmra.mxu0 %v758
      %v1455 = vpop.f32.mrf.mxu0
      %v1456 = vadd.f32 %v1167, %v1455
      %v1457 = vpop.f32.mrf.mxu0
      %v1458 = vpop.f32.mrf.mxu0
      %v1459 = vadd.f32 %v1170, %v1458
      %v1460 = vpop.f32.mrf.mxu0
      %1461 = vmatprep.mubr.bf16.mxu0 0
      %1462 = vmatmul.mubr.bf16.gmra.mxu0 %v761
      %v1463 = vpop.f32.mrf.mxu0
      %v1464 = vadd.f32 %v1175, %v1463
      %v1465 = vpop.f32.mrf.mxu0
      %v1466 = vpop.f32.mrf.mxu0
      %v1467 = vadd.f32 %v1178, %v1466
      %v1468 = vpop.f32.mrf.mxu0
      %1469 = vmatprep.mubr.bf16.mxu0 0
      %1470 = vmatmul.mubr.bf16.gmra.mxu0 %v764
      %v1471 = vpop.f32.mrf.mxu0
      %v1472 = vadd.f32 %v1183, %v1471
      %v1473 = vpop.f32.mrf.mxu0
      %v1474 = vpop.f32.mrf.mxu0
      %v1475 = vadd.f32 %v1186, %v1474
      %v1476 = vpop.f32.mrf.mxu0
      %1477 = vmatprep.mubr.bf16.mxu0 0
      %1478 = vmatmul.mubr.bf16.gmra.mxu0 %v767
      %v1479 = vpop.f32.mrf.mxu0
      %v1480 = vadd.f32 %v1191, %v1479
      %v1481 = vpop.f32.mrf.mxu0
      %v1482 = vpop.f32.mrf.mxu0
      %v1483 = vadd.f32 %v1194, %v1482
      %v1484 = vpop.f32.mrf.mxu0
      %1485 = vmatprep.mubr.bf16.mxu0 0
      %1486 = vmatmul.mubr.bf16.gmra.mxu0 %v770
      %v1487 = vpop.f32.mrf.mxu0
      %v1488 = vadd.f32 %v1199, %v1487
      %v1489 = vpop.f32.mrf.mxu0
      %v1490 = vpop.f32.mrf.mxu0
      %v1491 = vadd.f32 %v1202, %v1490
      %v1492 = vpop.f32.mrf.mxu0
      %1493 = vmatprep.mubr.bf16.mxu0 0
      %1494 = vmatmul.mubr.bf16.gmra.mxu0 %v773
      %v1495 = vpop.f32.mrf.mxu0
      %v1496 = vadd.f32 %v1207, %v1495
      %v1497 = vpop.f32.mrf.mxu0
      %v1498 = vpop.f32.mrf.mxu0
      %v1499 = vadd.f32 %v1210, %v1498
      %v1500 = vpop.f32.mrf.mxu0
      %1501 = vmatprep.mubr.bf16.mxu0 0
      %1502 = vmatmul.mubr.bf16.gmra.mxu0 %v776
      %v1503 = vpop.f32.mrf.mxu0
      %v1504 = vadd.f32 %v1215, %v1503
      %v1505 = vpop.f32.mrf.mxu0
      %v1506 = vpop.f32.mrf.mxu0
      %v1507 = vadd.f32 %v1218, %v1506
      %v1508 = vpop.f32.mrf.mxu0
      %1509 = vmatprep.mubr.bf16.mxu0 0
      %1510 = vmatmul.mubr.bf16.gmra.mxu0 %v779
      %v1511 = vpop.f32.mrf.mxu0
      %v1512 = vadd.f32 %v1223, %v1511
      %v1513 = vpop.f32.mrf.mxu0
      %v1514 = vpop.f32.mrf.mxu0
      %v1515 = vadd.f32 %v1226, %v1514
      %v1516 = vpop.f32.mrf.mxu0
      %1517 = vmatprep.mubr.bf16.mxu0 0
      %1518 = vmatmul.mubr.bf16.gmra.mxu0 %v782
      %v1519 = vpop.f32.mrf.mxu0
      %v1520 = vadd.f32 %v1231, %v1519
      %v1521 = vpop.f32.mrf.mxu0
      %v1522 = vpop.f32.mrf.mxu0
      %v1523 = vadd.f32 %v1234, %v1522
      %v1524 = vpop.f32.mrf.mxu0
      %1525 = vmatprep.mubr.bf16.mxu0 0
      %1526 = vmatmul.mubr.bf16.gmra.mxu0 %v785
      %v1527 = vpop.f32.mrf.mxu0
      %v1528 = vadd.f32 %v1239, %v1527
      %v1529 = vpop.f32.mrf.mxu0
      %v1530 = vpop.f32.mrf.mxu0
      %v1531 = vadd.f32 %v1242, %v1530
      %v1532 = vpop.f32.mrf.mxu0
      %1533 = vmatprep.mubr.bf16.mxu0 0
      %1534 = vmatmul.mubr.bf16.gmra.mxu0 %v788
      %v1535 = vpop.f32.mrf.mxu0
      %v1536 = vadd.f32 %v1247, %v1535
      %v1537 = vpop.f32.mrf.mxu0
      %v1538 = vpop.f32.mrf.mxu0
      %v1539 = vadd.f32 %v1250, %v1538
      %v1540 = vpop.f32.mrf.mxu0
      %1541 = vmatprep.mubr.bf16.mxu0 0
      %1542 = vmatmul.mubr.bf16.gmra.mxu0 %v791
      %v1543 = vpop.f32.mrf.mxu0
      %v1544 = vadd.f32 %v1255, %v1543
      %v1545 = vpop.f32.mrf.mxu0
      %v1546 = vpop.f32.mrf.mxu0
      %v1547 = vadd.f32 %v1258, %v1546
      %v1548 = vpop.f32.mrf.mxu0
      %1549 = vmatprep.mubr.bf16.mxu0 0
      %1550 = vmatmul.mubr.bf16.gmra.mxu0 %v794
      %v1551 = vpop.f32.mrf.mxu0
      %v1552 = vadd.f32 %v1263, %v1551
      %v1553 = vpop.f32.mrf.mxu0
      %v1554 = vpop.f32.mrf.mxu0
      %v1555 = vadd.f32 %v1266, %v1554
      %v1556 = vpop.f32.mrf.mxu0
      %1557 = vmatprep.mubr.bf16.mxu0 0
      %1558 = vmatmul.mubr.bf16.gmra.mxu0 %v797
      %v1559 = vpop.f32.mrf.mxu0
      %v1560 = vadd.f32 %v1271, %v1559
      %v1561 = vpop.f32.mrf.mxu0
      %v1562 = vpop.f32.mrf.mxu0
      %v1563 = vadd.f32 %v1274, %v1562
      %v1564 = vpop.f32.mrf.mxu0
      %1565 = vmatprep.mubr.bf16.mxu0 0
      %1566 = vmatmul.mubr.bf16.gmra.mxu0 %v800
      %v1567 = vpop.f32.mrf.mxu0
      %v1568 = vadd.f32 %v1279, %v1567
      %v1569 = vpop.f32.mrf.mxu0
      %v1570 = vpop.f32.mrf.mxu0
      %v1571 = vadd.f32 %v1282, %v1570
      %v1572 = vpop.f32.mrf.mxu0
      %1573 = vmatprep.mubr.bf16.mxu0 0
      %1574 = vmatmul.mubr.bf16.gmra.mxu0 %v803
      %v1575 = vpop.f32.mrf.mxu0
      %v1576 = vadd.f32 %v1287, %v1575
      %v1577 = vpop.f32.mrf.mxu0
      %v1578 = vpop.f32.mrf.mxu0
      %v1579 = vadd.f32 %v1290, %v1578
      %v1580 = vpop.f32.mrf.mxu0
      %1581 = vmatprep.mubr.bf16.mxu0 0
      %1582 = vmatmul.mubr.bf16.gmra.mxu0 %v806
      %v1583 = vpop.f32.mrf.mxu0
      %v1584 = vadd.f32 %v1295, %v1583
      %v1585 = vpop.f32.mrf.mxu0
      %v1586 = vpop.f32.mrf.mxu0
      %v1587 = vadd.f32 %v1298, %v1586
      %v1588 = vpop.f32.mrf.mxu0
      %1589 = vmatprep.mubr.bf16.mxu0 0
      %1590 = vmatmul.mubr.bf16.gmra.mxu0 %v809
      %v1591 = vpop.f32.mrf.mxu0
      %v1592 = vadd.f32 %v1303, %v1591
      %v1593 = vpop.f32.mrf.mxu0
      %v1594 = vpop.f32.mrf.mxu0
      %v1595 = vadd.f32 %v1306, %v1594
      %v1596 = vpop.f32.mrf.mxu0
      %1597 = vmatprep.mubr.bf16.mxu0 0
      %1598 = vmatmul.mubr.bf16.gmra.mxu0 %v812
      %v1599 = vpop.f32.mrf.mxu0
      %v1600 = vadd.f32 %v1311, %v1599
      %v1601 = vpop.f32.mrf.mxu0
      %v1602 = vpop.f32.mrf.mxu0
      %v1603 = vadd.f32 %v1314, %v1602
      %v1604 = vpop.f32.mrf.mxu0
      %1605 = vmatprep.mubr.bf16.mxu0 0
      %1606 = vmatmul.mubr.bf16.gmra.mxu0 %v815
      %v1607 = vpop.f32.mrf.mxu0
      %v1608 = vadd.f32 %v1319, %v1607
      %v1609 = vpop.f32.mrf.mxu0
      %v1610 = vpop.f32.mrf.mxu0
      %v1611 = vadd.f32 %v1322, %v1610
      %v1612 = vpop.f32.mrf.mxu0
      %1613 = vmatprep.mubr.bf16.mxu0 0
      %1614 = vmatmul.mubr.bf16.gmra.mxu0 %v818
      %v1615 = vpop.f32.mrf.mxu0
      %v1616 = vadd.f32 %v1327, %v1615
      %v1617 = vpop.f32.mrf.mxu0
      %v1618 = vpop.f32.mrf.mxu0
      %v1619 = vadd.f32 %v1330, %v1618
      %v1620 = vpop.f32.mrf.mxu0
      %1621 = vmatprep.mubr.bf16.mxu0 0
      %1622 = vmatmul.mubr.bf16.gmra.mxu0 %v821
      %v1623 = vpop.f32.mrf.mxu0
      %v1624 = vadd.f32 %v1335, %v1623
      %v1625 = vpop.f32.mrf.mxu0
      %v1626 = vpop.f32.mrf.mxu0
      %v1627 = vadd.f32 %v1338, %v1626
      %v1628 = vpop.f32.mrf.mxu0
      %1629 = vmatprep.mubr.bf16.mxu0 0
      %1630 = vmatmul.mubr.bf16.gmra.mxu0 %v824
      %v1631 = vpop.f32.mrf.mxu0
      %v1632 = vadd.f32 %v1343, %v1631
      %v1633 = vpop.f32.mrf.mxu0
      %v1634 = vpop.f32.mrf.mxu0
      %v1635 = vadd.f32 %v1346, %v1634
      %v1636 = vpop.f32.mrf.mxu0
      %1637 = vmatprep.mubr.bf16.mxu0 0
      %1638 = vmatmul.mubr.bf16.gmra.mxu0 %v827
      %v1639 = vpop.f32.mrf.mxu0
      %v1640 = vadd.f32 %v1351, %v1639
      %v1641 = vpop.f32.mrf.mxu0
      %v1642 = vpop.f32.mrf.mxu0
      %v1643 = vadd.f32 %v1354, %v1642
      %v1644 = vpop.f32.mrf.mxu0
      %1645 = vdwg.mxu0
      %v1646 = vmax.f32 %v1392, 0.0
      %v1647 = vmax.f32 %v1395, 0.0
      %v1648 = vmax.f32 %v1400, 0.0
      %v1649 = vmax.f32 %v1403, 0.0
      %v1650 = vmax.f32 %v1408, 0.0
      %v1651 = vmax.f32 %v1411, 0.0
      %v1652 = vmax.f32 %v1416, 0.0
      %v1653 = vmax.f32 %v1419, 0.0
      %v1654 = vmax.f32 %v1424, 0.0
      %v1655 = vmax.f32 %v1427, 0.0
      %v1656 = vmax.f32 %v1432, 0.0
      %v1657 = vmax.f32 %v1435, 0.0
      %v1658 = vmax.f32 %v1440, 0.0
      %v1659 = vmax.f32 %v1443, 0.0
      %v1660 = vmax.f32 %v1448, 0.0
      %v1661 = vmax.f32 %v1451, 0.0
      %v1662 = vmax.f32 %v1456, 0.0
      %v1663 = vmax.f32 %v1459, 0.0
      %v1664 = vmax.f32 %v1464, 0.0
      %v1665 = vmax.f32 %v1467, 0.0
      %v1666 = vmax.f32 %v1472, 0.0
      %v1667 = vmax.f32 %v1475, 0.0
      %v1668 = vmax.f32 %v1480, 0.0
      %v1669 = vmax.f32 %v1483, 0.0
      %v1670 = vmax.f32 %v1488, 0.0
      %v1671 = vmax.f32 %v1491, 0.0
      %v1672 = vmax.f32 %v1496, 0.0
      %v1673 = vmax.f32 %v1499, 0.0
      %v1674 = vmax.f32 %v1504, 0.0
      %v1675 = vmax.f32 %v1507, 0.0
      %v1676 = vmax.f32 %v1512, 0.0
      %v1677 = vmax.f32 %v1515, 0.0
      %v1678 = vmax.f32 %v1520, 0.0
      %v1679 = vmax.f32 %v1523, 0.0
      %v1680 = vmax.f32 %v1528, 0.0
      %v1681 = vmax.f32 %v1531, 0.0
      %v1682 = vmax.f32 %v1536, 0.0
      %v1683 = vmax.f32 %v1539, 0.0
      %v1684 = vmax.f32 %v1544, 0.0
      %v1685 = vmax.f32 %v1547, 0.0
      %v1686 = vmax.f32 %v1552, 0.0
      %v1687 = vmax.f32 %v1555, 0.0
      %v1688 = vmax.f32 %v1560, 0.0
      %v1689 = vmax.f32 %v1563, 0.0
      %v1690 = vmax.f32 %v1568, 0.0
      %v1691 = vmax.f32 %v1571, 0.0
      %v1692 = vmax.f32 %v1576, 0.0
      %v1693 = vmax.f32 %v1579, 0.0
      %v1694 = vmax.f32 %v1584, 0.0
      %v1695 = vmax.f32 %v1587, 0.0
      %v1696 = vmax.f32 %v1592, 0.0
      %v1697 = vmax.f32 %v1595, 0.0
      %v1698 = vmax.f32 %v1600, 0.0
      %v1699 = vmax.f32 %v1603, 0.0
      %v1700 = vmax.f32 %v1608, 0.0
      %v1701 = vmax.f32 %v1611, 0.0
      %v1702 = vmax.f32 %v1616, 0.0
      %v1703 = vmax.f32 %v1619, 0.0
      %v1704 = vmax.f32 %v1624, 0.0
      %v1705 = vmax.f32 %v1627, 0.0
      %v1706 = vmax.f32 %v1632, 0.0
      %v1707 = vmax.f32 %v1635, 0.0
      %v1708 = vmax.f32 %v1640, 0.0
      %v1709 = vmax.f32 %v1643, 0.0
      %v1710 = vpack.c.bf16 %v1647, %v1646
      %v1711 = vpack.c.bf16 %v1649, %v1648
      %v1712 = vpack.c.bf16 %v1651, %v1650
      %v1713 = vpack.c.bf16 %v1653, %v1652
      %v1714 = vpack.c.bf16 %v1655, %v1654
      %v1715 = vpack.c.bf16 %v1657, %v1656
      %v1716 = vpack.c.bf16 %v1659, %v1658
      %v1717 = vpack.c.bf16 %v1661, %v1660
      %v1718 = vpack.c.bf16 %v1663, %v1662
      %v1719 = vpack.c.bf16 %v1665, %v1664
      %v1720 = vpack.c.bf16 %v1667, %v1666
      %v1721 = vpack.c.bf16 %v1669, %v1668
      %v1722 = vpack.c.bf16 %v1671, %v1670
      %v1723 = vpack.c.bf16 %v1673, %v1672
      %v1724 = vpack.c.bf16 %v1675, %v1674
      %v1725 = vpack.c.bf16 %v1677, %v1676
      %v1726 = vpack.c.bf16 %v1679, %v1678
      %v1727 = vpack.c.bf16 %v1681, %v1680
      %v1728 = vpack.c.bf16 %v1683, %v1682
      %v1729 = vpack.c.bf16 %v1685, %v1684
      %v1730 = vpack.c.bf16 %v1687, %v1686
      %v1731 = vpack.c.bf16 %v1689, %v1688
      %v1732 = vpack.c.bf16 %v1691, %v1690
      %v1733 = vpack.c.bf16 %v1693, %v1692
      %v1734 = vpack.c.bf16 %v1695, %v1694
      %v1735 = vpack.c.bf16 %v1697, %v1696
      %v1736 = vpack.c.bf16 %v1699, %v1698
      %v1737 = vpack.c.bf16 %v1701, %v1700
      %v1738 = vpack.c.bf16 %v1703, %v1702
      %v1739 = vpack.c.bf16 %v1705, %v1704
      %v1740 = vpack.c.bf16 %v1707, %v1706
      %v1741 = vpack.c.bf16 %v1709, %v1708
      %v1774 = vunpack.c.l.b16 %v1710
      %v1775 = vunpack.c.h.b16 %v1710
      %v1776 = vunpack.c.l.b16 %v1711
      %v1777 = vunpack.c.h.b16 %v1711
      %v1778 = vunpack.c.l.b16 %v1712
      %v1779 = vunpack.c.h.b16 %v1712
      %v1780 = vunpack.c.l.b16 %v1713
      %v1781 = vunpack.c.h.b16 %v1713
      %v1782 = vunpack.c.l.b16 %v1714
      %v1783 = vunpack.c.h.b16 %v1714
      %v1784 = vunpack.c.l.b16 %v1715
      %v1785 = vunpack.c.h.b16 %v1715
      %v1786 = vunpack.c.l.b16 %v1716
      %v1787 = vunpack.c.h.b16 %v1716
      %v1788 = vunpack.c.l.b16 %v1717
      %v1789 = vunpack.c.h.b16 %v1717
      %v1790 = vunpack.c.l.b16 %v1718
      %v1791 = vunpack.c.h.b16 %v1718
      %v1792 = vunpack.c.l.b16 %v1719
      %v1793 = vunpack.c.h.b16 %v1719
      %v1794 = vunpack.c.l.b16 %v1720
      %v1795 = vunpack.c.h.b16 %v1720
      %v1796 = vunpack.c.l.b16 %v1721
      %v1797 = vunpack.c.h.b16 %v1721
      %v1798 = vunpack.c.l.b16 %v1722
      %v1799 = vunpack.c.h.b16 %v1722
      %v1800 = vunpack.c.l.b16 %v1723
      %v1801 = vunpack.c.h.b16 %v1723
      %v1802 = vunpack.c.l.b16 %v1724
      %v1803 = vunpack.c.h.b16 %v1724
      %v1804 = vunpack.c.l.b16 %v1725
      %v1805 = vunpack.c.h.b16 %v1725
      %v1806 = vunpack.c.l.b16 %v1726
      %v1807 = vunpack.c.h.b16 %v1726
      %v1808 = vunpack.c.l.b16 %v1727
      %v1809 = vunpack.c.h.b16 %v1727
      %v1810 = vunpack.c.l.b16 %v1728
      %v1811 = vunpack.c.h.b16 %v1728
      %v1812 = vunpack.c.l.b16 %v1729
      %v1813 = vunpack.c.h.b16 %v1729
      %v1814 = vunpack.c.l.b16 %v1730
      %v1815 = vunpack.c.h.b16 %v1730
      %v1816 = vunpack.c.l.b16 %v1731
      %v1817 = vunpack.c.h.b16 %v1731
      %v1818 = vunpack.c.l.b16 %v1732
      %v1819 = vunpack.c.h.b16 %v1732
      %v1820 = vunpack.c.l.b16 %v1733
      %v1821 = vunpack.c.h.b16 %v1733
      %v1822 = vunpack.c.l.b16 %v1734
      %v1823 = vunpack.c.h.b16 %v1734
      %v1824 = vunpack.c.l.b16 %v1735
      %v1825 = vunpack.c.h.b16 %v1735
      %v1826 = vunpack.c.l.b16 %v1736
      %v1827 = vunpack.c.h.b16 %v1736
      %v1828 = vunpack.c.l.b16 %v1737
      %v1829 = vunpack.c.h.b16 %v1737
      %v1830 = vunpack.c.l.b16 %v1738
      %v1831 = vunpack.c.h.b16 %v1738
      %v1832 = vunpack.c.l.b16 %v1739
      %v1833 = vunpack.c.h.b16 %v1739
      %v1834 = vunpack.c.l.b16 %v1740
      %v1835 = vunpack.c.h.b16 %v1740
      %v1836 = vunpack.c.l.b16 %v1741
      %v1837 = vunpack.c.h.b16 %v1741
      %v1838 = vpack.c.b16 %v1774, %v1774
      %v1839 = vpack.c.b16 %v1775, %v1775
      %v1840 = vpack.c.b16 %v1776, %v1776
      %v1841 = vpack.c.b16 %v1777, %v1777
      %v1842 = vpack.c.b16 %v1778, %v1778
      %v1843 = vpack.c.b16 %v1779, %v1779
      %v1844 = vpack.c.b16 %v1780, %v1780
      %v1845 = vpack.c.b16 %v1781, %v1781
      %v1846 = vpack.c.b16 %v1782, %v1782
      %v1847 = vpack.c.b16 %v1783, %v1783
      %v1848 = vpack.c.b16 %v1784, %v1784
      %v1849 = vpack.c.b16 %v1785, %v1785
      %v1850 = vpack.c.b16 %v1786, %v1786
      %v1851 = vpack.c.b16 %v1787, %v1787
      %v1852 = vpack.c.b16 %v1788, %v1788
      %v1853 = vpack.c.b16 %v1789, %v1789
      %v1854 = vpack.c.b16 %v1790, %v1790
      %v1855 = vpack.c.b16 %v1791, %v1791
      %v1856 = vpack.c.b16 %v1792, %v1792
      %v1857 = vpack.c.b16 %v1793, %v1793
      %v1858 = vpack.c.b16 %v1794, %v1794
      %v1859 = vpack.c.b16 %v1795, %v1795
      %v1860 = vpack.c.b16 %v1796, %v1796
      %v1861 = vpack.c.b16 %v1797, %v1797
      %v1862 = vpack.c.b16 %v1798, %v1798
      %v1863 = vpack.c.b16 %v1799, %v1799
      %v1864 = vpack.c.b16 %v1800, %v1800
      %v1865 = vpack.c.b16 %v1801, %v1801
      %v1866 = vpack.c.b16 %v1802, %v1802
      %v1867 = vpack.c.b16 %v1803, %v1803
      %v1868 = vpack.c.b16 %v1804, %v1804
      %v1869 = vpack.c.b16 %v1805, %v1805
      %v1870 = vpack.c.b16 %v1806, %v1806
      %v1871 = vpack.c.b16 %v1807, %v1807
      %v1872 = vpack.c.b16 %v1808, %v1808
      %v1873 = vpack.c.b16 %v1809, %v1809
      %v1874 = vpack.c.b16 %v1810, %v1810
      %v1875 = vpack.c.b16 %v1811, %v1811
      %v1876 = vpack.c.b16 %v1812, %v1812
      %v1877 = vpack.c.b16 %v1813, %v1813
      %v1878 = vpack.c.b16 %v1814, %v1814
      %v1879 = vpack.c.b16 %v1815, %v1815
      %v1880 = vpack.c.b16 %v1816, %v1816
      %v1881 = vpack.c.b16 %v1817, %v1817
      %v1882 = vpack.c.b16 %v1818, %v1818
      %v1883 = vpack.c.b16 %v1819, %v1819
      %v1884 = vpack.c.b16 %v1820, %v1820
      %v1885 = vpack.c.b16 %v1821, %v1821
      %v1886 = vpack.c.b16 %v1822, %v1822
      %v1887 = vpack.c.b16 %v1823, %v1823
      %v1888 = vpack.c.b16 %v1824, %v1824
      %v1889 = vpack.c.b16 %v1825, %v1825
      %v1890 = vpack.c.b16 %v1826, %v1826
      %v1891 = vpack.c.b16 %v1827, %v1827
      %v1892 = vpack.c.b16 %v1828, %v1828
      %v1893 = vpack.c.b16 %v1829, %v1829
      %v1894 = vpack.c.b16 %v1830, %v1830
      %v1895 = vpack.c.b16 %v1831, %v1831
      %v1896 = vpack.c.b16 %v1832, %v1832
      %v1897 = vpack.c.b16 %v1833, %v1833
      %v1898 = vpack.c.b16 %v1834, %v1834
      %v1899 = vpack.c.b16 %v1835, %v1835
      %v1900 = vpack.c.b16 %v1836, %v1836
      %v1901 = vpack.c.b16 %v1837, %v1837
      %1966 = vst [vmem:[%s226] sm:$0xf] %v1838
      %1967 = vst [vmem:[%s226 + $0x4] sm:$0xf] %v1839
      %1968 = vst [vmem:[%s226 + $0x8] sm:$0xf] %v1840
      %1969 = vst [vmem:[%s226 + $0xc] sm:$0xf] %v1841
      %1970 = vst [vmem:[%s226 + $0x10] sm:$0xf] %v1842
      %1971 = vst [vmem:[%s226 + $0x14] sm:$0xf] %v1843
      %1972 = vst [vmem:[%s226 + $0x18] sm:$0xf] %v1844
      %1973 = vst [vmem:[%s226 + $0x1c] sm:$0xf] %v1845
      %1974 = vst [vmem:[%s226 + $0x20] sm:$0xf] %v1846
      %1975 = vst [vmem:[%s226 + $0x24] sm:$0xf] %v1847
      %1976 = vst [vmem:[%s226 + $0x28] sm:$0xf] %v1848
      %1977 = vst [vmem:[%s226 + $0x2c] sm:$0xf] %v1849
      %1978 = vst [vmem:[%s226 + $0x30] sm:$0xf] %v1850
      %1979 = vst [vmem:[%s226 + $0x34] sm:$0xf] %v1851
      %1980 = vst [vmem:[%s226 + $0x38] sm:$0xf] %v1852
      %1981 = vst [vmem:[%s226 + $0x3c] sm:$0xf] %v1853
      %1982 = vst [vmem:[%s226 + $0x40] sm:$0xf] %v1854
      %1983 = vst [vmem:[%s226 + $0x44] sm:$0xf] %v1855
      %1984 = vst [vmem:[%s226 + $0x48] sm:$0xf] %v1856
      %1985 = vst [vmem:[%s226 + $0x4c] sm:$0xf] %v1857
      %1986 = vst [vmem:[%s226 + $0x50] sm:$0xf] %v1858
      %1987 = vst [vmem:[%s226 + $0x54] sm:$0xf] %v1859
      %1988 = vst [vmem:[%s226 + $0x58] sm:$0xf] %v1860
      %1989 = vst [vmem:[%s226 + $0x5c] sm:$0xf] %v1861
      %1990 = vst [vmem:[%s226 + $0x60] sm:$0xf] %v1862
      %1991 = vst [vmem:[%s226 + $0x64] sm:$0xf] %v1863
      %1992 = vst [vmem:[%s226 + $0x68] sm:$0xf] %v1864
      %1993 = vst [vmem:[%s226 + $0x6c] sm:$0xf] %v1865
      %1994 = vst [vmem:[%s226 + $0x70] sm:$0xf] %v1866
      %1995 = vst [vmem:[%s226 + $0x74] sm:$0xf] %v1867
      %1996 = vst [vmem:[%s226 + $0x78] sm:$0xf] %v1868
      %1997 = vst [vmem:[%s226 + $0x7c] sm:$0xf] %v1869
      %1998 = vst [vmem:[%s226 + $0x80] sm:$0xf] %v1870
      %1999 = vst [vmem:[%s226 + $0x84] sm:$0xf] %v1871
      %2000 = vst [vmem:[%s226 + $0x88] sm:$0xf] %v1872
      %2001 = vst [vmem:[%s226 + $0x8c] sm:$0xf] %v1873
      %2002 = vst [vmem:[%s226 + $0x90] sm:$0xf] %v1874
      %2003 = vst [vmem:[%s226 + $0x94] sm:$0xf] %v1875
      %2004 = vst [vmem:[%s226 + $0x98] sm:$0xf] %v1876
      %2005 = vst [vmem:[%s226 + $0x9c] sm:$0xf] %v1877
      %2006 = vst [vmem:[%s226 + $0xa0] sm:$0xf] %v1878
      %2007 = vst [vmem:[%s226 + $0xa4] sm:$0xf] %v1879
      %2008 = vst [vmem:[%s226 + $0xa8] sm:$0xf] %v1880
      %2009 = vst [vmem:[%s226 + $0xac] sm:$0xf] %v1881
      %2010 = vst [vmem:[%s226 + $0xb0] sm:$0xf] %v1882
      %2011 = vst [vmem:[%s226 + $0xb4] sm:$0xf] %v1883
      %2012 = vst [vmem:[%s226 + $0xb8] sm:$0xf] %v1884
      %2013 = vst [vmem:[%s226 + $0xbc] sm:$0xf] %v1885
      %2014 = vst [vmem:[%s226 + $0xc0] sm:$0xf] %v1886
      %2015 = vst [vmem:[%s226 + $0xc4] sm:$0xf] %v1887
      %2016 = vst [vmem:[%s226 + $0xc8] sm:$0xf] %v1888
      %2017 = vst [vmem:[%s226 + $0xcc] sm:$0xf] %v1889
      %2018 = vst [vmem:[%s226 + $0xd0] sm:$0xf] %v1890
      %2019 = vst [vmem:[%s226 + $0xd4] sm:$0xf] %v1891
      %2020 = vst [vmem:[%s226 + $0xd8] sm:$0xf] %v1892
      %2021 = vst [vmem:[%s226 + $0xdc] sm:$0xf] %v1893
      %2022 = vst [vmem:[%s226 + $0xe0] sm:$0xf] %v1894
      %2023 = vst [vmem:[%s226 + $0xe4] sm:$0xf] %v1895
      %2024 = vst [vmem:[%s226 + $0xe8] sm:$0xf] %v1896
      %2025 = vst [vmem:[%s226 + $0xec] sm:$0xf] %v1897
      %2026 = vst [vmem:[%s226 + $0xf0] sm:$0xf] %v1898
      %2027 = vst [vmem:[%s226 + $0xf4] sm:$0xf] %v1899
      %2028 = vst [vmem:[%s226 + $0xf8] sm:$0xf] %v1900
      %2029 = vst [vmem:[%s226 + $0xfc] sm:$0xf] %v1901
      %s2030 = smul.u32 64, %s18
      %p2031 = scmp.lt.s32.totalorder %s2030, 127
      %s2032 = scalar_select %p2031, %s2030, 127
      %p2033 = scmp.lt.s32.totalorder %s19, 0
      %s2034 = scalar_select %p2033, %s19, 0
      %s2035 = sadd.s32 %s2034, %s2032
      %s2036 = smul.addr %s2035, 4
      %s2037 = scalar_lea.vmem %s3, %s2036
      // Predicated region
      $region33: #{hybridsn_forward.8} parent=31 // pred_check
        %p2038 = pneg %p124
      $region34: #{hybridsn_forward.8} parent=31 // pred_check_branch
        %2040 = sbr.rel (%p2038) target = $region36
      $region35: #{hybridsn_forward.8} parent=31 // pred_region
        %s2041 = smul.u32 64, %s18
      $region36: #{hybridsn_forward.8} parent=31 // pred_fallthru
        _
    $region32: #{hybridsn_forward.8} parent=5 // pred_fallthru
      _
    %p2042 = scmp.le.s32.totalorder 2, %s9
    // Predicated region
    $region37: #{hybridsn_forward.8} parent=5 // pred_check
      %p2043 = pneg %p2042
    $region38: #{hybridsn_forward.8} parent=5 // pred_check_branch
      %2045 = sbr.rel (%p2043) target = $region40
    $region39: #{hybridsn_forward.8} parent=5 // pred_region
      %s2046 = ssub.s32 %s9, 2
      // Predicated region
      $region41: #{hybridsn_forward.8} parent=39 // pred_check
        %p2047 = pneg %p130
      $region42: #{hybridsn_forward.8} parent=39 // pred_check_branch
        %2049 = sbr.rel (%p2047) target = $region44
      $region43: #{hybridsn_forward.8} parent=39 // pred_region
        %s2050 = smul.u32 64, %s20
        %p2051 = scmp.lt.s32.totalorder %s2050, 127
        %s2052 = scalar_select %p2051, %s2050, 127
        %p2053 = scmp.lt.s32.totalorder %s21, 0
        %s2054 = scalar_select %p2053, %s21, 0
        %s2055 = sadd.s32 %s2054, %s2052
        %s2056 = smul.addr %s2055, 4
        %s2057 = scalar_lea.vmem %s3, %s2056
      $region44: #{hybridsn_forward.8} parent=39 // pred_fallthru
        _
    $region40: #{hybridsn_forward.8} parent=5 // pred_fallthru
      _
  $region6: #{hybridsn_forward.8} parent=0 // loop_footer
    %s13 = sadd.s32 1, %s9
  $region7: #{hybridsn_forward.8} parent=0 // loop_footer_branch
    %8 = sbr.rel target = $region3
  $region8: #{hybridsn_forward.8} parent=0 // loop_exit
    _

// kernel: hybridsn_forward.9
$region0: #{hybridsn_forward.9}
  #allocation0 [shape = 'u32[]', space=smem, size = 0x4, offset = 0x4, fixed_abs, tag = 'smem constant byte address 0x4 - core index']
  #allocation1 [shape = 'u32[144,128]{1,0:T(1,128)}', space=vmem, size = 0x12000, scoped, tag = 'internal scratch']
  %s0 = inlined_call_operand.vmem [shape: bf16[200,512], index: 0, kind: input, shape index: {}]
  %s1 = inlined_call_operand.vmem [shape: bf16[512,128], index: 1, kind: input, shape index: {}]
  %s2 = inlined_call_operand.vmem [shape: f32[1,128], index: 2, kind: input, shape index: {}]
  %s3 = inlined_call_operand.vmem [shape: bf16[200,128], index: 3, kind: output, shape index: {}]
  %s4 = sld [smem:[#allocation0]]
  $region22: #{hybridsn_forward.9} parent=0
    _
  %s6 = ssub.s32 1, %s4
  %s7 = scalar_select 0, %s6, %s4
  // Predicated region
  $region2: #{hybridsn_forward.9} parent=0 // pred_check
    _
  $region3: #{hybridsn_forward.9} parent=0 // pred_check_branch
    %9 = sbr.rel (0) target = $region5
  $region4: #{hybridsn_forward.9} parent=0 // pred_region
    _
  $region5: #{hybridsn_forward.9} parent=0 // pred_fallthru
    _
  // Predicated region
  $region6: #{hybridsn_forward.9} parent=0 // pred_check
    _
  $region7: #{hybridsn_forward.9} parent=0 // pred_check_branch
    %11 = sbr.rel (0) target = $region9
  $region8: #{hybridsn_forward.9} parent=0 // pred_region
    _
  $region9: #{hybridsn_forward.9} parent=0 // pred_fallthru
    _
  // Predicated region
  $region10: #{hybridsn_forward.9} parent=0 // pred_check
    _
  $region11: #{hybridsn_forward.9} parent=0 // pred_check_branch
    %13 = sbr.rel (0) target = $region13
  $region12: #{hybridsn_forward.9} parent=0 // pred_region
    _
  $region13: #{hybridsn_forward.9} parent=0 // pred_fallthru
    _
  %v15 = vld [vmem:[%s0] sm:$0xff]
  %v16 = vld [vmem:[%s0 + $0x8] sm:$0xff]
  %v17 = vld [vmem:[%s0 + $0x10] sm:$0xff]
  %v18 = vld [vmem:[%s0 + $0x18] sm:$0xff]
  %v19 = vld [vmem:[%s0 + $0x20] sm:$0xff]
  %v20 = vld [vmem:[%s0 + $0x28] sm:$0xff]
  %v21 = vld [vmem:[%s0 + $0x30] sm:$0xff]
  %v22 = vld [vmem:[%s0 + $0x38] sm:$0xff]
  %v23 = vld [vmem:[%s0 + $0x40] sm:$0xff]
  %v24 = vld [vmem:[%s0 + $0x48] sm:$0xff]
  %v25 = vld [vmem:[%s0 + $0x50] sm:$0xff]
  %v26 = vld [vmem:[%s0 + $0x58] sm:$0xff]
  %v27 = vld [vmem:[%s0 + $0x60] sm:$0xff]
  %v28 = vld [vmem:[%s0 + $0x68] sm:$0xff]
  %v29 = vld [vmem:[%s0 + $0x70] sm:$0xff]
  %v30 = vld [vmem:[%s0 + $0x78] sm:$0xff]
  %v31 = vld [vmem:[%s0 + $0x80] sm:$0xff]
  %v32 = vld [vmem:[%s0 + $0x88] sm:$0xff]
  %v33 = vld [vmem:[%s0 + $0x90] sm:$0xff]
  %v34 = vld [vmem:[%s0 + $0x98] sm:$0xff]
  %v35 = vld [vmem:[%s0 + $0xa0] sm:$0xff]
  %v36 = vld [vmem:[%s0 + $0xa8] sm:$0xff]
  %v37 = vld [vmem:[%s0 + $0xb0] sm:$0xff]
  %v38 = vld [vmem:[%s0 + $0xb8] sm:$0xff]
  %v39 = vld [vmem:[%s0 + $0xc0] sm:$0xff]
  %v40 = vld [vmem:[%s0 + $0xc8] sm:$0xff]
  %v41 = vld [vmem:[%s0 + $0xd0] sm:$0xff]
  %v42 = vld [vmem:[%s0 + $0xd8] sm:$0xff]
  %v43 = vld [vmem:[%s0 + $0xe0] sm:$0xff]
  %v44 = vld [vmem:[%s0 + $0xe8] sm:$0xff]
  %v45 = vld [vmem:[%s0 + $0xf0] sm:$0xff]
  %v46 = vld [vmem:[%s0 + $0xf8] sm:$0xff]
  %v47 = vld [vmem:[%s0 + $0x100] sm:$0xff]
  %v48 = vld [vmem:[%s0 + $0x108] sm:$0xff]
  %v49 = vld [vmem:[%s0 + $0x110] sm:$0xff]
  %v50 = vld [vmem:[%s0 + $0x118] sm:$0xff]
  %v51 = vld [vmem:[%s0 + $0x120] sm:$0xff]
  %v52 = vld [vmem:[%s0 + $0x128] sm:$0xff]
  %v53 = vld [vmem:[%s0 + $0x130] sm:$0xff]
  %v54 = vld [vmem:[%s0 + $0x138] sm:$0xff]
  %v55 = vld [vmem:[%s0 + $0x140] sm:$0xff]
  %v56 = vld [vmem:[%s0 + $0x148] sm:$0xff]
  %v57 = vld [vmem:[%s0 + $0x150] sm:$0xff]
  %v58 = vld [vmem:[%s0 + $0x158] sm:$0xff]
  %v59 = vld [vmem:[%s0 + $0x160] sm:$0xff]
  %v60 = vld [vmem:[%s0 + $0x168] sm:$0xff]
  %v61 = vld [vmem:[%s0 + $0x170] sm:$0xff]
  %v62 = vld [vmem:[%s0 + $0x178] sm:$0xff]
  %v63 = vld [vmem:[%s0 + $0x180] sm:$0xff]
  %v64 = vld [vmem:[%s0 + $0x188] sm:$0xff]
  %v65 = vld [vmem:[%s1] sm:$0xf]
  %v66 = vld [vmem:[%s1 + $0x4] sm:$0xf]
  %v67 = vld [vmem:[%s1 + $0x8] sm:$0xf]
  %v68 = vld [vmem:[%s1 + $0xc] sm:$0xf]
  %v69 = vld [vmem:[%s1 + $0x10] sm:$0xf]
  %v70 = vld [vmem:[%s1 + $0x14] sm:$0xf]
  %v71 = vld [vmem:[%s1 + $0x18] sm:$0xf]
  %v72 = vld [vmem:[%s1 + $0x1c] sm:$0xf]
  %v73 = vld [vmem:[%s1 + $0x20] sm:$0xf]
  %v74 = vld [vmem:[%s1 + $0x24] sm:$0xf]
  %v75 = vld [vmem:[%s1 + $0x28] sm:$0xf]
  %v76 = vld [vmem:[%s1 + $0x2c] sm:$0xf]
  %v77 = vld [vmem:[%s1 + $0x30] sm:$0xf]
  %v78 = vld [vmem:[%s1 + $0x34] sm:$0xf]
  %v79 = vld [vmem:[%s1 + $0x38] sm:$0xf]
  %v80 = vld [vmem:[%s1 + $0x3c] sm:$0xf]
  %v81 = vld [vmem:[%s1 + $0x40] sm:$0xf]
  %v82 = vld [vmem:[%s1 + $0x44] sm:$0xf]
  %v83 = vld [vmem:[%s1 + $0x48] sm:$0xf]
  %v84 = vld [vmem:[%s1 + $0x4c] sm:$0xf]
  %v85 = vld [vmem:[%s1 + $0x50] sm:$0xf]
  %v86 = vld [vmem:[%s1 + $0x54] sm:$0xf]
  %v87 = vld [vmem:[%s1 + $0x58] sm:$0xf]
  %v88 = vld [vmem:[%s1 + $0x5c] sm:$0xf]
  %v89 = vld [vmem:[%s1 + $0x60] sm:$0xf]
  %v90 = vld [vmem:[%s1 + $0x64] sm:$0xf]
  %v91 = vld [vmem:[%s1 + $0x68] sm:$0xf]
  %v92 = vld [vmem:[%s1 + $0x6c] sm:$0xf]
  %v93 = vld [vmem:[%s1 + $0x70] sm:$0xf]
  %v94 = vld [vmem:[%s1 + $0x74] sm:$0xf]
  %v95 = vld [vmem:[%s1 + $0x78] sm:$0xf]
  %v96 = vld [vmem:[%s1 + $0x7c] sm:$0xf]
  %v97 = vld [vmem:[%s1 + $0x80] sm:$0xf]
  %v98 = vld [vmem:[%s1 + $0x84] sm:$0xf]
  %v99 = vld [vmem:[%s1 + $0x88] sm:$0xf]
  %v100 = vld [vmem:[%s1 + $0x8c] sm:$0xf]
  %v101 = vld [vmem:[%s1 + $0x90] sm:$0xf]
  %v102 = vld [vmem:[%s1 + $0x94] sm:$0xf]
  %v103 = vld [vmem:[%s1 + $0x98] sm:$0xf]
  %v104 = vld [vmem:[%s1 + $0x9c] sm:$0xf]
  %v105 = vld [vmem:[%s1 + $0xa0] sm:$0xf]
  %v106 = vld [vmem:[%s1 + $0xa4] sm:$0xf]
  %v107 = vld [vmem:[%s1 + $0xa8] sm:$0xf]
  %v108 = vld [vmem:[%s1 + $0xac] sm:$0xf]
  %v109 = vld [vmem:[%s1 + $0xb0] sm:$0xf]
  %v110 = vld [vmem:[%s1 + $0xb4] sm:$0xf]
  %v111 = vld [vmem:[%s1 + $0xb8] sm:$0xf]
  %v112 = vld [vmem:[%s1 + $0xbc] sm:$0xf]
  %v113 = vld [vmem:[%s1 + $0xc0] sm:$0xf]
  %v114 = vld [vmem:[%s1 + $0xc4] sm:$0xf]
  %v115 = vld [vmem:[%s1 + $0xc8] sm:$0xf]
  %v116 = vld [vmem:[%s1 + $0xcc] sm:$0xf]
  %v117 = vld [vmem:[%s1 + $0xd0] sm:$0xf]
  %v118 = vld [vmem:[%s1 + $0xd4] sm:$0xf]
  %v119 = vld [vmem:[%s1 + $0xd8] sm:$0xf]
  %v120 = vld [vmem:[%s1 + $0xdc] sm:$0xf]
  %v121 = vld [vmem:[%s1 + $0xe0] sm:$0xf]
  %v122 = vld [vmem:[%s1 + $0xe4] sm:$0xf]
  %v123 = vld [vmem:[%s1 + $0xe8] sm:$0xf]
  %v124 = vld [vmem:[%s1 + $0xec] sm:$0xf]
  %v125 = vld [vmem:[%s1 + $0xf0] sm:$0xf]
  %v126 = vld [vmem:[%s1 + $0xf4] sm:$0xf]
  %v127 = vld [vmem:[%s1 + $0xf8] sm:$0xf]
  %v128 = vld [vmem:[%s1 + $0xfc] sm:$0xf]
  %v129 = vld [vmem:[%s2] sm:$0x1]
  %v131 = vlaneseq
  %v132 = vshrl.u32 %v131, 7
  %v133 = vsub.s32 0, %v132
  %v134 = vrot.slane %v129, %v133
  %v186 = vunpack.c.l.b16 %v15
  %v187 = vunpack.c.h.b16 %v15
  %v188 = vunpack.c.l.b16 %v16
  %v189 = vunpack.c.h.b16 %v16
  %v190 = vunpack.c.l.b16 %v17
  %v191 = vunpack.c.h.b16 %v17
  %v192 = vunpack.c.l.b16 %v18
  %v193 = vunpack.c.h.b16 %v18
  %v194 = vunpack.c.l.b16 %v19
  %v195 = vunpack.c.h.b16 %v19
  %v196 = vunpack.c.l.b16 %v20
  %v197 = vunpack.c.h.b16 %v20
  %v198 = vunpack.c.l.b16 %v21
  %v199 = vunpack.c.h.b16 %v21
  %v200 = vunpack.c.l.b16 %v22
  %v201 = vunpack.c.h.b16 %v22
  %v202 = vunpack.c.l.b16 %v23
  %v203 = vunpack.c.h.b16 %v23
  %v204 = vunpack.c.l.b16 %v24
  %v205 = vunpack.c.h.b16 %v24
  %v206 = vunpack.c.l.b16 %v25
  %v207 = vunpack.c.h.b16 %v25
  %v208 = vunpack.c.l.b16 %v26
  %v209 = vunpack.c.h.b16 %v26
  %v210 = vunpack.c.l.b16 %v27
  %v211 = vunpack.c.h.b16 %v27
  %v212 = vunpack.c.l.b16 %v28
  %v213 = vunpack.c.h.b16 %v28
  %v214 = vunpack.c.l.b16 %v29
  %v215 = vunpack.c.h.b16 %v29
  %v216 = vunpack.c.l.b16 %v30
  %v217 = vunpack.c.h.b16 %v30
  %v218 = vunpack.c.l.b16 %v31
  %v219 = vunpack.c.h.b16 %v31
  %v220 = vunpack.c.l.b16 %v32
  %v221 = vunpack.c.h.b16 %v32
  %v222 = vunpack.c.l.b16 %v33
  %v223 = vunpack.c.h.b16 %v33
  %v224 = vunpack.c.l.b16 %v34
  %v225 = vunpack.c.h.b16 %v34
  %v226 = vunpack.c.l.b16 %v35
  %v227 = vunpack.c.h.b16 %v35
  %v228 = vunpack.c.l.b16 %v36
  %v229 = vunpack.c.h.b16 %v36
  %v230 = vunpack.c.l.b16 %v37
  %v231 = vunpack.c.h.b16 %v37
  %v232 = vunpack.c.l.b16 %v38
  %v233 = vunpack.c.h.b16 %v38
  %v234 = vunpack.c.l.b16 %v39
  %v235 = vunpack.c.h.b16 %v39
  %v236 = vunpack.c.l.b16 %v40
  %v237 = vunpack.c.h.b16 %v40
  %v238 = vunpack.c.l.b16 %v41
  %v239 = vunpack.c.h.b16 %v41
  %v240 = vunpack.c.l.b16 %v42
  %v241 = vunpack.c.h.b16 %v42
  %v242 = vunpack.c.l.b16 %v43
  %v243 = vunpack.c.h.b16 %v43
  %v244 = vunpack.c.l.b16 %v44
  %v245 = vunpack.c.h.b16 %v44
  %v246 = vunpack.c.l.b16 %v45
  %v247 = vunpack.c.h.b16 %v45
  %v248 = vunpack.c.l.b16 %v46
  %v249 = vunpack.c.h.b16 %v46
  %v250 = vunpack.c.l.b16 %v47
  %v251 = vunpack.c.h.b16 %v47
  %v252 = vunpack.c.l.b16 %v48
  %v253 = vunpack.c.h.b16 %v48
  %v254 = vunpack.c.l.b16 %v49
  %v255 = vunpack.c.h.b16 %v49
  %v256 = vunpack.c.l.b16 %v50
  %v257 = vunpack.c.h.b16 %v50
  %v258 = vunpack.c.l.b16 %v51
  %v259 = vunpack.c.h.b16 %v51
  %v260 = vunpack.c.l.b16 %v52
  %v261 = vunpack.c.h.b16 %v52
  %v262 = vunpack.c.l.b16 %v53
  %v263 = vunpack.c.h.b16 %v53
  %v264 = vunpack.c.l.b16 %v54
  %v265 = vunpack.c.h.b16 %v54
  %v266 = vunpack.c.l.b16 %v55
  %v267 = vunpack.c.h.b16 %v55
  %v268 = vunpack.c.l.b16 %v56
  %v269 = vunpack.c.h.b16 %v56
  %v270 = vunpack.c.l.b16 %v57
  %v271 = vunpack.c.h.b16 %v57
  %v272 = vunpack.c.l.b16 %v58
  %v273 = vunpack.c.h.b16 %v58
  %v274 = vunpack.c.l.b16 %v59
  %v275 = vunpack.c.h.b16 %v59
  %v276 = vunpack.c.l.b16 %v60
  %v277 = vunpack.c.h.b16 %v60
  %v278 = vunpack.c.l.b16 %v61
  %v279 = vunpack.c.h.b16 %v61
  %v280 = vunpack.c.l.b16 %v62
  %v281 = vunpack.c.h.b16 %v62
  %v282 = vunpack.c.l.b16 %v63
  %v283 = vunpack.c.h.b16 %v63
  %v284 = vunpack.c.l.b16 %v64
  %v285 = vunpack.c.h.b16 %v64
  %v286 = vpack.c.b16 %v190, %v186
  %v287 = vpack.c.b16 %v191, %v187
  %v288 = vpack.c.b16 %v192, %v188
  %v289 = vpack.c.b16 %v193, %v189
  %v290 = vpack.c.b16 %v198, %v194
  %v291 = vpack.c.b16 %v199, %v195
  %v292 = vpack.c.b16 %v200, %v196
  %v293 = vpack.c.b16 %v201, %v197
  %v294 = vpack.c.b16 %v206, %v202
  %v295 = vpack.c.b16 %v207, %v203
  %v296 = vpack.c.b16 %v208, %v204
  %v297 = vpack.c.b16 %v209, %v205
  %v298 = vpack.c.b16 %v214, %v210
  %v299 = vpack.c.b16 %v215, %v211
  %v300 = vpack.c.b16 %v216, %v212
  %v301 = vpack.c.b16 %v217, %v213
  %v302 = vpack.c.b16 %v222, %v218
  %v303 = vpack.c.b16 %v223, %v219
  %v304 = vpack.c.b16 %v224, %v220
  %v305 = vpack.c.b16 %v225, %v221
  %v306 = vpack.c.b16 %v230, %v226
  %v307 = vpack.c.b16 %v231, %v227
  %v308 = vpack.c.b16 %v232, %v228
  %v309 = vpack.c.b16 %v233, %v229
  %v310 = vpack.c.b16 %v238, %v234
  %v311 = vpack.c.b16 %v239, %v235
  %v312 = vpack.c.b16 %v240, %v236
  %v313 = vpack.c.b16 %v241, %v237
  %v314 = vpack.c.b16 %v246, %v242
  %v315 = vpack.c.b16 %v247, %v243
  %v316 = vpack.c.b16 %v248, %v244
  %v317 = vpack.c.b16 %v249, %v245
  %v318 = vpack.c.b16 %v254, %v250
  %v319 = vpack.c.b16 %v255, %v251
  %v320 = vpack.c.b16 %v256, %v252
  %v321 = vpack.c.b16 %v257, %v253
  %v322 = vpack.c.b16 %v262, %v258
  %v323 = vpack.c.b16 %v263, %v259
  %v324 = vpack.c.b16 %v264, %v260
  %v325 = vpack.c.b16 %v265, %v261
  %v326 = vpack.c.b16 %v270, %v266
  %v327 = vpack.c.b16 %v271, %v267
  %v328 = vpack.c.b16 %v272, %v268
  %v329 = vpack.c.b16 %v273, %v269
  %v330 = vpack.c.b16 %v278, %v274
  %v331 = vpack.c.b16 %v279, %v275
  %v332 = vpack.c.b16 %v280, %v276
  %v333 = vpack.c.b16 %v281, %v277
  %v334 = vpack.c.b16 %v282, %v282
  %v335 = vpack.c.b16 %v283, %v283
  %v336 = vpack.c.b16 %v284, %v284
  %v337 = vpack.c.b16 %v285, %v285
  %v454 = vunpack.c.l.b16 %v65
  %v455 = vunpack.c.l.b16 %v66
  %v456 = vunpack.c.l.b16 %v67
  %v457 = vunpack.c.l.b16 %v68
  %v458 = vunpack.c.l.b16 %v69
  %v459 = vunpack.c.l.b16 %v70
  %v460 = vunpack.c.l.b16 %v71
  %v461 = vunpack.c.l.b16 %v72
  %v462 = vunpack.c.l.b16 %v73
  %v463 = vunpack.c.l.b16 %v74
  %v464 = vunpack.c.l.b16 %v75
  %v465 = vunpack.c.l.b16 %v76
  %v466 = vunpack.c.l.b16 %v77
  %v467 = vunpack.c.l.b16 %v78
  %v468 = vunpack.c.l.b16 %v79
  %v469 = vunpack.c.l.b16 %v80
  %v470 = vunpack.c.l.b16 %v81
  %v471 = vunpack.c.l.b16 %v82
  %v472 = vunpack.c.l.b16 %v83
  %v473 = vunpack.c.l.b16 %v84
  %v474 = vunpack.c.l.b16 %v85
  %v475 = vunpack.c.l.b16 %v86
  %v476 = vunpack.c.l.b16 %v87
  %v477 = vunpack.c.l.b16 %v88
  %v478 = vunpack.c.l.b16 %v89
  %v479 = vunpack.c.l.b16 %v90
  %v480 = vunpack.c.l.b16 %v91
  %v481 = vunpack.c.l.b16 %v92
  %v482 = vunpack.c.l.b16 %v93
  %v483 = vunpack.c.l.b16 %v94
  %v484 = vunpack.c.l.b16 %v95
  %v485 = vunpack.c.l.b16 %v96
  %v486 = vunpack.c.l.b16 %v97
  %v487 = vunpack.c.l.b16 %v98
  %v488 = vunpack.c.l.b16 %v99
  %v489 = vunpack.c.l.b16 %v100
  %v490 = vunpack.c.l.b16 %v101
  %v491 = vunpack.c.l.b16 %v102
  %v492 = vunpack.c.l.b16 %v103
  %v493 = vunpack.c.l.b16 %v104
  %v494 = vunpack.c.l.b16 %v105
  %v495 = vunpack.c.l.b16 %v106
  %v496 = vunpack.c.l.b16 %v107
  %v497 = vunpack.c.l.b16 %v108
  %v498 = vunpack.c.l.b16 %v109
  %v499 = vunpack.c.l.b16 %v110
  %v500 = vunpack.c.l.b16 %v111
  %v501 = vunpack.c.l.b16 %v112
  %v502 = vunpack.c.l.b16 %v113
  %v503 = vunpack.c.l.b16 %v114
  %v504 = vunpack.c.l.b16 %v115
  %v505 = vunpack.c.l.b16 %v116
  %v506 = vunpack.c.l.b16 %v117
  %v507 = vunpack.c.l.b16 %v118
  %v508 = vunpack.c.l.b16 %v119
  %v509 = vunpack.c.l.b16 %v120
  %v510 = vunpack.c.l.b16 %v121
  %v511 = vunpack.c.l.b16 %v122
  %v512 = vunpack.c.l.b16 %v123
  %v513 = vunpack.c.l.b16 %v124
  %v514 = vunpack.c.l.b16 %v125
  %v515 = vunpack.c.l.b16 %v126
  %v516 = vunpack.c.l.b16 %v127
  %v517 = vunpack.c.l.b16 %v128
  %v518 = vpack.c.b16 %v455, %v454
  %v519 = vpack.c.b16 %v457, %v456
  %v520 = vpack.c.b16 %v459, %v458
  %v521 = vpack.c.b16 %v461, %v460
  %v522 = vpack.c.b16 %v463, %v462
  %v523 = vpack.c.b16 %v465, %v464
  %v524 = vpack.c.b16 %v467, %v466
  %v525 = vpack.c.b16 %v469, %v468
  %v526 = vpack.c.b16 %v471, %v470
  %v527 = vpack.c.b16 %v473, %v472
  %v528 = vpack.c.b16 %v475, %v474
  %v529 = vpack.c.b16 %v477, %v476
  %v530 = vpack.c.b16 %v479, %v478
  %v531 = vpack.c.b16 %v481, %v480
  %v532 = vpack.c.b16 %v483, %v482
  %v533 = vpack.c.b16 %v485, %v484
  %v534 = vpack.c.b16 %v487, %v486
  %v535 = vpack.c.b16 %v489, %v488
  %v536 = vpack.c.b16 %v491, %v490
  %v537 = vpack.c.b16 %v493, %v492
  %v538 = vpack.c.b16 %v495, %v494
  %v539 = vpack.c.b16 %v497, %v496
  %v540 = vpack.c.b16 %v499, %v498
  %v541 = vpack.c.b16 %v501, %v500
  %v542 = vpack.c.b16 %v503, %v502
  %v543 = vpack.c.b16 %v505, %v504
  %v544 = vpack.c.b16 %v507, %v506
  %v545 = vpack.c.b16 %v509, %v508
  %v546 = vpack.c.b16 %v511, %v510
  %v547 = vpack.c.b16 %v513, %v512
  %v548 = vpack.c.b16 %v515, %v514
  %v549 = vpack.c.b16 %v517, %v516
  %582 = vmatprep.subr.bf16.mxu0 0
  %583 = vmatpush1.bf16.msra.mxu0 %v525
  %584 = vmatprep.subr.bf16.mxu0 0
  %585 = vmatpush1.bf16.msra.mxu0 %v524
  %586 = vmatprep.subr.bf16.mxu0 0
  %587 = vmatpush1.bf16.msra.mxu0 %v523
  %588 = vmatprep.subr.bf16.mxu0 0
  %589 = vmatpush1.bf16.msra.mxu0 %v522
  %590 = vmatprep.subr.bf16.mxu0 0
  %591 = vmatpush1.bf16.msra.mxu0 %v521
  %592 = vmatprep.subr.bf16.mxu0 0
  %593 = vmatpush1.bf16.msra.mxu0 %v520
  %594 = vmatprep.subr.bf16.mxu0 0
  %595 = vmatpush1.bf16.msra.mxu0 %v519
  %596 = vmatprep.subr.bf16.mxu0 0
  %597 = vmatpush1.bf16.msra.mxu0 %v518
  %598 = vmatprep.subr.bf16.mxu0 0
  %599 = vmatpush2.bf16.msra.mxu0 %v533
  %600 = vmatprep.subr.bf16.mxu0 0
  %601 = vmatpush2.bf16.msra.mxu0 %v532
  %602 = vmatprep.subr.bf16.mxu0 0
  %603 = vmatpush2.bf16.msra.mxu0 %v531
  %604 = vmatprep.subr.bf16.mxu0 0
  %605 = vmatpush2.bf16.msra.mxu0 %v530
  %606 = vmatprep.subr.bf16.mxu0 0
  %607 = vmatpush2.bf16.msra.mxu0 %v529
  %608 = vmatprep.subr.bf16.mxu0 0
  %609 = vmatpush2.bf16.msra.mxu0 %v528
  %610 = vmatprep.subr.bf16.mxu0 0
  %611 = vmatpush2.bf16.msra.mxu0 %v527
  %612 = vmatprep.subr.bf16.mxu0 0
  %613 = vmatpush2.bf16.msra.mxu0 %v526
  %614 = vmatprep.mubr.bf16.mxu0 %v287
  %615 = vmatmul.mubr.bf16.gmra.mxu0 %v286
  %v616 = vpop.f32.mrf.mxu0
  %v617 = vadd.f32 %v134, %v616
  %v618 = vpop.f32.mrf.mxu0
  %v619 = vpop.f32.mrf.mxu0
  %v620 = vadd.f32 %v134, %v619
  %v621 = vpop.f32.mrf.mxu0
  %622 = vmatprep.mubr.bf16.mxu0 %v291
  %623 = vmatmul.mubr.bf16.gmra.mxu0 %v290
  %v624 = vpop.f32.mrf.mxu0
  %v625 = vadd.f32 %v134, %v624
  %v626 = vpop.f32.mrf.mxu0
  %v627 = vpop.f32.mrf.mxu0
  %v628 = vadd.f32 %v134, %v627
  %v629 = vpop.f32.mrf.mxu0
  %630 = vmatprep.mubr.bf16.mxu0 %v295
  %631 = vmatmul.mubr.bf16.gmra.mxu0 %v294
  %v632 = vpop.f32.mrf.mxu0
  %v633 = vadd.f32 %v134, %v632
  %v634 = vpop.f32.mrf.mxu0
  %v635 = vpop.f32.mrf.mxu0
  %v636 = vadd.f32 %v134, %v635
  %v637 = vpop.f32.mrf.mxu0
  %638 = vmatprep.mubr.bf16.mxu0 %v299
  %639 = vmatmul.mubr.bf16.gmra.mxu0 %v298
  %v640 = vpop.f32.mrf.mxu0
  %v641 = vadd.f32 %v134, %v640
  %v642 = vpop.f32.mrf.mxu0
  %v643 = vpop.f32.mrf.mxu0
  %v644 = vadd.f32 %v134, %v643
  %v645 = vpop.f32.mrf.mxu0
  %646 = vmatprep.mubr.bf16.mxu0 %v303
  %647 = vmatmul.mubr.bf16.gmra.mxu0 %v302
  %v648 = vpop.f32.mrf.mxu0
  %v649 = vadd.f32 %v134, %v648
  %v650 = vpop.f32.mrf.mxu0
  %v651 = vpop.f32.mrf.mxu0
  %v652 = vadd.f32 %v134, %v651
  %v653 = vpop.f32.mrf.mxu0
  %654 = vmatprep.mubr.bf16.mxu0 %v307
  %655 = vmatmul.mubr.bf16.gmra.mxu0 %v306
  %v656 = vpop.f32.mrf.mxu0
  %v657 = vadd.f32 %v134, %v656
  %v658 = vpop.f32.mrf.mxu0
  %v659 = vpop.f32.mrf.mxu0
  %v660 = vadd.f32 %v134, %v659
  %v661 = vpop.f32.mrf.mxu0
  %662 = vmatprep.mubr.bf16.mxu0 %v311
  %663 = vmatmul.mubr.bf16.gmra.mxu0 %v310
  %v664 = vpop.f32.mrf.mxu0
  %v665 = vadd.f32 %v134, %v664
  %v666 = vpop.f32.mrf.mxu0
  %v667 = vpop.f32.mrf.mxu0
  %v668 = vadd.f32 %v134, %v667
  %v669 = vpop.f32.mrf.mxu0
  %670 = vmatprep.mubr.bf16.mxu0 %v315
  %671 = vmatmul.mubr.bf16.gmra.mxu0 %v314
  %v672 = vpop.f32.mrf.mxu0
  %v673 = vadd.f32 %v134, %v672
  %v674 = vpop.f32.mrf.mxu0
  %v675 = vpop.f32.mrf.mxu0
  %v676 = vadd.f32 %v134, %v675
  %v677 = vpop.f32.mrf.mxu0
  %678 = vmatprep.mubr.bf16.mxu0 %v319
  %679 = vmatmul.mubr.bf16.gmra.mxu0 %v318
  %v680 = vpop.f32.mrf.mxu0
  %v681 = vadd.f32 %v134, %v680
  %v682 = vpop.f32.mrf.mxu0
  %v683 = vpop.f32.mrf.mxu0
  %v684 = vadd.f32 %v134, %v683
  %v685 = vpop.f32.mrf.mxu0
  %686 = vmatprep.mubr.bf16.mxu0 %v323
  %687 = vmatmul.mubr.bf16.gmra.mxu0 %v322
  %v688 = vpop.f32.mrf.mxu0
  %v689 = vadd.f32 %v134, %v688
  %v690 = vpop.f32.mrf.mxu0
  %v691 = vpop.f32.mrf.mxu0
  %v692 = vadd.f32 %v134, %v691
  %v693 = vpop.f32.mrf.mxu0
  %694 = vmatprep.mubr.bf16.mxu0 %v327
  %695 = vmatmul.mubr.bf16.gmra.mxu0 %v326
  %v696 = vpop.f32.mrf.mxu0
  %v697 = vadd.f32 %v134, %v696
  %v698 = vpop.f32.mrf.mxu0
  %v699 = vpop.f32.mrf.mxu0
  %v700 = vadd.f32 %v134, %v699
  %v701 = vpop.f32.mrf.mxu0
  %702 = vmatprep.mubr.bf16.mxu0 %v331
  %703 = vmatmul.mubr.bf16.gmra.mxu0 %v330
  %v704 = vpop.f32.mrf.mxu0
  %v705 = vadd.f32 %v134, %v704
  %v706 = vpop.f32.mrf.mxu0
  %v707 = vpop.f32.mrf.mxu0
  %v708 = vadd.f32 %v134, %v707
  %v709 = vpop.f32.mrf.mxu0
  %710 = vmatprep.mubr.bf16.mxu0 %v335
  %711 = vmatmul.mubr.bf16.gmra.mxu0 %v334
  %v712 = vpop.f32.mrf.mxu0
  %v713 = vadd.f32 %v134, %v712
  %v714 = vpop.f32.mrf.mxu0
  %v715 = vpop.f32.mrf.mxu0
  %v716 = vpop.f32.mrf.mxu0
  %717 = vdwg.mxu0
  %718 = vmatprep.subr.bf16.mxu0 0
  %719 = vmatpush1.bf16.msra.mxu0 %v541
  %720 = vmatprep.subr.bf16.mxu0 0
  %721 = vmatpush1.bf16.msra.mxu0 %v540
  %722 = vmatprep.subr.bf16.mxu0 0
  %723 = vmatpush1.bf16.msra.mxu0 %v539
  %724 = vmatprep.subr.bf16.mxu0 0
  %725 = vmatpush1.bf16.msra.mxu0 %v538
  %726 = vmatprep.subr.bf16.mxu0 0
  %727 = vmatpush1.bf16.msra.mxu0 %v537
  %728 = vmatprep.subr.bf16.mxu0 0
  %729 = vmatpush1.bf16.msra.mxu0 %v536
  %730 = vmatprep.subr.bf16.mxu0 0
  %731 = vmatpush1.bf16.msra.mxu0 %v535
  %732 = vmatprep.subr.bf16.mxu0 0
  %733 = vmatpush1.bf16.msra.mxu0 %v534
  %734 = vmatprep.subr.bf16.mxu0 0
  %735 = vmatpush2.bf16.msra.mxu0 %v549
  %736 = vmatprep.subr.bf16.mxu0 0
  %737 = vmatpush2.bf16.msra.mxu0 %v548
  %738 = vmatprep.subr.bf16.mxu0 0
  %739 = vmatpush2.bf16.msra.mxu0 %v547
  %740 = vmatprep.subr.bf16.mxu0 0
  %741 = vmatpush2.bf16.msra.mxu0 %v546
  %742 = vmatprep.subr.bf16.mxu0 0
  %743 = vmatpush2.bf16.msra.mxu0 %v545
  %744 = vmatprep.subr.bf16.mxu0 0
  %745 = vmatpush2.bf16.msra.mxu0 %v544
  %746 = vmatprep.subr.bf16.mxu0 0
  %747 = vmatpush2.bf16.msra.mxu0 %v543
  %748 = vmatprep.subr.bf16.mxu0 0
  %749 = vmatpush2.bf16.msra.mxu0 %v542
  %750 = vmatprep.mubr.bf16.mxu0 %v289
  %751 = vmatmul.mubr.bf16.gmra.mxu0 %v288
  %v752 = vpop.f32.mrf.mxu0
  %v753 = vadd.f32 %v617, %v752
  %v754 = vpop.f32.mrf.mxu0
  %v755 = vpop.f32.mrf.mxu0
  %v756 = vadd.f32 %v620, %v755
  %v757 = vpop.f32.mrf.mxu0
  %758 = vmatprep.mubr.bf16.mxu0 %v293
  %759 = vmatmul.mubr.bf16.gmra.mxu0 %v292
  %v760 = vpop.f32.mrf.mxu0
  %v761 = vadd.f32 %v625, %v760
  %v762 = vpop.f32.mrf.mxu0
  %v763 = vpop.f32.mrf.mxu0
  %v764 = vadd.f32 %v628, %v763
  %v765 = vpop.f32.mrf.mxu0
  %766 = vmatprep.mubr.bf16.mxu0 %v297
  %767 = vmatmul.mubr.bf16.gmra.mxu0 %v296
  %v768 = vpop.f32.mrf.mxu0
  %v769 = vadd.f32 %v633, %v768
  %v770 = vpop.f32.mrf.mxu0
  %v771 = vpop.f32.mrf.mxu0
  %v772 = vadd.f32 %v636, %v771
  %v773 = vpop.f32.mrf.mxu0
  %774 = vmatprep.mubr.bf16.mxu0 %v301
  %775 = vmatmul.mubr.bf16.gmra.mxu0 %v300
  %v776 = vpop.f32.mrf.mxu0
  %v777 = vadd.f32 %v641, %v776
  %v778 = vpop.f32.mrf.mxu0
  %v779 = vpop.f32.mrf.mxu0
  %v780 = vadd.f32 %v644, %v779
  %v781 = vpop.f32.mrf.mxu0
  %782 = vmatprep.mubr.bf16.mxu0 %v305
  %783 = vmatmul.mubr.bf16.gmra.mxu0 %v304
  %v784 = vpop.f32.mrf.mxu0
  %v785 = vadd.f32 %v649, %v784
  %v786 = vpop.f32.mrf.mxu0
  %v787 = vpop.f32.mrf.mxu0
  %v788 = vadd.f32 %v652, %v787
  %v789 = vpop.f32.mrf.mxu0
  %790 = vmatprep.mubr.bf16.mxu0 %v309
  %791 = vmatmul.mubr.bf16.gmra.mxu0 %v308
  %v792 = vpop.f32.mrf.mxu0
  %v793 = vadd.f32 %v657, %v792
  %v794 = vpop.f32.mrf.mxu0
  %v795 = vpop.f32.mrf.mxu0
  %v796 = vadd.f32 %v660, %v795
  %v797 = vpop.f32.mrf.mxu0
  %798 = vmatprep.mubr.bf16.mxu0 %v313
  %799 = vmatmul.mubr.bf16.gmra.mxu0 %v312
  %v800 = vpop.f32.mrf.mxu0
  %v801 = vadd.f32 %v665, %v800
  %v802 = vpop.f32.mrf.mxu0
  %v803 = vpop.f32.mrf.mxu0
  %v804 = vadd.f32 %v668, %v803
  %v805 = vpop.f32.mrf.mxu0
  %806 = vmatprep.mubr.bf16.mxu0 %v317
  %807 = vmatmul.mubr.bf16.gmra.mxu0 %v316
  %v808 = vpop.f32.mrf.mxu0
  %v809 = vadd.f32 %v673, %v808
  %v810 = vpop.f32.mrf.mxu0
  %v811 = vpop.f32.mrf.mxu0
  %v812 = vadd.f32 %v676, %v811
  %v813 = vpop.f32.mrf.mxu0
  %814 = vmatprep.mubr.bf16.mxu0 %v321
  %815 = vmatmul.mubr.bf16.gmra.mxu0 %v320
  %v816 = vpop.f32.mrf.mxu0
  %v817 = vadd.f32 %v681, %v816
  %v818 = vpop.f32.mrf.mxu0
  %v819 = vpop.f32.mrf.mxu0
  %v820 = vadd.f32 %v684, %v819
  %v821 = vpop.f32.mrf.mxu0
  %822 = vmatprep.mubr.bf16.mxu0 %v325
  %823 = vmatmul.mubr.bf16.gmra.mxu0 %v324
  %v824 = vpop.f32.mrf.mxu0
  %v825 = vadd.f32 %v689, %v824
  %v826 = vpop.f32.mrf.mxu0
  %v827 = vpop.f32.mrf.mxu0
  %v828 = vadd.f32 %v692, %v827
  %v829 = vpop.f32.mrf.mxu0
  %830 = vmatprep.mubr.bf16.mxu0 %v329
  %831 = vmatmul.mubr.bf16.gmra.mxu0 %v328
  %v832 = vpop.f32.mrf.mxu0
  %v833 = vadd.f32 %v697, %v832
  %v834 = vpop.f32.mrf.mxu0
  %v835 = vpop.f32.mrf.mxu0
  %v836 = vadd.f32 %v700, %v835
  %v837 = vpop.f32.mrf.mxu0
  %838 = vmatprep.mubr.bf16.mxu0 %v333
  %839 = vmatmul.mubr.bf16.gmra.mxu0 %v332
  %v840 = vpop.f32.mrf.mxu0
  %v841 = vadd.f32 %v705, %v840
  %v842 = vpop.f32.mrf.mxu0
  %v843 = vpop.f32.mrf.mxu0
  %v844 = vadd.f32 %v708, %v843
  %v845 = vpop.f32.mrf.mxu0
  %846 = vmatprep.mubr.bf16.mxu0 %v337
  %847 = vmatmul.mubr.bf16.gmra.mxu0 %v336
  %v848 = vpop.f32.mrf.mxu0
  %v849 = vadd.f32 %v713, %v848
  %v850 = vpop.f32.mrf.mxu0
  %v851 = vpop.f32.mrf.mxu0
  %v852 = vpop.f32.mrf.mxu0
  %853 = vdwg.mxu0
  %v854 = vmax.f32 %v753, 0.0
  %v855 = vmax.f32 %v756, 0.0
  %v856 = vmax.f32 %v761, 0.0
  %v857 = vmax.f32 %v764, 0.0
  %v858 = vmax.f32 %v769, 0.0
  %v859 = vmax.f32 %v772, 0.0
  %v860 = vmax.f32 %v777, 0.0
  %v861 = vmax.f32 %v780, 0.0
  %v862 = vmax.f32 %v785, 0.0
  %v863 = vmax.f32 %v788, 0.0
  %v864 = vmax.f32 %v793, 0.0
  %v865 = vmax.f32 %v796, 0.0
  %v866 = vmax.f32 %v801, 0.0
  %v867 = vmax.f32 %v804, 0.0
  %v868 = vmax.f32 %v809, 0.0
  %v869 = vmax.f32 %v812, 0.0
  %v870 = vmax.f32 %v817, 0.0
  %v871 = vmax.f32 %v820, 0.0
  %v872 = vmax.f32 %v825, 0.0
  %v873 = vmax.f32 %v828, 0.0
  %v874 = vmax.f32 %v833, 0.0
  %v875 = vmax.f32 %v836, 0.0
  %v876 = vmax.f32 %v841, 0.0
  %v877 = vmax.f32 %v844, 0.0
  %v878 = vmax.f32 %v849, 0.0
  %v879 = vpack.c.bf16 %v855, %v854
  %v880 = vpack.c.bf16 %v857, %v856
  %v881 = vpack.c.bf16 %v859, %v858
  %v882 = vpack.c.bf16 %v861, %v860
  %v883 = vpack.c.bf16 %v863, %v862
  %v884 = vpack.c.bf16 %v865, %v864
  %v885 = vpack.c.bf16 %v867, %v866
  %v886 = vpack.c.bf16 %v869, %v868
  %v887 = vpack.c.bf16 %v871, %v870
  %v888 = vpack.c.bf16 %v873, %v872
  %v889 = vpack.c.bf16 %v875, %v874
  %v890 = vpack.c.bf16 %v877, %v876
  %v891 = vpack.c.bf16 %v878, %v878
  %v905 = vunpack.c.l.b16 %v879
  %v906 = vunpack.c.h.b16 %v879
  %v907 = vunpack.c.l.b16 %v880
  %v908 = vunpack.c.h.b16 %v880
  %v909 = vunpack.c.l.b16 %v881
  %v910 = vunpack.c.h.b16 %v881
  %v911 = vunpack.c.l.b16 %v882
  %v912 = vunpack.c.h.b16 %v882
  %v913 = vunpack.c.l.b16 %v883
  %v914 = vunpack.c.h.b16 %v883
  %v915 = vunpack.c.l.b16 %v884
  %v916 = vunpack.c.h.b16 %v884
  %v917 = vunpack.c.l.b16 %v885
  %v918 = vunpack.c.h.b16 %v885
  %v919 = vunpack.c.l.b16 %v886
  %v920 = vunpack.c.h.b16 %v886
  %v921 = vunpack.c.l.b16 %v887
  %v922 = vunpack.c.h.b16 %v887
  %v923 = vunpack.c.l.b16 %v888
  %v924 = vunpack.c.h.b16 %v888
  %v925 = vunpack.c.l.b16 %v889
  %v926 = vunpack.c.h.b16 %v889
  %v927 = vunpack.c.l.b16 %v890
  %v928 = vunpack.c.h.b16 %v890
  %v929 = vunpack.c.l.b16 %v891
  %v930 = vpack.c.b16 %v905, %v905
  %v931 = vpack.c.b16 %v906, %v906
  %v932 = vpack.c.b16 %v907, %v907
  %v933 = vpack.c.b16 %v908, %v908
  %v934 = vpack.c.b16 %v909, %v909
  %v935 = vpack.c.b16 %v910, %v910
  %v936 = vpack.c.b16 %v911, %v911
  %v937 = vpack.c.b16 %v912, %v912
  %v938 = vpack.c.b16 %v913, %v913
  %v939 = vpack.c.b16 %v914, %v914
  %v940 = vpack.c.b16 %v915, %v915
  %v941 = vpack.c.b16 %v916, %v916
  %v942 = vpack.c.b16 %v917, %v917
  %v943 = vpack.c.b16 %v918, %v918
  %v944 = vpack.c.b16 %v919, %v919
  %v945 = vpack.c.b16 %v920, %v920
  %v946 = vpack.c.b16 %v921, %v921
  %v947 = vpack.c.b16 %v922, %v922
  %v948 = vpack.c.b16 %v923, %v923
  %v949 = vpack.c.b16 %v924, %v924
  %v950 = vpack.c.b16 %v925, %v925
  %v951 = vpack.c.b16 %v926, %v926
  %v952 = vpack.c.b16 %v927, %v927
  %v953 = vpack.c.b16 %v928, %v928
  %v954 = vpack.c.b16 %v929, %v929
  %980 = vst [vmem:[%s3] sm:$0xf] %v930
  %981 = vst [vmem:[%s3 + $0x4] sm:$0xf] %v931
  %982 = vst [vmem:[%s3 + $0x8] sm:$0xf] %v932
  %983 = vst [vmem:[%s3 + $0xc] sm:$0xf] %v933
  %984 = vst [vmem:[%s3 + $0x10] sm:$0xf] %v934
  %985 = vst [vmem:[%s3 + $0x14] sm:$0xf] %v935
  %986 = vst [vmem:[%s3 + $0x18] sm:$0xf] %v936
  %987 = vst [vmem:[%s3 + $0x1c] sm:$0xf] %v937
  %988 = vst [vmem:[%s3 + $0x20] sm:$0xf] %v938
  %989 = vst [vmem:[%s3 + $0x24] sm:$0xf] %v939
  %990 = vst [vmem:[%s3 + $0x28] sm:$0xf] %v940
  %991 = vst [vmem:[%s3 + $0x2c] sm:$0xf] %v941
  %992 = vst [vmem:[%s3 + $0x30] sm:$0xf] %v942
  %993 = vst [vmem:[%s3 + $0x34] sm:$0xf] %v943
  %994 = vst [vmem:[%s3 + $0x38] sm:$0xf] %v944
  %995 = vst [vmem:[%s3 + $0x3c] sm:$0xf] %v945
  %996 = vst [vmem:[%s3 + $0x40] sm:$0xf] %v946
  %997 = vst [vmem:[%s3 + $0x44] sm:$0xf] %v947
  %998 = vst [vmem:[%s3 + $0x48] sm:$0xf] %v948
  %999 = vst [vmem:[%s3 + $0x4c] sm:$0xf] %v949
  %1000 = vst [vmem:[%s3 + $0x50] sm:$0xf] %v950
  %1001 = vst [vmem:[%s3 + $0x54] sm:$0xf] %v951
  %1002 = vst [vmem:[%s3 + $0x58] sm:$0xf] %v952
  %1003 = vst [vmem:[%s3 + $0x5c] sm:$0xf] %v953
  %1004 = vst [vmem:[%s3 + $0x60] sm:$0xf] %v954
  // Predicated region
  $region14: #{hybridsn_forward.9} parent=0 // pred_check
    _
  $region15: #{hybridsn_forward.9} parent=0 // pred_check_branch
    %1006 = sbr.rel (0) target = $region17
  $region16: #{hybridsn_forward.9} parent=0 // pred_region
    _
  $region17: #{hybridsn_forward.9} parent=0 // pred_fallthru
    _
  // Predicated region
  $region18: #{hybridsn_forward.9} parent=0 // pred_check
    _
  $region19: #{hybridsn_forward.9} parent=0 // pred_check_branch
    %1008 = sbr.rel (0) target = $region21
  $region20: #{hybridsn_forward.9} parent=0 // pred_region
    _
  $region21: #{hybridsn_forward.9} parent=0 // pred_fallthru
    _

// kernel: hybridsn_forward.10
$region0: #{hybridsn_forward.10}
  #allocation0 [shape = 'u32[]', space=smem, size = 0x4, offset = 0x4, fixed_abs, tag = 'smem constant byte address 0x4 - core index']
  #allocation1 [shape = 'u32[144,128]{1,0:T(1,128)}', space=vmem, size = 0x12000, scoped, tag = 'internal scratch']
  #allocation2 [shape = 'f32[24,128]{1,0:T(8,128)}', space=vmem, size = 0x3000, scoped, tag = 'scratch operand']
  %s0 = inlined_call_operand.vmem [shape: bf16[24,1152], index: 0, kind: input, shape index: {}]
  %s1 = inlined_call_operand.vmem [shape: bf16[1152,128], index: 1, kind: input, shape index: {}]
  %s2 = inlined_call_operand.vmem [shape: f32[1,128], index: 2, kind: input, shape index: {}]
  %s3 = inlined_call_operand.vmem [shape: bf16[24,128], index: 3, kind: output, shape index: {}]
  %s4 = sld [smem:[#allocation0]]
  $region79: #{hybridsn_forward.10} parent=0
    _
  %s6 = ssub.s32 1, %s4
  %s7 = scalar_select 0, %s6, %s4
  $region1: #{hybridsn_forward.10} parent=0
    #allocation3 [shape = 'u8[36864]{0}', space=vmem, size = 0x9000, scoped, tag = 'input window, operand 0']
    loop: start=0, step=1, limit=5
    $region2: #{hybridsn_forward.10} parent=1 // loop_pre_header
      _
    $region3: #{hybridsn_forward.10} parent=1 // loop_header
      %s9 = sphi 0, %s13
      %p10 = scmp.ge.s32.totalorder %s9, 5
      %s16 = sphi 0, %s35
      %s17 = sphi 0, %s31
      %s18 = sphi 0, %s27
      %s19 = sphi 0, %s16
      %s20 = sphi 0, %s17
      %s21 = sphi 0, %s18
      %s22 = sphi 0, %s19
      %s23 = sphi 0, %s20
      %s24 = sphi 0, %s21
      %s40 = sphi 0, %s42
      %s43 = sphi 0, %s40
      %s44 = sphi 0, %s43
      %s60 = sphi 0, %s44
      %s68 = sphi 0, %s70
      %s71 = sphi 0, %s68
      %s72 = sphi 0, %s71
      %s88 = sphi 0, %s72
      %s94 = sphi 0, %s96
      %s97 = sphi 0, %s94
      %s98 = sphi 0, %s97
      %s114 = sphi 0, %s98
      %s122 = sphi 0, %s124
      %s125 = sphi 0, %s122
      %s126 = sphi 0, %s125
      %s142 = sphi 0, %s126
    $region4: #{hybridsn_forward.10} parent=1 // loop_header_branch
      %12 = sbr.rel (%p10) target = $region8
    $region5: #{hybridsn_forward.10} parent=1 // loop_body
      %s14 = ssub.s32 %s9, 1
      %s15 = ssub.s32 %s9, 2
      %s25 = sadd.s32 1, %s18
      %p26 = scmp.ge.s32.totalorder %s25, 3
      %s27 = scalar_select %p26, 0, %s25
      %s28 = sadd.s32 1, %s17
      %s29 = scalar_select %p26, %s28, %s17
      %p30 = scmp.ge.s32.totalorder %s29, 1
      %s31 = scalar_select %p30, 0, %s29
      %s32 = sadd.s32 1, %s16
      %s33 = scalar_select %p30, %s32, %s16
      %p34 = scmp.ge.s32.totalorder %s33, 1
      %s35 = scalar_select %p34, 0, %s33
      %s36 = ssub.s32 %s16, %s35
      %s37 = ssub.s32 %s18, %s27
      %s38 = sor.u32 %s36, %s37
      %p39 = scmp.eq.s32.totalorder %s38, 0
      %s41 = sadd.s32 %s40, 1
      %s42 = scalar_select %p39, %s40, %s41
      %p45 = pneg %p39
      %p46 = scmp.eq.s32.totalorder %s9, 2
      %p47 = por %p45, %p46
      %p48 = scmp.ne.s32.totalorder %s40, %s43
      %p49 = scmp.eq.s32.totalorder %s9, 0
      %p50 = por %p48, %p49
      %p51 = scmp.ne.s32.totalorder %s40, %s43
      %p52 = scmp.eq.s32.totalorder %s14, 2
      %p53 = por %p51, %p52
      %p54 = scmp.ne.s32.totalorder %s43, %s44
      %p55 = scmp.eq.s32.totalorder %s14, 0
      %p56 = por %p54, %p55
      %p57 = scmp.ne.s32.totalorder %s43, %s44
      %p58 = scmp.eq.s32.totalorder %s15, 2
      %p59 = por %p57, %p58
      %p61 = scmp.ne.s32.totalorder %s44, %s60
      %p62 = scmp.eq.s32.totalorder %s15, 0
      %p63 = por %p61, %p62
      %s64 = ssub.s32 %s18, %s27
      %s65 = ssub.s32 %s17, %s31
      %s66 = sor.u32 %s64, %s65
      %p67 = scmp.eq.s32.totalorder %s66, 0
      %s69 = sadd.s32 %s68, 1
      %s70 = scalar_select %p67, %s68, %s69
      %p73 = pneg %p67
      %p74 = scmp.eq.s32.totalorder %s9, 2
      %p75 = por %p73, %p74
      %p76 = scmp.ne.s32.totalorder %s68, %s71
      %p77 = scmp.eq.s32.totalorder %s9, 0
      %p78 = por %p76, %p77
      %p79 = scmp.ne.s32.totalorder %s68, %s71
      %p80 = scmp.eq.s32.totalorder %s14, 2
      %p81 = por %p79, %p80
      %p82 = scmp.ne.s32.totalorder %s71, %s72
      %p83 = scmp.eq.s32.totalorder %s14, 0
      %p84 = por %p82, %p83
      %p85 = scmp.ne.s32.totalorder %s71, %s72
      %p86 = scmp.eq.s32.totalorder %s15, 2
      %p87 = por %p85, %p86
      %p89 = scmp.ne.s32.totalorder %s72, %s88
      %p90 = scmp.eq.s32.totalorder %s15, 0
      %p91 = por %p89, %p90
      %s92 = ssub.s32 %s17, %s31
      %p93 = scmp.eq.s32.totalorder %s92, 0
      %s95 = sadd.s32 %s94, 1
      %s96 = scalar_select %p93, %s94, %s95
      %p99 = pneg %p93
      %p100 = scmp.eq.s32.totalorder %s9, 2
      %p101 = por %p99, %p100
      %p102 = scmp.ne.s32.totalorder %s94, %s97
      %p103 = scmp.eq.s32.totalorder %s9, 0
      %p104 = por %p102, %p103
      %p105 = scmp.ne.s32.totalorder %s94, %s97
      %p106 = scmp.eq.s32.totalorder %s14, 2
      %p107 = por %p105, %p106
      %p108 = scmp.ne.s32.totalorder %s97, %s98
      %p109 = scmp.eq.s32.totalorder %s14, 0
      %p110 = por %p108, %p109
      %p111 = scmp.ne.s32.totalorder %s97, %s98
      %p112 = scmp.eq.s32.totalorder %s15, 2
      %p113 = por %p111, %p112
      %p115 = scmp.ne.s32.totalorder %s98, %s114
      %p116 = scmp.eq.s32.totalorder %s15, 0
      %p117 = por %p115, %p116
      %s118 = ssub.s32 %s16, %s35
      %s119 = ssub.s32 %s17, %s31
      %s120 = sor.u32 %s118, %s119
      %p121 = scmp.eq.s32.totalorder %s120, 0
      %s123 = sadd.s32 %s122, 1
      %s124 = scalar_select %p121, %s122, %s123
      %p127 = pneg %p121
      %p128 = scmp.eq.s32.totalorder %s9, 2
      %p129 = por %p127, %p128
      %p130 = scmp.ne.s32.totalorder %s122, %s125
      %p131 = scmp.eq.s32.totalorder %s9, 0
      %p132 = por %p130, %p131
      %p133 = scmp.ne.s32.totalorder %s122, %s125
      %p134 = scmp.eq.s32.totalorder %s14, 2
      %p135 = por %p133, %p134
      %p136 = scmp.ne.s32.totalorder %s125, %s126
      %p137 = scmp.eq.s32.totalorder %s14, 0
      %p138 = por %p136, %p137
      %p139 = scmp.ne.s32.totalorder %s125, %s126
      %p140 = scmp.eq.s32.totalorder %s15, 2
      %p141 = por %p139, %p140
      %p143 = scmp.ne.s32.totalorder %s126, %s142
      %p144 = scmp.eq.s32.totalorder %s15, 0
      %p145 = por %p143, %p144
      %p146 = scmp.le.s32.totalorder 1, %s9
      %p147 = scmp.lt.s32.totalorder %s9, 4
      %p148 = pnand %p146, %p147
      %p149 = pneg %p148
      // Predicated region
      $region9: #{hybridsn_forward.10} parent=5 // pred_check
        _
      $region10: #{hybridsn_forward.10} parent=5 // pred_check_branch
        %151 = sbr.rel (%p148) target = $region12
      $region11: #{hybridsn_forward.10} parent=5 // pred_region
        %s152 = ssub.s32 %s9, 1
        // Predicated region
        $region13: #{hybridsn_forward.10} parent=11 // pred_check
          %p153 = pneg %p110
        $region14: #{hybridsn_forward.10} parent=11 // pred_check_branch
          %155 = sbr.rel (%p153) target = $region16
        $region15: #{hybridsn_forward.10} parent=11 // pred_region
          %p156 = scmp.lt.s32.totalorder %s20, 0
          %s157 = scalar_select %p156, %s20, 0
          %s158 = scalar_lea.vmem %s2, %s157
        $region16: #{hybridsn_forward.10} parent=11 // pred_fallthru
          _
      $region12: #{hybridsn_forward.10} parent=5 // pred_fallthru
        _
      %p159 = scmp.lt.s32.totalorder %s9, 3
      // Predicated region
      $region17: #{hybridsn_forward.10} parent=5 // pred_check
        %p160 = pneg %p159
      $region18: #{hybridsn_forward.10} parent=5 // pred_check_branch
        %162 = sbr.rel (%p160) target = $region20
      $region19: #{hybridsn_forward.10} parent=5 // pred_region
        // Predicated region
        $region21: #{hybridsn_forward.10} parent=19 // pred_check
          %p163 = pneg %p50
        $region22: #{hybridsn_forward.10} parent=19 // pred_check_branch
          %165 = sbr.rel (%p163) target = $region24
        $region23: #{hybridsn_forward.10} parent=19 // pred_region
          %s166 = sand.u32 %s40, 1
          %s167 = sand.u32 %s40, 1
          %s168 = smul.addr %s167, 36
          %s169 = scalar_lea.vmem [#allocation3], %s168
          %s170 = smul.u32 3, %s16
          %s171 = smul.u32 3, %s18
          %s172 = smul.addr %s170, 9
          %s173 = sadd.s32 %s171, %s172
          %s174 = smul.addr %s173, 4
          %s175 = scalar_lea.vmem %s0, %s174
          // Predicated region
          $region25: #{hybridsn_forward.10} parent=23 // pred_check
            _
          $region26: #{hybridsn_forward.10} parent=23 // pred_check_branch
            %177 = sbr.rel (0) target = $region28
          $region27: #{hybridsn_forward.10} parent=23 // pred_region
            // Predicated region
            $region29: #{hybridsn_forward.10} parent=27 // pred_check
              _
            $region30: #{hybridsn_forward.10} parent=27 // pred_check_branch
              %179 = sbr.rel (0) target = $region32
            $region31: #{hybridsn_forward.10} parent=27 // pred_region
              %s180 = scalar_lea.vmem %s175, 8
              %s181 = scalar_lea.vmem %s169, 8 [#allocation3]
              loop: start=0, step=1, limit=1
              $region33: #{hybridsn_forward.10} parent=31 // loop_pre_header
                _
              $region34: #{hybridsn_forward.10} parent=31 // loop_header
                %s183 = sphi 0, %s187
                %p184 = scmp.ge.s32.totalorder %s183, 1
                %s188 = sphi %s175, %s175
                %s189 = sphi %s169, %s169
              $region35: #{hybridsn_forward.10} parent=31 // loop_header_branch
                %186 = sbr.rel (%p184) target = $region39
              $region36: #{hybridsn_forward.10} parent=31 // loop_body
                %v190 = vld [vmem:[%s188] sm:$0xff]
                %191 = vst [vmem:[%s189] sm:$0xff] %v190
                %v192 = vld [vmem:[%s188 + $0x24] sm:$0xff]
                %193 = vst [vmem:[%s189 + $0xc] sm:$0xff] %v192
                %v194 = vld [vmem:[%s188 + $0x48] sm:$0xff]
                %195 = vst [vmem:[%s189 + $0x18] sm:$0xff] %v194
              $region37: #{hybridsn_forward.10} parent=31 // loop_footer
                %s187 = sadd.s32 1, %s183
              $region38: #{hybridsn_forward.10} parent=31 // loop_footer_branch
                %182 = sbr.rel target = $region34
              $region39: #{hybridsn_forward.10} parent=31 // loop_exit
                _
              %s197 = ssub.s32 16, 1
              loop: start=0, step=1, limit=1
              $region40: #{hybridsn_forward.10} parent=31 // loop_pre_header
                _
              $region41: #{hybridsn_forward.10} parent=31 // loop_header
                %s199 = sphi 0, %s203
                %p200 = scmp.ge.s32.totalorder %s199, 1
                %s204 = sphi %s180, %s180
                %s205 = sphi %s181, %s181
              $region42: #{hybridsn_forward.10} parent=31 // loop_header_branch
                %202 = sbr.rel (%p200) target = $region46
              $region43: #{hybridsn_forward.10} parent=31 // loop_body
                %v206 = vld [vmem:[%s204] sm:%s197]
                %207 = vst [vmem:[%s205] sm:%s197] %v206
                %v208 = vld [vmem:[%s204 + $0x24] sm:%s197]
                %209 = vst [vmem:[%s205 + $0xc] sm:%s197] %v208
                %v210 = vld [vmem:[%s204 + $0x48] sm:%s197]
                %211 = vst [vmem:[%s205 + $0x18] sm:%s197] %v210
              $region44: #{hybridsn_forward.10} parent=31 // loop_footer
                %s203 = sadd.s32 1, %s199
              $region45: #{hybridsn_forward.10} parent=31 // loop_footer_branch
                %198 = sbr.rel target = $region41
              $region46: #{hybridsn_forward.10} parent=31 // loop_exit
                _
            $region32: #{hybridsn_forward.10} parent=27 // pred_fallthru
              _
          $region28: #{hybridsn_forward.10} parent=23 // pred_fallthru
            _
          %212 = vnop
        $region24: #{hybridsn_forward.10} parent=19 // pred_fallthru
          _
        // Predicated region
        $region47: #{hybridsn_forward.10} parent=19 // pred_check
          %p213 = pneg %p78
        $region48: #{hybridsn_forward.10} parent=19 // pred_check_branch
          %215 = sbr.rel (%p213) target = $region50
        $region49: #{hybridsn_forward.10} parent=19 // pred_region
          %s216 = smul.u32 48, %s18
          %p217 = scmp.lt.s32.totalorder %s216, 143
          %s218 = scalar_select %p217, %s216, 143
          %p219 = scmp.lt.s32.totalorder %s17, 0
          %s220 = scalar_select %p219, %s17, 0
          %s221 = sadd.s32 %s220, %s218
          %s222 = smul.addr %s221, 4
          %s223 = scalar_lea.vmem %s1, %s222
          %s224 = smul.u32 48, %s18
        $region50: #{hybridsn_forward.10} parent=19 // pred_fallthru
          _
      $region20: #{hybridsn_forward.10} parent=5 // pred_fallthru
        _
      %p225 = scmp.le.s32.totalorder 1, %s9
      %p226 = scmp.lt.s32.totalorder %s9, 4
      %p227 = pnand %p225, %p226
      %p228 = pneg %p227
      // Predicated region
      $region51: #{hybridsn_forward.10} parent=5 // pred_check
        _
      $region52: #{hybridsn_forward.10} parent=5 // pred_check_branch
        %230 = sbr.rel (%p227) target = $region54
      $region53: #{hybridsn_forward.10} parent=5 // pred_region
        %s231 = ssub.s32 %s9, 1
        %s232 = sand.u32 %s43, 1
        %s233 = sand.u32 %s43, 1
        %s234 = smul.addr %s233, 36
        %s235 = scalar_lea.vmem [#allocation3], %s234
        // Predicated region
        $region55: #{hybridsn_forward.10} parent=53 // pred_check
          %p236 = pneg %p56
        $region56: #{hybridsn_forward.10} parent=53 // pred_check_branch
          %238 = sbr.rel (%p236) target = $region58
        $region57: #{hybridsn_forward.10} parent=53 // pred_region
          _
        $region58: #{hybridsn_forward.10} parent=53 // pred_fallthru
          _
        %s239 = sand.u32 %s43, 1
        %s240 = sand.u32 %s43, 1
        %s241 = smul.addr %s240, 36
        %s242 = scalar_lea.vmem [#allocation3], %s241
        %p243 = pneg %p56
        %p244 = pneg %p53
        %s245 = smul.u32 48, %s21
        %p246 = scmp.lt.s32.totalorder %s245, 143
        %s247 = scalar_select %p246, %s245, 143
        %p248 = scmp.lt.s32.totalorder %s20, 0
        %s249 = scalar_select %p248, %s20, 0
        %s250 = sadd.s32 %s249, %s247
        %s251 = smul.addr %s250, 4
        %s252 = scalar_lea.vmem %s1, %s251
        %p253 = pneg %p84
        %p254 = pneg %p81
        %p255 = scmp.lt.s32.totalorder %s20, 0
        %s256 = scalar_select %p255, %s20, 0
        %s257 = scalar_lea.vmem %s2, %s256
        %p258 = pneg %p110
        %p259 = pneg %p107
        %p260 = pneg %p138
        %p261 = pneg %p135
        %s262 = smul.u32 3, %s19
        %p263 = scmp.lt.s32.totalorder %s262, 2
        %s264 = scalar_select %p263, %s262, 2
        %p265 = scmp.lt.s32.totalorder %s20, 0
        %s266 = scalar_select %p265, %s20, 0
        %s267 = sadd.s32 %s266, %s264
        %s268 = smul.addr %s267, 4
        %s269 = scalar_lea.vmem %s3, %s268
        %s270 = smul.u32 3, %s19
        %s271 = smul.u32 3, %s21
        %s272 = smul.u32 48, %s21
        %p273 = scmp.lt.s32.totalorder %s272, 143
        %s274 = scalar_select %p273, %s272, 143
        %p275 = scmp.lt.s32.totalorder %s20, 0
        %s276 = scalar_select %p275, %s20, 0
        %s277 = sadd.s32 %s276, %s274
        %s278 = smul.addr %s277, 4
        %s279 = scalar_lea.vmem %s1, %s278
        %s280 = smul.u32 48, %s21
        %p281 = scmp.lt.s32.totalorder %s20, 0
        %s282 = scalar_select %p281, %s20, 0
        %s283 = scalar_lea.vmem %s2, %s282
        %s284 = smul.u32 3, %s19
        %p285 = scmp.lt.s32.totalorder %s284, 2
        %s286 = scalar_select %p285, %s284, 2
        %p287 = scmp.lt.s32.totalorder %s20, 0
        %s288 = scalar_select %p287, %s20, 0
        %s289 = sadd.s32 %s288, %s286
        %s290 = smul.addr %s289, 4
        %s291 = scalar_lea.vmem %s3, %s290
        %s292 = smul.u32 3, %s19
        %p294 = scmp.eq.s32.totalorder %s21, 0
        // Predicated region
        $region59: #{hybridsn_forward.10} parent=53 // pred_check
          %p295 = pneg %p294
        $region60: #{hybridsn_forward.10} parent=53 // pred_check_branch
          %297 = sbr.rel (%p295) target = $region62
        $region61: #{hybridsn_forward.10} parent=53 // pred_region
          %298 = vst [vmem:[#allocation2] sm:$0xff] 0.0
          %299 = vst [vmem:[#allocation2 + $0x8] sm:$0xff] 0.0
          %300 = vst [vmem:[#allocation2 + $0x10] sm:$0xff] 0.0
        $region62: #{hybridsn_forward.10} parent=53 // pred_fallthru
          _
        %v301 = vld [vmem:[#allocation2] sm:$0xff]
        %v302 = vld [vmem:[#allocation2 + $0x8] sm:$0xff]
        %v303 = vld [vmem:[#allocation2 + $0x10] sm:$0xff]
        %v304 = vld [vmem:[%s235] sm:$0xff]
        %v305 = vld [vmem:[%s235 + $0x8] sm:$0xf]
        %v306 = vld [vmem:[%s235 + $0xc] sm:$0xff]
        %v307 = vld [vmem:[%s235 + $0x14] sm:$0xf]
        %v308 = vld [vmem:[%s235 + $0x18] sm:$0xff]
        %v309 = vld [vmem:[%s235 + $0x20] sm:$0xf]
        %v310 = vld [vmem:[%s279] sm:$0xf]
        %v311 = vld [vmem:[%s279 + $0x4] sm:$0xf]
        %v312 = vld [vmem:[%s279 + $0x8] sm:$0xf]
        %v313 = vld [vmem:[%s279 + $0xc] sm:$0xf]
        %v314 = vld [vmem:[%s279 + $0x10] sm:$0xf]
        %v315 = vld [vmem:[%s279 + $0x14] sm:$0xf]
        %v316 = vld [vmem:[%s279 + $0x18] sm:$0xf]
        %v317 = vld [vmem:[%s279 + $0x1c] sm:$0xf]
        %v318 = vld [vmem:[%s279 + $0x20] sm:$0xf]
        %v319 = vld [vmem:[%s279 + $0x24] sm:$0xf]
        %v320 = vld [vmem:[%s279 + $0x28] sm:$0xf]
        %v321 = vld [vmem:[%s279 + $0x2c] sm:$0xf]
        %v322 = vld [vmem:[%s279 + $0x30] sm:$0xf]
        %v323 = vld [vmem:[%s279 + $0x34] sm:$0xf]
        %v324 = vld [vmem:[%s279 + $0x38] sm:$0xf]
        %v325 = vld [vmem:[%s279 + $0x3c] sm:$0xf]
        %v326 = vld [vmem:[%s279 + $0x40] sm:$0xf]
        %v327 = vld [vmem:[%s279 + $0x44] sm:$0xf]
        %v328 = vld [vmem:[%s279 + $0x48] sm:$0xf]
        %v329 = vld [vmem:[%s279 + $0x4c] sm:$0xf]
        %v330 = vld [vmem:[%s279 + $0x50] sm:$0xf]
        %v331 = vld [vmem:[%s279 + $0x54] sm:$0xf]
        %v332 = vld [vmem:[%s279 + $0x58] sm:$0xf]
        %v333 = vld [vmem:[%s279 + $0x5c] sm:$0xf]
        %v334 = vld [vmem:[%s279 + $0x60] sm:$0xf]
        %v335 = vld [vmem:[%s279 + $0x64] sm:$0xf]
        %v336 = vld [vmem:[%s279 + $0x68] sm:$0xf]
        %v337 = vld [vmem:[%s279 + $0x6c] sm:$0xf]
        %v338 = vld [vmem:[%s279 + $0x70] sm:$0xf]
        %v339 = vld [vmem:[%s279 + $0x74] sm:$0xf]
        %v340 = vld [vmem:[%s279 + $0x78] sm:$0xf]
        %v341 = vld [vmem:[%s279 + $0x7c] sm:$0xf]
        %v342 = vld [vmem:[%s279 + $0x80] sm:$0xf]
        %v343 = vld [vmem:[%s279 + $0x84] sm:$0xf]
        %v344 = vld [vmem:[%s279 + $0x88] sm:$0xf]
        %v345 = vld [vmem:[%s279 + $0x8c] sm:$0xf]
        %v346 = vld [vmem:[%s279 + $0x90] sm:$0xf]
        %v347 = vld [vmem:[%s279 + $0x94] sm:$0xf]
        %v348 = vld [vmem:[%s279 + $0x98] sm:$0xf]
        %v349 = vld [vmem:[%s279 + $0x9c] sm:$0xf]
        %v350 = vld [vmem:[%s279 + $0xa0] sm:$0xf]
        %v351 = vld [vmem:[%s279 + $0xa4] sm:$0xf]
        %v352 = vld [vmem:[%s279 + $0xa8] sm:$0xf]
        %v353 = vld [vmem:[%s279 + $0xac] sm:$0xf]
        %v354 = vld [vmem:[%s279 + $0xb0] sm:$0xf]
        %v355 = vld [vmem:[%s279 + $0xb4] sm:$0xf]
        %v356 = vld [vmem:[%s279 + $0xb8] sm:$0xf]
        %v357 = vld [vmem:[%s279 + $0xbc] sm:$0xf]
        %v364 = vunpack.c.l.b16 %v304
        %v365 = vunpack.c.h.b16 %v304
        %v366 = vunpack.c.l.b16 %v305
        %v367 = vunpack.c.l.b16 %v306
        %v368 = vunpack.c.h.b16 %v306
        %v369 = vunpack.c.l.b16 %v307
        %v370 = vunpack.c.l.b16 %v308
        %v371 = vunpack.c.h.b16 %v308
        %v372 = vunpack.c.l.b16 %v309
        %v373 = vpack.c.b16 %v367, %v364
        %v374 = vpack.c.b16 %v368, %v365
        %v375 = vpack.c.b16 %v369, %v366
        %v376 = vpack.c.b16 %v370, %v370
        %v377 = vpack.c.b16 %v371, %v371
        %v378 = vpack.c.b16 %v372, %v372
        %v433 = vunpack.c.l.b16 %v310
        %v434 = vunpack.c.l.b16 %v311
        %v435 = vunpack.c.l.b16 %v312
        %v436 = vunpack.c.l.b16 %v313
        %v437 = vunpack.c.l.b16 %v314
        %v438 = vunpack.c.l.b16 %v315
        %v439 = vunpack.c.l.b16 %v316
        %v440 = vunpack.c.l.b16 %v317
        %v441 = vunpack.c.l.b16 %v318
        %v442 = vunpack.c.l.b16 %v319
        %v443 = vunpack.c.l.b16 %v320
        %v444 = vunpack.c.l.b16 %v321
        %v445 = vunpack.c.l.b16 %v322
        %v446 = vunpack.c.l.b16 %v323
        %v447 = vunpack.c.l.b16 %v324
        %v448 = vunpack.c.l.b16 %v325
        %v449 = vunpack.c.l.b16 %v326
        %v450 = vunpack.c.l.b16 %v327
        %v451 = vunpack.c.l.b16 %v328
        %v452 = vunpack.c.l.b16 %v329
        %v453 = vunpack.c.l.b16 %v330
        %v454 = vunpack.c.l.b16 %v331
        %v455 = vunpack.c.l.b16 %v332
        %v456 = vunpack.c.l.b16 %v333
        %v457 = vunpack.c.l.b16 %v334
        %v458 = vunpack.c.l.b16 %v335
        %v459 = vunpack.c.l.b16 %v336
        %v460 = vunpack.c.l.b16 %v337
        %v461 = vunpack.c.l.b16 %v338
        %v462 = vunpack.c.l.b16 %v339
        %v463 = vunpack.c.l.b16 %v340
        %v464 = vunpack.c.l.b16 %v341
        %v465 = vunpack.c.l.b16 %v342
        %v466 = vunpack.c.l.b16 %v343
        %v467 = vunpack.c.l.b16 %v344
        %v468 = vunpack.c.l.b16 %v345
        %v469 = vunpack.c.l.b16 %v346
        %v470 = vunpack.c.l.b16 %v347
        %v471 = vunpack.c.l.b16 %v348
        %v472 = vunpack.c.l.b16 %v349
        %v473 = vunpack.c.l.b16 %v350
        %v474 = vunpack.c.l.b16 %v351
        %v475 = vunpack.c.l.b16 %v352
        %v476 = vunpack.c.l.b16 %v353
        %v477 = vunpack.c.l.b16 %v354
        %v478 = vunpack.c.l.b16 %v355
        %v479 = vunpack.c.l.b16 %v356
        %v480 = vunpack.c.l.b16 %v357
        %v481 = vpack.c.b16 %v434, %v433
        %v482 = vpack.c.b16 %v436, %v435
        %v483 = vpack.c.b16 %v438, %v437
        %v484 = vpack.c.b16 %v440, %v439
        %v485 = vpack.c.b16 %v442, %v441
        %v486 = vpack.c.b16 %v444, %v443
        %v487 = vpack.c.b16 %v446, %v445
        %v488 = vpack.c.b16 %v448, %v447
        %v489 = vpack.c.b16 %v450, %v449
        %v490 = vpack.c.b16 %v452, %v451
        %v491 = vpack.c.b16 %v454, %v453
        %v492 = vpack.c.b16 %v456, %v455
        %v493 = vpack.c.b16 %v458, %v457
        %v494 = vpack.c.b16 %v460, %v459
        %v495 = vpack.c.b16 %v462, %v461
        %v496 = vpack.c.b16 %v464, %v463
        %v497 = vpack.c.b16 %v466, %v465
        %v498 = vpack.c.b16 %v468, %v467
        %v499 = vpack.c.b16 %v470, %v469
        %v500 = vpack.c.b16 %v472, %v471
        %v501 = vpack.c.b16 %v474, %v473
        %v502 = vpack.c.b16 %v476, %v475
        %v503 = vpack.c.b16 %v478, %v477
        %v504 = vpack.c.b16 %v480, %v479
        %529 = vmatprep.subr.bf16.mxu0 0
        %530 = vmatpush1.bf16.msra.mxu0 %v488
        %531 = vmatprep.subr.bf16.mxu0 0
        %532 = vmatpush1.bf16.msra.mxu0 %v487
        %533 = vmatprep.subr.bf16.mxu0 0
        %534 = vmatpush1.bf16.msra.mxu0 %v486
        %535 = vmatprep.subr.bf16.mxu0 0
        %536 = vmatpush1.bf16.msra.mxu0 %v485
        %537 = vmatprep.subr.bf16.mxu0 0
        %538 = vmatpush1.bf16.msra.mxu0 %v484
        %539 = vmatprep.subr.bf16.mxu0 0
        %540 = vmatpush1.bf16.msra.mxu0 %v483
        %541 = vmatprep.subr.bf16.mxu0 0
        %542 = vmatpush1.bf16.msra.mxu0 %v482
        %543 = vmatprep.subr.bf16.mxu0 0
        %544 = vmatpush1.bf16.msra.mxu0 %v481
        %545 = vmatprep.subr.bf16.mxu0 0
        %546 = vmatpush2.bf16.msra.mxu0 %v496
        %547 = vmatprep.subr.bf16.mxu0 0
        %548 = vmatpush2.bf16.msra.mxu0 %v495
        %549 = vmatprep.subr.bf16.mxu0 0
        %550 = vmatpush2.bf16.msra.mxu0 %v494
        %551 = vmatprep.subr.bf16.mxu0 0
        %552 = vmatpush2.bf16.msra.mxu0 %v493
        %553 = vmatprep.subr.bf16.mxu0 0
        %554 = vmatpush2.bf16.msra.mxu0 %v492
        %555 = vmatprep.subr.bf16.mxu0 0
        %556 = vmatpush2.bf16.msra.mxu0 %v491
        %557 = vmatprep.subr.bf16.mxu0 0
        %558 = vmatpush2.bf16.msra.mxu0 %v490
        %559 = vmatprep.subr.bf16.mxu0 0
        %560 = vmatpush2.bf16.msra.mxu0 %v489
        %561 = vmatprep.mubr.bf16.mxu0 %v374
        %562 = vmatmul.mubr.bf16.gmra.mxu0 %v373
        %v563 = vpop.f32.mrf.mxu0
        %v564 = vadd.f32 0.0, %v563
        %v565 = vpop.f32.mrf.mxu0
        %v566 = vpop.f32.mrf.mxu0
        %v567 = vadd.f32 0.0, %v566
        %v568 = vpop.f32.mrf.mxu0
        %569 = vmatprep.mubr.bf16.mxu0 %v377
        %570 = vmatmul.mubr.bf16.gmra.mxu0 %v376
        %v571 = vpop.f32.mrf.mxu0
        %v572 = vadd.f32 0.0, %v571
        %v573 = vpop.f32.mrf.mxu0
        %v574 = vpop.f32.mrf.mxu0
        %v575 = vpop.f32.mrf.mxu0
        %576 = vdwg.mxu0
        %577 = vmatprep.subr.bf16.mxu0 0
        %578 = vmatpush1.bf16.msra.mxu0 %v504
        %579 = vmatprep.subr.bf16.mxu0 0
        %580 = vmatpush1.bf16.msra.mxu0 %v503
        %581 = vmatprep.subr.bf16.mxu0 0
        %582 = vmatpush1.bf16.msra.mxu0 %v502
        %583 = vmatprep.subr.bf16.mxu0 0
        %584 = vmatpush1.bf16.msra.mxu0 %v501
        %585 = vmatprep.subr.bf16.mxu0 0
        %586 = vmatpush1.bf16.msra.mxu0 %v500
        %587 = vmatprep.subr.bf16.mxu0 0
        %588 = vmatpush1.bf16.msra.mxu0 %v499
        %589 = vmatprep.subr.bf16.mxu0 0
        %590 = vmatpush1.bf16.msra.mxu0 %v498
        %591 = vmatprep.subr.bf16.mxu0 0
        %592 = vmatpush1.bf16.msra.mxu0 %v497
        %593 = vmatprep.subr.bf16.mxu0 0
        %594 = vmatpush2.bf16.msra.mxu0 0
        %595 = vmatprep.subr.bf16.mxu0 0
        %596 = vmatpush2.bf16.msra.mxu0 0
        %597 = vmatprep.subr.bf16.mxu0 0
        %598 = vmatpush2.bf16.msra.mxu0 0
        %599 = vmatprep.subr.bf16.mxu0 0
        %600 = vmatpush2.bf16.msra.mxu0 0
        %601 = vmatprep.subr.bf16.mxu0 0
        %602 = vmatpush2.bf16.msra.mxu0 0
        %603 = vmatprep.subr.bf16.mxu0 0
        %604 = vmatpush2.bf16.msra.mxu0 0
        %605 = vmatprep.subr.bf16.mxu0 0
        %606 = vmatpush2.bf16.msra.mxu0 0
        %607 = vmatprep.subr.bf16.mxu0 0
        %608 = vmatpush2.bf16.msra.mxu0 0
        %609 = vmatprep.mubr.bf16.mxu0 0
        %610 = vmatmul.mubr.bf16.gmra.mxu0 %v375
        %v611 = vpop.f32.mrf.mxu0
        %v612 = vadd.f32 %v564, %v611
        %v613 = vpop.f32.mrf.mxu0
        %v614 = vpop.f32.mrf.mxu0
        %v615 = vadd.f32 %v567, %v614
        %v616 = vpop.f32.mrf.mxu0
        %617 = vmatprep.mubr.bf16.mxu0 0
        %618 = vmatmul.mubr.bf16.gmra.mxu0 %v378
        %v619 = vpop.f32.mrf.mxu0
        %v620 = vadd.f32 %v572, %v619
        %v621 = vpop.f32.mrf.mxu0
        %v622 = vpop.f32.mrf.mxu0
        %v623 = vpop.f32.mrf.mxu0
        %624 = vdwg.mxu0
        %v625 = vadd.f32 %v301, %v612
        %v626 = vadd.f32 %v302, %v615
        %v627 = vadd.f32 %v303, %v620
        %628 = vst [vmem:[#allocation2] sm:$0xff] %v625
        %629 = vst [vmem:[#allocation2 + $0x8] sm:$0xff] %v626
        %630 = vst [vmem:[#allocation2 + $0x10] sm:$0xff] %v627
        %p631 = scmp.eq.s32.totalorder %s21, 2
        // Predicated region
        $region63: #{hybridsn_forward.10} parent=53 // pred_check
          %p632 = pneg %p631
        $region64: #{hybridsn_forward.10} parent=53 // pred_check_branch
          %634 = sbr.rel (%p632) target = $region66
        $region65: #{hybridsn_forward.10} parent=53 // pred_region
          %v635 = vld [vmem:[#allocation2] sm:$0xff]
          %v636 = vld [vmem:[#allocation2 + $0x8] sm:$0xff]
          %v637 = vld [vmem:[#allocation2 + $0x10] sm:$0xff]
          %v638 = vld [vmem:[%s283] sm:$0x1]
          %v640 = vlaneseq
          %v641 = vshrl.u32 %v640, 7
          %v642 = vsub.s32 0, %v641
          %v643 = vrot.slane %v638, %v642
          %v645 = vadd.f32 %v635, %v643
          %v646 = vadd.f32 %v636, %v643
          %v647 = vadd.f32 %v637, %v643
          %v648 = vmax.f32 %v645, 0.0
          %v649 = vmax.f32 %v646, 0.0
          %v650 = vmax.f32 %v647, 0.0
          %v651 = vpack.c.bf16 %v649, %v648
          %v652 = vpack.c.bf16 %v650, %v650
          %v655 = vunpack.c.l.b16 %v651
          %v656 = vunpack.c.h.b16 %v651
          %v657 = vunpack.c.l.b16 %v652
          %v658 = vpack.c.b16 %v655, %v655
          %v659 = vpack.c.b16 %v656, %v656
          %v660 = vpack.c.b16 %v657, %v657
          %664 = vst [vmem:[%s291] sm:$0xf] %v658
          %665 = vst [vmem:[%s291 + $0x4] sm:$0xf] %v659
          %666 = vst [vmem:[%s291 + $0x8] sm:$0xf] %v660
        $region66: #{hybridsn_forward.10} parent=53 // pred_fallthru
          _
        %s667 = smul.u32 3, %s19
        %p668 = scmp.lt.s32.totalorder %s667, 2
        %s669 = scalar_select %p668, %s667, 2
        %p670 = scmp.lt.s32.totalorder %s20, 0
        %s671 = scalar_select %p670, %s20, 0
        %s672 = sadd.s32 %s671, %s669
        %s673 = smul.addr %s672, 4
        %s674 = scalar_lea.vmem %s3, %s673
        // Predicated region
        $region67: #{hybridsn_forward.10} parent=53 // pred_check
          %p675 = pneg %p135
        $region68: #{hybridsn_forward.10} parent=53 // pred_check_branch
          %677 = sbr.rel (%p675) target = $region70
        $region69: #{hybridsn_forward.10} parent=53 // pred_region
          %s678 = smul.u32 3, %s19
        $region70: #{hybridsn_forward.10} parent=53 // pred_fallthru
          _
        // Predicated region
        $region71: #{hybridsn_forward.10} parent=53 // pred_check
          %p679 = pneg %p135
        $region72: #{hybridsn_forward.10} parent=53 // pred_check_branch
          %681 = sbr.rel (%p679) target = $region74
        $region73: #{hybridsn_forward.10} parent=53 // pred_region
          %s682 = smul.u32 3, %s19
          %p683 = scmp.lt.s32.totalorder %s682, 2
          %s684 = scalar_select %p683, %s682, 2
          %p685 = scmp.lt.s32.totalorder %s20, 0
          %s686 = scalar_select %p685, %s20, 0
          %s687 = sadd.s32 %s686, %s684
          %s688 = smul.addr %s687, 4
          %s689 = scalar_lea.vmem %s3, %s688
        $region74: #{hybridsn_forward.10} parent=53 // pred_fallthru
          _
      $region54: #{hybridsn_forward.10} parent=5 // pred_fallthru
        _
      %p690 = scmp.le.s32.totalorder 2, %s9
      // Predicated region
      $region75: #{hybridsn_forward.10} parent=5 // pred_check
        %p691 = pneg %p690
      $region76: #{hybridsn_forward.10} parent=5 // pred_check_branch
        %693 = sbr.rel (%p691) target = $region78
      $region77: #{hybridsn_forward.10} parent=5 // pred_region
        %s694 = ssub.s32 %s9, 2
      $region78: #{hybridsn_forward.10} parent=5 // pred_fallthru
        _
    $region6: #{hybridsn_forward.10} parent=1 // loop_footer
      %s13 = sadd.s32 1, %s9
    $region7: #{hybridsn_forward.10} parent=1 // loop_footer_branch
      %8 = sbr.rel target = $region3
    $region8: #{hybridsn_forward.10} parent=1 // loop_exit
      _

// kernel: hybridsn_forward.11
$region0: #{hybridsn_forward.11}
  #allocation0 [shape = 'u32[]', space=smem, size = 0x4, offset = 0x4, fixed_abs, tag = 'smem constant byte address 0x4 - core index']
  #allocation1 [shape = 'u32[144,128]{1,0:T(1,128)}', space=vmem, size = 0x12000, scoped, tag = 'internal scratch']
  %s0 = inlined_call_operand.vmem [shape: bf16[8,640], index: 0, kind: input, shape index: {}]
  %s1 = inlined_call_operand.vmem [shape: bf16[640,256], index: 1, kind: input, shape index: {}]
  %s2 = inlined_call_operand.vmem [shape: f32[1,256], index: 2, kind: input, shape index: {}]
  %s3 = inlined_call_operand.vmem [shape: bf16[8,256], index: 3, kind: output, shape index: {}]
  %s4 = sld [smem:[#allocation0]]
  $region22: #{hybridsn_forward.11} parent=0
    _
  %s6 = ssub.s32 1, %s4
  %s7 = scalar_select 0, %s6, %s4
  // Predicated region
  $region2: #{hybridsn_forward.11} parent=0 // pred_check
    _
  $region3: #{hybridsn_forward.11} parent=0 // pred_check_branch
    %9 = sbr.rel (0) target = $region5
  $region4: #{hybridsn_forward.11} parent=0 // pred_region
    _
  $region5: #{hybridsn_forward.11} parent=0 // pred_fallthru
    _
  // Predicated region
  $region6: #{hybridsn_forward.11} parent=0 // pred_check
    _
  $region7: #{hybridsn_forward.11} parent=0 // pred_check_branch
    %11 = sbr.rel (0) target = $region9
  $region8: #{hybridsn_forward.11} parent=0 // pred_region
    _
  $region9: #{hybridsn_forward.11} parent=0 // pred_fallthru
    _
  // Predicated region
  $region10: #{hybridsn_forward.11} parent=0 // pred_check
    _
  $region11: #{hybridsn_forward.11} parent=0 // pred_check_branch
    %13 = sbr.rel (0) target = $region13
  $region12: #{hybridsn_forward.11} parent=0 // pred_region
    _
  $region13: #{hybridsn_forward.11} parent=0 // pred_fallthru
    _
  %v15 = vld [vmem:[%s0] sm:$0xff]
  %v16 = vld [vmem:[%s0 + $0x8] sm:$0xff]
  %v17 = vld [vmem:[%s0 + $0x10] sm:$0xf]
  %v18 = vld [vmem:[%s1] sm:$0xff]
  %v19 = vld [vmem:[%s1 + $0x8] sm:$0xff]
  %v20 = vld [vmem:[%s1 + $0x10] sm:$0xff]
  %v21 = vld [vmem:[%s1 + $0x18] sm:$0xff]
  %v22 = vld [vmem:[%s1 + $0x20] sm:$0xff]
  %v23 = vld [vmem:[%s1 + $0x28] sm:$0xff]
  %v24 = vld [vmem:[%s1 + $0x30] sm:$0xff]
  %v25 = vld [vmem:[%s1 + $0x38] sm:$0xff]
  %v26 = vld [vmem:[%s1 + $0x40] sm:$0xff]
  %v27 = vld [vmem:[%s1 + $0x48] sm:$0xff]
  %v28 = vld [vmem:[%s1 + $0x50] sm:$0xff]
  %v29 = vld [vmem:[%s1 + $0x58] sm:$0xff]
  %v30 = vld [vmem:[%s1 + $0x60] sm:$0xff]
  %v31 = vld [vmem:[%s1 + $0x68] sm:$0xff]
  %v32 = vld [vmem:[%s1 + $0x70] sm:$0xff]
  %v33 = vld [vmem:[%s1 + $0x78] sm:$0xff]
  %v34 = vld [vmem:[%s1 + $0x80] sm:$0xff]
  %v35 = vld [vmem:[%s1 + $0x88] sm:$0xff]
  %v36 = vld [vmem:[%s1 + $0x90] sm:$0xff]
  %v37 = vld [vmem:[%s1 + $0x98] sm:$0xff]
  %v38 = vld [vmem:[%s1 + $0xa0] sm:$0xff]
  %v39 = vld [vmem:[%s1 + $0xa8] sm:$0xff]
  %v40 = vld [vmem:[%s1 + $0xb0] sm:$0xff]
  %v41 = vld [vmem:[%s1 + $0xb8] sm:$0xff]
  %v42 = vld [vmem:[%s1 + $0xc0] sm:$0xff]
  %v43 = vld [vmem:[%s1 + $0xc8] sm:$0xff]
  %v44 = vld [vmem:[%s1 + $0xd0] sm:$0xff]
  %v45 = vld [vmem:[%s1 + $0xd8] sm:$0xff]
  %v46 = vld [vmem:[%s1 + $0xe0] sm:$0xff]
  %v47 = vld [vmem:[%s1 + $0xe8] sm:$0xff]
  %v48 = vld [vmem:[%s1 + $0xf0] sm:$0xff]
  %v49 = vld [vmem:[%s1 + $0xf8] sm:$0xff]
  %v50 = vld [vmem:[%s1 + $0x100] sm:$0xff]
  %v51 = vld [vmem:[%s1 + $0x108] sm:$0xff]
  %v52 = vld [vmem:[%s1 + $0x110] sm:$0xff]
  %v53 = vld [vmem:[%s1 + $0x118] sm:$0xff]
  %v54 = vld [vmem:[%s1 + $0x120] sm:$0xff]
  %v55 = vld [vmem:[%s1 + $0x128] sm:$0xff]
  %v56 = vld [vmem:[%s1 + $0x130] sm:$0xff]
  %v57 = vld [vmem:[%s1 + $0x138] sm:$0xff]
  %v58 = vld [vmem:[%s1 + $0x140] sm:$0xff]
  %v59 = vld [vmem:[%s1 + $0x148] sm:$0xff]
  %v60 = vld [vmem:[%s1 + $0x150] sm:$0xff]
  %v61 = vld [vmem:[%s1 + $0x158] sm:$0xff]
  %v62 = vld [vmem:[%s1 + $0x160] sm:$0xff]
  %v63 = vld [vmem:[%s1 + $0x168] sm:$0xff]
  %v64 = vld [vmem:[%s1 + $0x170] sm:$0xff]
  %v65 = vld [vmem:[%s1 + $0x178] sm:$0xff]
  %v66 = vld [vmem:[%s1 + $0x180] sm:$0xff]
  %v67 = vld [vmem:[%s1 + $0x188] sm:$0xff]
  %v68 = vld [vmem:[%s1 + $0x190] sm:$0xff]
  %v69 = vld [vmem:[%s1 + $0x198] sm:$0xff]
  %v70 = vld [vmem:[%s1 + $0x1a0] sm:$0xff]
  %v71 = vld [vmem:[%s1 + $0x1a8] sm:$0xff]
  %v72 = vld [vmem:[%s1 + $0x1b0] sm:$0xff]
  %v73 = vld [vmem:[%s1 + $0x1b8] sm:$0xff]
  %v74 = vld [vmem:[%s1 + $0x1c0] sm:$0xff]
  %v75 = vld [vmem:[%s1 + $0x1c8] sm:$0xff]
  %v76 = vld [vmem:[%s1 + $0x1d0] sm:$0xff]
  %v77 = vld [vmem:[%s1 + $0x1d8] sm:$0xff]
  %v78 = vld [vmem:[%s1 + $0x1e0] sm:$0xff]
  %v79 = vld [vmem:[%s1 + $0x1e8] sm:$0xff]
  %v80 = vld [vmem:[%s1 + $0x1f0] sm:$0xff]
  %v81 = vld [vmem:[%s1 + $0x1f8] sm:$0xff]
  %v82 = vld [vmem:[%s1 + $0x200] sm:$0xff]
  %v83 = vld [vmem:[%s1 + $0x208] sm:$0xff]
  %v84 = vld [vmem:[%s1 + $0x210] sm:$0xff]
  %v85 = vld [vmem:[%s1 + $0x218] sm:$0xff]
  %v86 = vld [vmem:[%s1 + $0x220] sm:$0xff]
  %v87 = vld [vmem:[%s1 + $0x228] sm:$0xff]
  %v88 = vld [vmem:[%s1 + $0x230] sm:$0xff]
  %v89 = vld [vmem:[%s1 + $0x238] sm:$0xff]
  %v90 = vld [vmem:[%s1 + $0x240] sm:$0xff]
  %v91 = vld [vmem:[%s1 + $0x248] sm:$0xff]
  %v92 = vld [vmem:[%s1 + $0x250] sm:$0xff]
  %v93 = vld [vmem:[%s1 + $0x258] sm:$0xff]
  %v94 = vld [vmem:[%s1 + $0x260] sm:$0xff]
  %v95 = vld [vmem:[%s1 + $0x268] sm:$0xff]
  %v96 = vld [vmem:[%s1 + $0x270] sm:$0xff]
  %v97 = vld [vmem:[%s1 + $0x278] sm:$0xff]
  %v98 = vld [vmem:[%s2] sm:$0x3]
  %v100 = vlaneseq
  %v101 = vshrl.u32 %v100, 7
  %v102 = vsub.s32 0, %v101
  %v103 = vrot.slane %v98, %v102
  %v104 = vlaneseq
  %v105 = vshrl.u32 %v104, 7
  %v106 = vsub.s32 1, %v105
  %v107 = vrot.slane %v98, %v106
  %v113 = vunpack.c.l.b16 %v15
  %v114 = vunpack.c.h.b16 %v15
  %v115 = vunpack.c.l.b16 %v16
  %v116 = vunpack.c.h.b16 %v16
  %v117 = vunpack.c.l.b16 %v17
  %v118 = vpack.c.b16 %v113, %v113
  %v119 = vpack.c.b16 %v114, %v114
  %v120 = vpack.c.b16 %v115, %v115
  %v121 = vpack.c.b16 %v116, %v116
  %v122 = vpack.c.b16 %v117, %v117
  %v208 = vunpack.c.l.b16 %v18
  %v209 = vunpack.c.h.b16 %v18
  %v210 = vunpack.c.l.b16 %v19
  %v211 = vunpack.c.h.b16 %v19
  %v212 = vunpack.c.l.b16 %v20
  %v213 = vunpack.c.h.b16 %v20
  %v214 = vunpack.c.l.b16 %v21
  %v215 = vunpack.c.h.b16 %v21
  %v216 = vunpack.c.l.b16 %v22
  %v217 = vunpack.c.h.b16 %v22
  %v218 = vunpack.c.l.b16 %v23
  %v219 = vunpack.c.h.b16 %v23
  %v220 = vunpack.c.l.b16 %v24
  %v221 = vunpack.c.h.b16 %v24
  %v222 = vunpack.c.l.b16 %v25
  %v223 = vunpack.c.h.b16 %v25
  %v224 = vunpack.c.l.b16 %v26
  %v225 = vunpack.c.h.b16 %v26
  %v226 = vunpack.c.l.b16 %v27
  %v227 = vunpack.c.h.b16 %v27
  %v228 = vunpack.c.l.b16 %v28
  %v229 = vunpack.c.h.b16 %v28
  %v230 = vunpack.c.l.b16 %v29
  %v231 = vunpack.c.h.b16 %v29
  %v232 = vunpack.c.l.b16 %v30
  %v233 = vunpack.c.h.b16 %v30
  %v234 = vunpack.c.l.b16 %v31
  %v235 = vunpack.c.h.b16 %v31
  %v236 = vunpack.c.l.b16 %v32
  %v237 = vunpack.c.h.b16 %v32
  %v238 = vunpack.c.l.b16 %v33
  %v239 = vunpack.c.h.b16 %v33
  %v240 = vunpack.c.l.b16 %v34
  %v241 = vunpack.c.h.b16 %v34
  %v242 = vunpack.c.l.b16 %v35
  %v243 = vunpack.c.h.b16 %v35
  %v244 = vunpack.c.l.b16 %v36
  %v245 = vunpack.c.h.b16 %v36
  %v246 = vunpack.c.l.b16 %v37
  %v247 = vunpack.c.h.b16 %v37
  %v248 = vunpack.c.l.b16 %v38
  %v249 = vunpack.c.h.b16 %v38
  %v250 = vunpack.c.l.b16 %v39
  %v251 = vunpack.c.h.b16 %v39
  %v252 = vunpack.c.l.b16 %v40
  %v253 = vunpack.c.h.b16 %v40
  %v254 = vunpack.c.l.b16 %v41
  %v255 = vunpack.c.h.b16 %v41
  %v256 = vunpack.c.l.b16 %v42
  %v257 = vunpack.c.h.b16 %v42
  %v258 = vunpack.c.l.b16 %v43
  %v259 = vunpack.c.h.b16 %v43
  %v260 = vunpack.c.l.b16 %v44
  %v261 = vunpack.c.h.b16 %v44
  %v262 = vunpack.c.l.b16 %v45
  %v263 = vunpack.c.h.b16 %v45
  %v264 = vunpack.c.l.b16 %v46
  %v265 = vunpack.c.h.b16 %v46
  %v266 = vunpack.c.l.b16 %v47
  %v267 = vunpack.c.h.b16 %v47
  %v268 = vunpack.c.l.b16 %v48
  %v269 = vunpack.c.h.b16 %v48
  %v270 = vunpack.c.l.b16 %v49
  %v271 = vunpack.c.h.b16 %v49
  %v272 = vunpack.c.l.b16 %v50
  %v273 = vunpack.c.h.b16 %v50
  %v274 = vunpack.c.l.b16 %v51
  %v275 = vunpack.c.h.b16 %v51
  %v276 = vunpack.c.l.b16 %v52
  %v277 = vunpack.c.h.b16 %v52
  %v278 = vunpack.c.l.b16 %v53
  %v279 = vunpack.c.h.b16 %v53
  %v280 = vunpack.c.l.b16 %v54
  %v281 = vunpack.c.h.b16 %v54
  %v282 = vunpack.c.l.b16 %v55
  %v283 = vunpack.c.h.b16 %v55
  %v284 = vunpack.c.l.b16 %v56
  %v285 = vunpack.c.h.b16 %v56
  %v286 = vunpack.c.l.b16 %v57
  %v287 = vunpack.c.h.b16 %v57
  %v288 = vunpack.c.l.b16 %v58
  %v289 = vunpack.c.h.b16 %v58
  %v290 = vunpack.c.l.b16 %v59
  %v291 = vunpack.c.h.b16 %v59
  %v292 = vunpack.c.l.b16 %v60
  %v293 = vunpack.c.h.b16 %v60
  %v294 = vunpack.c.l.b16 %v61
  %v295 = vunpack.c.h.b16 %v61
  %v296 = vunpack.c.l.b16 %v62
  %v297 = vunpack.c.h.b16 %v62
  %v298 = vunpack.c.l.b16 %v63
  %v299 = vunpack.c.h.b16 %v63
  %v300 = vunpack.c.l.b16 %v64
  %v301 = vunpack.c.h.b16 %v64
  %v302 = vunpack.c.l.b16 %v65
  %v303 = vunpack.c.h.b16 %v65
  %v304 = vunpack.c.l.b16 %v66
  %v305 = vunpack.c.h.b16 %v66
  %v306 = vunpack.c.l.b16 %v67
  %v307 = vunpack.c.h.b16 %v67
  %v308 = vunpack.c.l.b16 %v68
  %v309 = vunpack.c.h.b16 %v68
  %v310 = vunpack.c.l.b16 %v69
  %v311 = vunpack.c.h.b16 %v69
  %v312 = vunpack.c.l.b16 %v70
  %v313 = vunpack.c.h.b16 %v70
  %v314 = vunpack.c.l.b16 %v71
  %v315 = vunpack.c.h.b16 %v71
  %v316 = vunpack.c.l.b16 %v72
  %v317 = vunpack.c.h.b16 %v72
  %v318 = vunpack.c.l.b16 %v73
  %v319 = vunpack.c.h.b16 %v73
  %v320 = vunpack.c.l.b16 %v74
  %v321 = vunpack.c.h.b16 %v74
  %v322 = vunpack.c.l.b16 %v75
  %v323 = vunpack.c.h.b16 %v75
  %v324 = vunpack.c.l.b16 %v76
  %v325 = vunpack.c.h.b16 %v76
  %v326 = vunpack.c.l.b16 %v77
  %v327 = vunpack.c.h.b16 %v77
  %v328 = vunpack.c.l.b16 %v78
  %v329 = vunpack.c.h.b16 %v78
  %v330 = vunpack.c.l.b16 %v79
  %v331 = vunpack.c.h.b16 %v79
  %v332 = vunpack.c.l.b16 %v80
  %v333 = vunpack.c.h.b16 %v80
  %v334 = vunpack.c.l.b16 %v81
  %v335 = vunpack.c.h.b16 %v81
  %v336 = vunpack.c.l.b16 %v82
  %v337 = vunpack.c.h.b16 %v82
  %v338 = vunpack.c.l.b16 %v83
  %v339 = vunpack.c.h.b16 %v83
  %v340 = vunpack.c.l.b16 %v84
  %v341 = vunpack.c.h.b16 %v84
  %v342 = vunpack.c.l.b16 %v85
  %v343 = vunpack.c.h.b16 %v85
  %v344 = vunpack.c.l.b16 %v86
  %v345 = vunpack.c.h.b16 %v86
  %v346 = vunpack.c.l.b16 %v87
  %v347 = vunpack.c.h.b16 %v87
  %v348 = vunpack.c.l.b16 %v88
  %v349 = vunpack.c.h.b16 %v88
  %v350 = vunpack.c.l.b16 %v89
  %v351 = vunpack.c.h.b16 %v89
  %v352 = vunpack.c.l.b16 %v90
  %v353 = vunpack.c.h.b16 %v90
  %v354 = vunpack.c.l.b16 %v91
  %v355 = vunpack.c.h.b16 %v91
  %v356 = vunpack.c.l.b16 %v92
  %v357 = vunpack.c.h.b16 %v92
  %v358 = vunpack.c.l.b16 %v93
  %v359 = vunpack.c.h.b16 %v93
  %v360 = vunpack.c.l.b16 %v94
  %v361 = vunpack.c.h.b16 %v94
  %v362 = vunpack.c.l.b16 %v95
  %v363 = vunpack.c.h.b16 %v95
  %v364 = vunpack.c.l.b16 %v96
  %v365 = vunpack.c.h.b16 %v96
  %v366 = vunpack.c.l.b16 %v97
  %v367 = vunpack.c.h.b16 %v97
  %v368 = vpack.c.b16 %v210, %v208
  %v369 = vpack.c.b16 %v211, %v209
  %v370 = vpack.c.b16 %v214, %v212
  %v371 = vpack.c.b16 %v215, %v213
  %v372 = vpack.c.b16 %v218, %v216
  %v373 = vpack.c.b16 %v219, %v217
  %v374 = vpack.c.b16 %v222, %v220
  %v375 = vpack.c.b16 %v223, %v221
  %v376 = vpack.c.b16 %v226, %v224
  %v377 = vpack.c.b16 %v227, %v225
  %v378 = vpack.c.b16 %v230, %v228
  %v379 = vpack.c.b16 %v231, %v229
  %v380 = vpack.c.b16 %v234, %v232
  %v381 = vpack.c.b16 %v235, %v233
  %v382 = vpack.c.b16 %v238, %v236
  %v383 = vpack.c.b16 %v239, %v237
  %v384 = vpack.c.b16 %v242, %v240
  %v385 = vpack.c.b16 %v243, %v241
  %v386 = vpack.c.b16 %v246, %v244
  %v387 = vpack.c.b16 %v247, %v245
  %v388 = vpack.c.b16 %v250, %v248
  %v389 = vpack.c.b16 %v251, %v249
  %v390 = vpack.c.b16 %v254, %v252
  %v391 = vpack.c.b16 %v255, %v253
  %v392 = vpack.c.b16 %v258, %v256
  %v393 = vpack.c.b16 %v259, %v257
  %v394 = vpack.c.b16 %v262, %v260
  %v395 = vpack.c.b16 %v263, %v261
  %v396 = vpack.c.b16 %v266, %v264
  %v397 = vpack.c.b16 %v267, %v265
  %v398 = vpack.c.b16 %v270, %v268
  %v399 = vpack.c.b16 %v271, %v269
  %v400 = vpack.c.b16 %v274, %v272
  %v401 = vpack.c.b16 %v275, %v273
  %v402 = vpack.c.b16 %v278, %v276
  %v403 = vpack.c.b16 %v279, %v277
  %v404 = vpack.c.b16 %v282, %v280
  %v405 = vpack.c.b16 %v283, %v281
  %v406 = vpack.c.b16 %v286, %v284
  %v407 = vpack.c.b16 %v287, %v285
  %v408 = vpack.c.b16 %v290, %v288
  %v409 = vpack.c.b16 %v291, %v289
  %v410 = vpack.c.b16 %v294, %v292
  %v411 = vpack.c.b16 %v295, %v293
  %v412 = vpack.c.b16 %v298, %v296
  %v413 = vpack.c.b16 %v299, %v297
  %v414 = vpack.c.b16 %v302, %v300
  %v415 = vpack.c.b16 %v303, %v301
  %v416 = vpack.c.b16 %v306, %v304
  %v417 = vpack.c.b16 %v307, %v305
  %v418 = vpack.c.b16 %v310, %v308
  %v419 = vpack.c.b16 %v311, %v309
  %v420 = vpack.c.b16 %v314, %v312
  %v421 = vpack.c.b16 %v315, %v313
  %v422 = vpack.c.b16 %v318, %v316
  %v423 = vpack.c.b16 %v319, %v317
  %v424 = vpack.c.b16 %v322, %v320
  %v425 = vpack.c.b16 %v323, %v321
  %v426 = vpack.c.b16 %v326, %v324
  %v427 = vpack.c.b16 %v327, %v325
  %v428 = vpack.c.b16 %v330, %v328
  %v429 = vpack.c.b16 %v331, %v329
  %v430 = vpack.c.b16 %v334, %v332
  %v431 = vpack.c.b16 %v335, %v333
  %v432 = vpack.c.b16 %v338, %v336
  %v433 = vpack.c.b16 %v339, %v337
  %v434 = vpack.c.b16 %v342, %v340
  %v435 = vpack.c.b16 %v343, %v341
  %v436 = vpack.c.b16 %v346, %v344
  %v437 = vpack.c.b16 %v347, %v345
  %v438 = vpack.c.b16 %v350, %v348
  %v439 = vpack.c.b16 %v351, %v349
  %v440 = vpack.c.b16 %v354, %v352
  %v441 = vpack.c.b16 %v355, %v353
  %v442 = vpack.c.b16 %v358, %v356
  %v443 = vpack.c.b16 %v359, %v357
  %v444 = vpack.c.b16 %v362, %v360
  %v445 = vpack.c.b16 %v363, %v361
  %v446 = vpack.c.b16 %v366, %v364
  %v447 = vpack.c.b16 %v367, %v365
  %528 = vmatprep.subr.bf16.mxu0 %v383
  %529 = vmatpush1.bf16.msra.mxu0 %v382
  %530 = vmatprep.subr.bf16.mxu0 %v381
  %531 = vmatpush1.bf16.msra.mxu0 %v380
  %532 = vmatprep.subr.bf16.mxu0 %v379
  %533 = vmatpush1.bf16.msra.mxu0 %v378
  %534 = vmatprep.subr.bf16.mxu0 %v377
  %535 = vmatpush1.bf16.msra.mxu0 %v376
  %536 = vmatprep.subr.bf16.mxu0 %v375
  %537 = vmatpush1.bf16.msra.mxu0 %v374
  %538 = vmatprep.subr.bf16.mxu0 %v373
  %539 = vmatpush1.bf16.msra.mxu0 %v372
  %540 = vmatprep.subr.bf16.mxu0 %v371
  %541 = vmatpush1.bf16.msra.mxu0 %v370
  %542 = vmatprep.subr.bf16.mxu0 %v369
  %543 = vmatpush1.bf16.msra.mxu0 %v368
  %544 = vmatprep.subr.bf16.mxu0 %v399
  %545 = vmatpush2.bf16.msra.mxu0 %v398
  %546 = vmatprep.subr.bf16.mxu0 %v397
  %547 = vmatpush2.bf16.msra.mxu0 %v396
  %548 = vmatprep.subr.bf16.mxu0 %v395
  %549 = vmatpush2.bf16.msra.mxu0 %v394
  %550 = vmatprep.subr.bf16.mxu0 %v393
  %551 = vmatpush2.bf16.msra.mxu0 %v392
  %552 = vmatprep.subr.bf16.mxu0 %v391
  %553 = vmatpush2.bf16.msra.mxu0 %v390
  %554 = vmatprep.subr.bf16.mxu0 %v389
  %555 = vmatpush2.bf16.msra.mxu0 %v388
  %556 = vmatprep.subr.bf16.mxu0 %v387
  %557 = vmatpush2.bf16.msra.mxu0 %v386
  %558 = vmatprep.subr.bf16.mxu0 %v385
  %559 = vmatpush2.bf16.msra.mxu0 %v384
  %560 = vmatprep.mubr.bf16.mxu0 %v119
  %561 = vmatmul.mubr.bf16.gmra.mxu0 %v118
  %v562 = vpop.f32.mrf.mxu0
  %v563 = vadd.f32 %v103, %v562
  %v564 = vpop.f32.mrf.mxu0
  %v565 = vadd.f32 %v107, %v564
  %v566 = vpop.f32.mrf.mxu0
  %v567 = vpop.f32.mrf.mxu0
  %568 = vdwg.mxu0
  %569 = vmatprep.subr.bf16.mxu0 %v415
  %570 = vmatpush1.bf16.msra.mxu0 %v414
  %571 = vmatprep.subr.bf16.mxu0 %v413
  %572 = vmatpush1.bf16.msra.mxu0 %v412
  %573 = vmatprep.subr.bf16.mxu0 %v411
  %574 = vmatpush1.bf16.msra.mxu0 %v410
  %575 = vmatprep.subr.bf16.mxu0 %v409
  %576 = vmatpush1.bf16.msra.mxu0 %v408
  %577 = vmatprep.subr.bf16.mxu0 %v407
  %578 = vmatpush1.bf16.msra.mxu0 %v406
  %579 = vmatprep.subr.bf16.mxu0 %v405
  %580 = vmatpush1.bf16.msra.mxu0 %v404
  %581 = vmatprep.subr.bf16.mxu0 %v403
  %582 = vmatpush1.bf16.msra.mxu0 %v402
  %583 = vmatprep.subr.bf16.mxu0 %v401
  %584 = vmatpush1.bf16.msra.mxu0 %v400
  %585 = vmatprep.subr.bf16.mxu0 %v431
  %586 = vmatpush2.bf16.msra.mxu0 %v430
  %587 = vmatprep.subr.bf16.mxu0 %v429
  %588 = vmatpush2.bf16.msra.mxu0 %v428
  %589 = vmatprep.subr.bf16.mxu0 %v427
  %590 = vmatpush2.bf16.msra.mxu0 %v426
  %591 = vmatprep.subr.bf16.mxu0 %v425
  %592 = vmatpush2.bf16.msra.mxu0 %v424
  %593 = vmatprep.subr.bf16.mxu0 %v423
  %594 = vmatpush2.bf16.msra.mxu0 %v422
  %595 = vmatprep.subr.bf16.mxu0 %v421
  %596 = vmatpush2.bf16.msra.mxu0 %v420
  %597 = vmatprep.subr.bf16.mxu0 %v419
  %598 = vmatpush2.bf16.msra.mxu0 %v418
  %599 = vmatprep.subr.bf16.mxu0 %v417
  %600 = vmatpush2.bf16.msra.mxu0 %v416
  %601 = vmatprep.mubr.bf16.mxu0 %v121
  %602 = vmatmul.mubr.bf16.gmra.mxu0 %v120
  %v603 = vpop.f32.mrf.mxu0
  %v604 = vadd.f32 %v563, %v603
  %v605 = vpop.f32.mrf.mxu0
  %v606 = vadd.f32 %v565, %v605
  %v607 = vpop.f32.mrf.mxu0
  %v608 = vpop.f32.mrf.mxu0
  %609 = vdwg.mxu0
  %610 = vmatprep.subr.bf16.mxu0 %v447
  %611 = vmatpush1.bf16.msra.mxu0 %v446
  %612 = vmatprep.subr.bf16.mxu0 %v445
  %613 = vmatpush1.bf16.msra.mxu0 %v444
  %614 = vmatprep.subr.bf16.mxu0 %v443
  %615 = vmatpush1.bf16.msra.mxu0 %v442
  %616 = vmatprep.subr.bf16.mxu0 %v441
  %617 = vmatpush1.bf16.msra.mxu0 %v440
  %618 = vmatprep.subr.bf16.mxu0 %v439
  %619 = vmatpush1.bf16.msra.mxu0 %v438
  %620 = vmatprep.subr.bf16.mxu0 %v437
  %621 = vmatpush1.bf16.msra.mxu0 %v436
  %622 = vmatprep.subr.bf16.mxu0 %v435
  %623 = vmatpush1.bf16.msra.mxu0 %v434
  %624 = vmatprep.subr.bf16.mxu0 %v433
  %625 = vmatpush1.bf16.msra.mxu0 %v432
  %626 = vmatprep.subr.bf16.mxu0 0
  %627 = vmatpush2.bf16.msra.mxu0 0
  %628 = vmatprep.subr.bf16.mxu0 0
  %629 = vmatpush2.bf16.msra.mxu0 0
  %630 = vmatprep.subr.bf16.mxu0 0
  %631 = vmatpush2.bf16.msra.mxu0 0
  %632 = vmatprep.subr.bf16.mxu0 0
  %633 = vmatpush2.bf16.msra.mxu0 0
  %634 = vmatprep.subr.bf16.mxu0 0
  %635 = vmatpush2.bf16.msra.mxu0 0
  %636 = vmatprep.subr.bf16.mxu0 0
  %637 = vmatpush2.bf16.msra.mxu0 0
  %638 = vmatprep.subr.bf16.mxu0 0
  %639 = vmatpush2.bf16.msra.mxu0 0
  %640 = vmatprep.subr.bf16.mxu0 0
  %641 = vmatpush2.bf16.msra.mxu0 0
  %642 = vmatprep.mubr.bf16.mxu0 0
  %643 = vmatmul.mubr.bf16.gmra.mxu0 %v122
  %v644 = vpop.f32.mrf.mxu0
  %v645 = vadd.f32 %v604, %v644
  %v646 = vpop.f32.mrf.mxu0
  %v647 = vadd.f32 %v606, %v646
  %v648 = vpop.f32.mrf.mxu0
  %v649 = vpop.f32.mrf.mxu0
  %650 = vdwg.mxu0
  %v651 = vmax.f32 %v645, 0.0
  %v652 = vmax.f32 %v647, 0.0
  %v653 = vpack.c.bf16 %v651, %v651
  %v654 = vpack.c.bf16 %v652, %v652
  %v657 = vunpack.c.l.b16 %v653
  %v658 = vunpack.c.l.b16 %v654
  %v659 = vpack.c.b16 %v658, %v657
  %661 = vst [vmem:[%s3] sm:$0xff] %v659
  // Predicated region
  $region14: #{hybridsn_forward.11} parent=0 // pred_check
    _
  $region15: #{hybridsn_forward.11} parent=0 // pred_check_branch
    %663 = sbr.rel (0) target = $region17
  $region16: #{hybridsn_forward.11} parent=0 // pred_region
    _
  $region17: #{hybridsn_forward.11} parent=0 // pred_fallthru
    _
  // Predicated region
  $region18: #{hybridsn_forward.11} parent=0 // pred_check
    _
  $region19: #{hybridsn_forward.11} parent=0 // pred_check_branch
    %665 = sbr.rel (0) target = $region21
  $region20: #{hybridsn_forward.11} parent=0 // pred_region
    _
  $region21: #{hybridsn_forward.11} parent=0 // pred_fallthru
    _

// kernel: hybridsn_forward.13
$region0: #{hybridsn_forward.13}
  #allocation0 [shape = 'u32[]', space=smem, size = 0x4, offset = 0x4, fixed_abs, tag = 'smem constant byte address 0x4 - core index']
  #allocation1 [shape = 'u32[144,128]{1,0:T(1,128)}', space=vmem, size = 0x12000, scoped, tag = 'internal scratch']
  %s0 = inlined_call_operand.vmem [shape: bf16[8,128], index: 0, kind: input, shape index: {}]
  %s1 = inlined_call_operand.vmem [shape: bf16[128,128], index: 1, kind: input, shape index: {}]
  %s2 = inlined_call_operand.vmem [shape: f32[1,128], index: 2, kind: input, shape index: {}]
  %s3 = inlined_call_operand.vmem [shape: f32[8,128], index: 3, kind: output, shape index: {}]
  %s4 = sld [smem:[#allocation0]]
  $region22: #{hybridsn_forward.13} parent=0
    _
  %s6 = ssub.s32 1, %s4
  %s7 = scalar_select 0, %s6, %s4
  // Predicated region
  $region2: #{hybridsn_forward.13} parent=0 // pred_check
    _
  $region3: #{hybridsn_forward.13} parent=0 // pred_check_branch
    %9 = sbr.rel (0) target = $region5
  $region4: #{hybridsn_forward.13} parent=0 // pred_region
    _
  $region5: #{hybridsn_forward.13} parent=0 // pred_fallthru
    _
  // Predicated region
  $region6: #{hybridsn_forward.13} parent=0 // pred_check
    _
  $region7: #{hybridsn_forward.13} parent=0 // pred_check_branch
    %11 = sbr.rel (0) target = $region9
  $region8: #{hybridsn_forward.13} parent=0 // pred_region
    _
  $region9: #{hybridsn_forward.13} parent=0 // pred_fallthru
    _
  // Predicated region
  $region10: #{hybridsn_forward.13} parent=0 // pred_check
    _
  $region11: #{hybridsn_forward.13} parent=0 // pred_check_branch
    %13 = sbr.rel (0) target = $region13
  $region12: #{hybridsn_forward.13} parent=0 // pred_region
    _
  $region13: #{hybridsn_forward.13} parent=0 // pred_fallthru
    _
  %v15 = vld [vmem:[%s0] sm:$0xf]
  %v16 = vld [vmem:[%s1] sm:$0xf]
  %v17 = vld [vmem:[%s1 + $0x4] sm:$0xf]
  %v18 = vld [vmem:[%s1 + $0x8] sm:$0xf]
  %v19 = vld [vmem:[%s1 + $0xc] sm:$0xf]
  %v20 = vld [vmem:[%s1 + $0x10] sm:$0xf]
  %v21 = vld [vmem:[%s1 + $0x14] sm:$0xf]
  %v22 = vld [vmem:[%s1 + $0x18] sm:$0xf]
  %v23 = vld [vmem:[%s1 + $0x1c] sm:$0xf]
  %v24 = vld [vmem:[%s1 + $0x20] sm:$0xf]
  %v25 = vld [vmem:[%s1 + $0x24] sm:$0xf]
  %v26 = vld [vmem:[%s1 + $0x28] sm:$0xf]
  %v27 = vld [vmem:[%s1 + $0x2c] sm:$0xf]
  %v28 = vld [vmem:[%s1 + $0x30] sm:$0xf]
  %v29 = vld [vmem:[%s1 + $0x34] sm:$0xf]
  %v30 = vld [vmem:[%s1 + $0x38] sm:$0xf]
  %v31 = vld [vmem:[%s1 + $0x3c] sm:$0xf]
  %v32 = vld [vmem:[%s2] sm:$0x1]
  %v34 = vlaneseq
  %v35 = vshrl.u32 %v34, 7
  %v36 = vsub.s32 0, %v35
  %v37 = vrot.slane %v32, %v36
  %v55 = vunpack.c.l.b16 %v16
  %v56 = vunpack.c.l.b16 %v17
  %v57 = vunpack.c.l.b16 %v18
  %v58 = vunpack.c.l.b16 %v19
  %v59 = vunpack.c.l.b16 %v20
  %v60 = vunpack.c.l.b16 %v21
  %v61 = vunpack.c.l.b16 %v22
  %v62 = vunpack.c.l.b16 %v23
  %v63 = vunpack.c.l.b16 %v24
  %v64 = vunpack.c.l.b16 %v25
  %v65 = vunpack.c.l.b16 %v26
  %v66 = vunpack.c.l.b16 %v27
  %v67 = vunpack.c.l.b16 %v28
  %v68 = vunpack.c.l.b16 %v29
  %v69 = vunpack.c.l.b16 %v30
  %v70 = vunpack.c.l.b16 %v31
  %v71 = vpack.c.b16 %v56, %v55
  %v72 = vpack.c.b16 %v58, %v57
  %v73 = vpack.c.b16 %v60, %v59
  %v74 = vpack.c.b16 %v62, %v61
  %v75 = vpack.c.b16 %v64, %v63
  %v76 = vpack.c.b16 %v66, %v65
  %v77 = vpack.c.b16 %v68, %v67
  %v78 = vpack.c.b16 %v70, %v69
  %87 = vmatprep.subr.bf16.mxu0 0
  %88 = vmatpush1.bf16.msra.mxu0 %v78
  %89 = vmatprep.subr.bf16.mxu0 0
  %90 = vmatpush1.bf16.msra.mxu0 %v77
  %91 = vmatprep.subr.bf16.mxu0 0
  %92 = vmatpush1.bf16.msra.mxu0 %v76
  %93 = vmatprep.subr.bf16.mxu0 0
  %94 = vmatpush1.bf16.msra.mxu0 %v75
  %95 = vmatprep.subr.bf16.mxu0 0
  %96 = vmatpush1.bf16.msra.mxu0 %v74
  %97 = vmatprep.subr.bf16.mxu0 0
  %98 = vmatpush1.bf16.msra.mxu0 %v73
  %99 = vmatprep.subr.bf16.mxu0 0
  %100 = vmatpush1.bf16.msra.mxu0 %v72
  %101 = vmatprep.subr.bf16.mxu0 0
  %102 = vmatpush1.bf16.msra.mxu0 %v71
  %103 = vmatprep.subr.bf16.mxu0 0
  %104 = vmatpush2.bf16.msra.mxu0 0
  %105 = vmatprep.subr.bf16.mxu0 0
  %106 = vmatpush2.bf16.msra.mxu0 0
  %107 = vmatprep.subr.bf16.mxu0 0
  %108 = vmatpush2.bf16.msra.mxu0 0
  %109 = vmatprep.subr.bf16.mxu0 0
  %110 = vmatpush2.bf16.msra.mxu0 0
  %111 = vmatprep.subr.bf16.mxu0 0
  %112 = vmatpush2.bf16.msra.mxu0 0
  %113 = vmatprep.subr.bf16.mxu0 0
  %114 = vmatpush2.bf16.msra.mxu0 0
  %115 = vmatprep.subr.bf16.mxu0 0
  %116 = vmatpush2.bf16.msra.mxu0 0
  %117 = vmatprep.subr.bf16.mxu0 0
  %118 = vmatpush2.bf16.msra.mxu0 0
  %119 = vmatprep.mubr.bf16.mxu0 0
  %120 = vmatmul.mubr.bf16.gmra.mxu0 %v15
  %v121 = vpop.f32.mrf.mxu0
  %v122 = vadd.f32 %v37, %v121
  %v123 = vpop.f32.mrf.mxu0
  %v124 = vpop.f32.mrf.mxu0
  %v125 = vpop.f32.mrf.mxu0
  %126 = vdwg.mxu0
  %127 = vst [vmem:[%s3] sm:$0xff] %v122
  // Predicated region
  $region14: #{hybridsn_forward.13} parent=0 // pred_check
    _
  $region15: #{hybridsn_forward.13} parent=0 // pred_check_branch
    %129 = sbr.rel (0) target = $region17
  $region16: #{hybridsn_forward.13} parent=0 // pred_region
    _
  $region17: #{hybridsn_forward.13} parent=0 // pred_fallthru
    _
  // Predicated region
  $region18: #{hybridsn_forward.13} parent=0 // pred_check
    _
  $region19: #{hybridsn_forward.13} parent=0 // pred_check_branch
    %131 = sbr.rel (0) target = $region21
  $region20: #{hybridsn_forward.13} parent=0 // pred_region
    _
  $region21: #{hybridsn_forward.13} parent=0 // pred_fallthru
    _

// kernel: hybridsn_forward.12
$region0: #{hybridsn_forward.12}
  #allocation0 [shape = 'u32[]', space=smem, size = 0x4, offset = 0x4, fixed_abs, tag = 'smem constant byte address 0x4 - core index']
  #allocation1 [shape = 'u32[144,128]{1,0:T(1,128)}', space=vmem, size = 0x12000, scoped, tag = 'internal scratch']
  %s0 = inlined_call_operand.vmem [shape: bf16[8,256], index: 0, kind: input, shape index: {}]
  %s1 = inlined_call_operand.vmem [shape: bf16[256,128], index: 1, kind: input, shape index: {}]
  %s2 = inlined_call_operand.vmem [shape: f32[1,128], index: 2, kind: input, shape index: {}]
  %s3 = inlined_call_operand.vmem [shape: bf16[8,128], index: 3, kind: output, shape index: {}]
  %s4 = sld [smem:[#allocation0]]
  $region22: #{hybridsn_forward.12} parent=0
    _
  %s6 = ssub.s32 1, %s4
  %s7 = scalar_select 0, %s6, %s4
  // Predicated region
  $region2: #{hybridsn_forward.12} parent=0 // pred_check
    _
  $region3: #{hybridsn_forward.12} parent=0 // pred_check_branch
    %9 = sbr.rel (0) target = $region5
  $region4: #{hybridsn_forward.12} parent=0 // pred_region
    _
  $region5: #{hybridsn_forward.12} parent=0 // pred_fallthru
    _
  // Predicated region
  $region6: #{hybridsn_forward.12} parent=0 // pred_check
    _
  $region7: #{hybridsn_forward.12} parent=0 // pred_check_branch
    %11 = sbr.rel (0) target = $region9
  $region8: #{hybridsn_forward.12} parent=0 // pred_region
    _
  $region9: #{hybridsn_forward.12} parent=0 // pred_fallthru
    _
  // Predicated region
  $region10: #{hybridsn_forward.12} parent=0 // pred_check
    _
  $region11: #{hybridsn_forward.12} parent=0 // pred_check_branch
    %13 = sbr.rel (0) target = $region13
  $region12: #{hybridsn_forward.12} parent=0 // pred_region
    _
  $region13: #{hybridsn_forward.12} parent=0 // pred_fallthru
    _
  %v15 = vld [vmem:[%s0] sm:$0xff]
  %v16 = vld [vmem:[%s1] sm:$0xf]
  %v17 = vld [vmem:[%s1 + $0x4] sm:$0xf]
  %v18 = vld [vmem:[%s1 + $0x8] sm:$0xf]
  %v19 = vld [vmem:[%s1 + $0xc] sm:$0xf]
  %v20 = vld [vmem:[%s1 + $0x10] sm:$0xf]
  %v21 = vld [vmem:[%s1 + $0x14] sm:$0xf]
  %v22 = vld [vmem:[%s1 + $0x18] sm:$0xf]
  %v23 = vld [vmem:[%s1 + $0x1c] sm:$0xf]
  %v24 = vld [vmem:[%s1 + $0x20] sm:$0xf]
  %v25 = vld [vmem:[%s1 + $0x24] sm:$0xf]
  %v26 = vld [vmem:[%s1 + $0x28] sm:$0xf]
  %v27 = vld [vmem:[%s1 + $0x2c] sm:$0xf]
  %v28 = vld [vmem:[%s1 + $0x30] sm:$0xf]
  %v29 = vld [vmem:[%s1 + $0x34] sm:$0xf]
  %v30 = vld [vmem:[%s1 + $0x38] sm:$0xf]
  %v31 = vld [vmem:[%s1 + $0x3c] sm:$0xf]
  %v32 = vld [vmem:[%s1 + $0x40] sm:$0xf]
  %v33 = vld [vmem:[%s1 + $0x44] sm:$0xf]
  %v34 = vld [vmem:[%s1 + $0x48] sm:$0xf]
  %v35 = vld [vmem:[%s1 + $0x4c] sm:$0xf]
  %v36 = vld [vmem:[%s1 + $0x50] sm:$0xf]
  %v37 = vld [vmem:[%s1 + $0x54] sm:$0xf]
  %v38 = vld [vmem:[%s1 + $0x58] sm:$0xf]
  %v39 = vld [vmem:[%s1 + $0x5c] sm:$0xf]
  %v40 = vld [vmem:[%s1 + $0x60] sm:$0xf]
  %v41 = vld [vmem:[%s1 + $0x64] sm:$0xf]
  %v42 = vld [vmem:[%s1 + $0x68] sm:$0xf]
  %v43 = vld [vmem:[%s1 + $0x6c] sm:$0xf]
  %v44 = vld [vmem:[%s1 + $0x70] sm:$0xf]
  %v45 = vld [vmem:[%s1 + $0x74] sm:$0xf]
  %v46 = vld [vmem:[%s1 + $0x78] sm:$0xf]
  %v47 = vld [vmem:[%s1 + $0x7c] sm:$0xf]
  %v48 = vld [vmem:[%s2] sm:$0x1]
  %v50 = vlaneseq
  %v51 = vshrl.u32 %v50, 7
  %v52 = vsub.s32 0, %v51
  %v53 = vrot.slane %v48, %v52
  %v56 = vunpack.c.l.b16 %v15
  %v57 = vunpack.c.h.b16 %v15
  %v58 = vpack.c.b16 %v56, %v56
  %v59 = vpack.c.b16 %v57, %v57
  %v94 = vunpack.c.l.b16 %v16
  %v95 = vunpack.c.l.b16 %v17
  %v96 = vunpack.c.l.b16 %v18
  %v97 = vunpack.c.l.b16 %v19
  %v98 = vunpack.c.l.b16 %v20
  %v99 = vunpack.c.l.b16 %v21
  %v100 = vunpack.c.l.b16 %v22
  %v101 = vunpack.c.l.b16 %v23
  %v102 = vunpack.c.l.b16 %v24
  %v103 = vunpack.c.l.b16 %v25
  %v104 = vunpack.c.l.b16 %v26
  %v105 = vunpack.c.l.b16 %v27
  %v106 = vunpack.c.l.b16 %v28
  %v107 = vunpack.c.l.b16 %v29
  %v108 = vunpack.c.l.b16 %v30
  %v109 = vunpack.c.l.b16 %v31
  %v110 = vunpack.c.l.b16 %v32
  %v111 = vunpack.c.l.b16 %v33
  %v112 = vunpack.c.l.b16 %v34
  %v113 = vunpack.c.l.b16 %v35
  %v114 = vunpack.c.l.b16 %v36
  %v115 = vunpack.c.l.b16 %v37
  %v116 = vunpack.c.l.b16 %v38
  %v117 = vunpack.c.l.b16 %v39
  %v118 = vunpack.c.l.b16 %v40
  %v119 = vunpack.c.l.b16 %v41
  %v120 = vunpack.c.l.b16 %v42
  %v121 = vunpack.c.l.b16 %v43
  %v122 = vunpack.c.l.b16 %v44
  %v123 = vunpack.c.l.b16 %v45
  %v124 = vunpack.c.l.b16 %v46
  %v125 = vunpack.c.l.b16 %v47
  %v126 = vpack.c.b16 %v95, %v94
  %v127 = vpack.c.b16 %v97, %v96
  %v128 = vpack.c.b16 %v99, %v98
  %v129 = vpack.c.b16 %v101, %v100
  %v130 = vpack.c.b16 %v103, %v102
  %v131 = vpack.c.b16 %v105, %v104
  %v132 = vpack.c.b16 %v107, %v106
  %v133 = vpack.c.b16 %v109, %v108
  %v134 = vpack.c.b16 %v111, %v110
  %v135 = vpack.c.b16 %v113, %v112
  %v136 = vpack.c.b16 %v115, %v114
  %v137 = vpack.c.b16 %v117, %v116
  %v138 = vpack.c.b16 %v119, %v118
  %v139 = vpack.c.b16 %v121, %v120
  %v140 = vpack.c.b16 %v123, %v122
  %v141 = vpack.c.b16 %v125, %v124
  %158 = vmatprep.subr.bf16.mxu0 0
  %159 = vmatpush1.bf16.msra.mxu0 %v133
  %160 = vmatprep.subr.bf16.mxu0 0
  %161 = vmatpush1.bf16.msra.mxu0 %v132
  %162 = vmatprep.subr.bf16.mxu0 0
  %163 = vmatpush1.bf16.msra.mxu0 %v131
  %164 = vmatprep.subr.bf16.mxu0 0
  %165 = vmatpush1.bf16.msra.mxu0 %v130
  %166 = vmatprep.subr.bf16.mxu0 0
  %167 = vmatpush1.bf16.msra.mxu0 %v129
  %168 = vmatprep.subr.bf16.mxu0 0
  %169 = vmatpush1.bf16.msra.mxu0 %v128
  %170 = vmatprep.subr.bf16.mxu0 0
  %171 = vmatpush1.bf16.msra.mxu0 %v127
  %172 = vmatprep.subr.bf16.mxu0 0
  %173 = vmatpush1.bf16.msra.mxu0 %v126
  %174 = vmatprep.subr.bf16.mxu0 0
  %175 = vmatpush2.bf16.msra.mxu0 %v141
  %176 = vmatprep.subr.bf16.mxu0 0
  %177 = vmatpush2.bf16.msra.mxu0 %v140
  %178 = vmatprep.subr.bf16.mxu0 0
  %179 = vmatpush2.bf16.msra.mxu0 %v139
  %180 = vmatprep.subr.bf16.mxu0 0
  %181 = vmatpush2.bf16.msra.mxu0 %v138
  %182 = vmatprep.subr.bf16.mxu0 0
  %183 = vmatpush2.bf16.msra.mxu0 %v137
  %184 = vmatprep.subr.bf16.mxu0 0
  %185 = vmatpush2.bf16.msra.mxu0 %v136
  %186 = vmatprep.subr.bf16.mxu0 0
  %187 = vmatpush2.bf16.msra.mxu0 %v135
  %188 = vmatprep.subr.bf16.mxu0 0
  %189 = vmatpush2.bf16.msra.mxu0 %v134
  %190 = vmatprep.mubr.bf16.mxu0 %v59
  %191 = vmatmul.mubr.bf16.gmra.mxu0 %v58
  %v192 = vpop.f32.mrf.mxu0
  %v193 = vadd.f32 %v53, %v192
  %v194 = vpop.f32.mrf.mxu0
  %v195 = vpop.f32.mrf.mxu0
  %v196 = vpop.f32.mrf.mxu0
  %197 = vdwg.mxu0
  %v198 = vmax.f32 %v193, 0.0
  %v199 = vpack.c.bf16 %v198, %v198
  %200 = vst [vmem:[%s3] sm:$0xf] %v199
  // Predicated region
  $region14: #{hybridsn_forward.12} parent=0 // pred_check
    _
  $region15: #{hybridsn_forward.12} parent=0 // pred_check_branch
    %202 = sbr.rel (0) target = $region17
  $region16: #{hybridsn_forward.12} parent=0 // pred_region
    _
  $region17: #{hybridsn_forward.12} parent=0 // pred_fallthru
    _
  // Predicated region
  $region18: #{hybridsn_forward.12} parent=0 // pred_check
    _
  $region19: #{hybridsn_forward.12} parent=0 // pred_check_branch
    %204 = sbr.rel (0) target = $region21
  $region20: #{hybridsn_forward.12} parent=0 // pred_region
    _
  $region21: #{hybridsn_forward.12} parent=0 // pred_fallthru
    _

</llo_original>
